<compile_context>
chip_gen: v5e
topology: v5e:2x2
jax: 0.10.0
libtpu: 0.0.40
codegen_flags: <defaults>
</compile_context>

<pallas_src>
import functools
import math

import jax
import jax.numpy as jnp
from jax import lax
from jax.experimental import pallas as pl
from jax.experimental.pallas import tpu as pltpu

_EPS = 1e-6
_PI = math.pi
_LANE = 128
_SUB = 8
_CHUNK = _SUB * _LANE  # 1024 frames per (8, 128) component tile


def _cdiv(a, b):
    return -(-a // b)


# ---------------------------------------------------------------------------
# Shared elementwise math (kernel + pure-JAX reference).  `recip` is injected:
# the kernel passes an EUP approx-reciprocal + Newton step, the reference an
# exact divide.  Purely pointwise -> VPU/EUP only.
# ---------------------------------------------------------------------------
def _atan_poly(x, recip):
    """Full-range arctan, Cephes atanf minimax polynomial (|err| ~ 3e-7)."""
    ax = jnp.abs(x)
    big = ax > 2.414213562373095      # tan(3*pi/8)
    med = ax > 0.4142135623730950     # tan(pi/8)
    ax_big = jnp.where(big, ax, 1.0)  # guard unselected lanes
    xr = jnp.where(big, -recip(ax_big),
                   jnp.where(med, (ax - 1.0) * recip(ax + 1.0), ax))
    base = jnp.where(big, 0.5 * _PI, jnp.where(med, 0.25 * _PI, 0.0))
    z = xr * xr
    p = (((8.05374449538e-2 * z - 1.38776856032e-1) * z
          + 1.99777106478e-1) * z - 3.33329491539e-1)
    res = base + p * z * xr + xr
    return jnp.where(x < 0, -res, res)


def _so3_log_factor(squared_n, w, atan_fn, recip):
    """k such that Log(q) = k * q.vec()  (lietorch SO3::Log branch structure)."""
    n = jnp.sqrt(squared_n)
    small_n = squared_n < _EPS * _EPS
    small_w = jnp.abs(w) < _EPS
    w_t = jnp.where(small_n, w, 1.0)
    rw_t = recip(w_t)
    taylor = 2.0 * rw_t - (2.0 / 3.0) * squared_n * (rw_t * rw_t * rw_t)
    n_safe = jnp.where(small_n, 1.0, n)
    rn_safe = recip(n_safe)
    near_pi = jnp.where(w > 0.0, _PI, -_PI) * rn_safe
    w_safe = jnp.where(small_w, 1.0, w)
    general = 2.0 * atan_fn(n * recip(w_safe)) * rn_safe
    return jnp.where(small_n, taylor, jnp.where(small_w, near_pi, general))


def _calc_w_coeffs(theta, sigma, recip):
    """A, B, C with W = A*hat(phi) + B*hat(phi)^2 + C*I (Sophus/lietorch calcW)."""
    scale = jnp.exp(sigma)
    theta_sq = theta * theta
    sigma_sq = sigma * sigma
    small_sigma = jnp.abs(sigma) < _EPS
    small_theta = theta < _EPS
    sin_t = jnp.sin(theta)
    cos_t = jnp.cos(theta)

    theta_safe = jnp.where(small_theta, 1.0, theta)
    theta_sq_safe = jnp.where(small_theta, 1.0, theta_sq)
    sigma_safe = jnp.where(small_sigma, 1.0, sigma)
    sigma_sq_safe = jnp.where(small_sigma, 1.0, sigma_sq)

    r_theta = recip(theta_safe)
    r_theta_sq = recip(theta_sq_safe)
    r_sigma = recip(sigma_safe)
    r_sigma_sq = recip(sigma_sq_safe)

    C = jnp.where(small_sigma, 1.0, (scale - 1.0) * r_sigma)

    # sigma ~ 0 branch
    A_s0 = jnp.where(small_theta, 0.5, (1.0 - cos_t) * r_theta_sq)
    B_s0 = jnp.where(small_theta, 1.0 / 6.0,
                     (theta - sin_t) * (r_theta_sq * r_theta))

    # sigma != 0 branch
    A_t0 = ((sigma - 1.0) * scale + 1.0) * r_sigma_sq
    B_t0 = (0.5 * sigma_sq * scale + scale - 1.0 - sigma * scale) * (
        r_sigma_sq * r_sigma)
    a = scale * sin_t
    b = scale * cos_t
    c = theta_sq + sigma_sq
    c_safe = jnp.where(small_theta, 1.0, c)
    r_c = recip(c_safe)
    A_g = (a * sigma + (1.0 - b) * theta) * (r_theta * r_c)
    B_g = (C - ((b - 1.0) * sigma + a * theta) * r_c) * r_theta_sq

    A = jnp.where(small_sigma, A_s0, jnp.where(small_theta, A_t0, A_g))
    B = jnp.where(small_sigma, B_s0, jnp.where(small_theta, B_t0, B_g))
    return A, B, C


# ---------------------------------------------------------------------------
# In-kernel Sim3 math on dense (8, 128) component tiles.
# ---------------------------------------------------------------------------
def _recip_eup(x):
    """1/x on the EUP (approx vrcp) + one Newton step; sign handled explicitly."""
    ax = jnp.abs(x)
    r = pl.reciprocal(ax, approx=True)
    r = r * (2.0 - ax * r)
    return jnp.where(x < 0.0, -r, r)


def _atan_eup(x):
    return _atan_poly(x, _recip_eup)


def _quat_mul(a, b):
    ax, ay, az, aw = a
    bx, by, bz, bw = b
    return (aw * bx + ax * bw + ay * bz - az * by,
            aw * by - ax * bz + ay * bw + az * bx,
            aw * bz + ax * by - ay * bx + az * bw,
            aw * bw - ax * bx - ay * by - az * bz)


def _quat_rotate(q, v):
    qx, qy, qz, qw = q
    vx, vy, vz = v
    ux = qy * vz - qz * vy
    uy = qz * vx - qx * vz
    uz = qx * vy - qy * vx
    wx = qy * uz - qz * uy
    wy = qz * ux - qx * uz
    wz = qx * uy - qy * ux
    return (vx + 2.0 * (qw * ux + wx),
            vy + 2.0 * (qw * uy + wy),
            vz + 2.0 * (qw * uz + wz))


def _sim3_inv(T):
    tx, ty, tz, qx, qy, qz, qw, s = T
    qi = (-qx, -qy, -qz, qw)
    s_inv = _recip_eup(s)
    rx, ry, rz = _quat_rotate(qi, (tx, ty, tz))
    return (-s_inv * rx, -s_inv * ry, -s_inv * rz) + qi + (s_inv,)


def _sim3_mul(A, B):
    atx, aty, atz, aqx, aqy, aqz, aqw, asc = A
    btx, bty, btz, bqx, bqy, bqz, bqw, bsc = B
    q = _quat_mul((aqx, aqy, aqz, aqw), (bqx, bqy, bqz, bqw))
    rx, ry, rz = _quat_rotate((aqx, aqy, aqz, aqw), (btx, bty, btz))
    t = (asc * rx + atx, asc * ry + aty, asc * rz + atz)
    return t + q + (asc * bsc,)


def _sim3_log(T):
    """Sim3 Log -> 7 tiles (tau_x, tau_y, tau_z, phi_x, phi_y, phi_z, sigma)."""
    tx, ty, tz, qx, qy, qz, qw, s = T
    squared_n = qx * qx + qy * qy + qz * qz
    k = _so3_log_factor(squared_n, qw, _atan_eup, _recip_eup)
    px, py, pz = k * qx, k * qy, k * qz
    sigma = jnp.log(s)
    theta_sq = px * px + py * py + pz * pz
    theta = jnp.sqrt(theta_sq)
    A, B, C = _calc_w_coeffs(theta, sigma, _recip_eup)
    # Closed-form inverse in the {I, hat(phi), hat(phi)^2} span:
    #   W^-1 = x*I + y*hat(phi) + z*hat(phi)^2
    d = C - theta_sq * B
    D = d * d + theta_sq * A * A
    rC = _recip_eup(C)
    rD = _recip_eup(D)
    x = rC
    y = -A * rD
    z = (A * A - B * C + theta_sq * B * B) * (rC * rD)
    c1x = py * tz - pz * ty
    c1y = pz * tx - px * tz
    c1z = px * ty - py * tx
    c2x = py * c1z - pz * c1y
    c2y = pz * c1x - px * c1z
    c2z = px * c1y - py * c1x
    taux = x * tx + y * c1x + z * c2x
    tauy = x * ty + y * c1y + z * c2y
    tauz = x * tz + y * c1z + z * c2z
    return (taux, tauy, tauz, px, py, pz, sigma)


def _split8(ref, j):
    # ref: (8, SC, 8, 128) -> 8 component tiles of (8, 128) for chunk j.
    return tuple(ref[i, j, :, :] for i in range(8))


def _odom_residual_kernel(prev_ref, next_ref, prior_ref, odom_ref,
                          pw_ref, ow_ref, out_ref):
    n_chunks = prev_ref.shape[1]

    def chunk_body(j, carry):
        # current_delta_T = Twc[:-1].Inv() * Twc[1:]
        delta = _sim3_mul(_sim3_inv(_split8(prev_ref, j)), _split8(next_ref, j))
        r_prior = _sim3_log(_sim3_mul(delta, _split8(prior_ref, j)))
        r_odom = _sim3_log(_sim3_mul(delta, _split8(odom_ref, j)))
        for i in range(7):  # direct stores, no concatenate epilogue
            out_ref[i, j, :, :] = (r_prior[i] * pw_ref[i, j, :, :]
                                   + r_odom[i] * ow_ref[i, j, :, :])
        return carry

    lax.fori_loop(0, n_chunks, chunk_body, 0, unroll=True)


# ---------------------------------------------------------------------------
# Wrapper: layout plumbing (pad + transpose to component-major chunked layout)
# and the pallas_call.
# ---------------------------------------------------------------------------
@functools.partial(jax.jit, static_argnames=("block_frames",))
def odom_residual_forward(Twc, Twc_prior_inv, Todom_inv,
                          prior_weight=None, odom_weight=None, *,
                          block_frames=4096):
    Twc = jnp.asarray(Twc, jnp.float32)
    Twc_prior_inv = jnp.asarray(Twc_prior_inv, jnp.float32)
    Todom_inv = jnp.asarray(Todom_inv, jnp.float32)
    M = Twc.shape[0] - 1
    if M <= 0:  # single-frame trajectory: nothing to do
        return jnp.zeros((0, 7), jnp.float32)
    if prior_weight is None:
        prior_weight = jnp.ones((M, 7), jnp.float32)
    if odom_weight is None:
        odom_weight = jnp.ones((M, 7), jnp.float32)
    prior_weight = jnp.asarray(prior_weight, jnp.float32)
    odom_weight = jnp.asarray(odom_weight, jnp.float32)

    # --- choose tiling: chunks of 1024 frames, SC chunks per grid block -----
    chunks_min = _cdiv(M, _CHUNK)
    chunks_target = max(1, block_frames // _CHUNK)
    if chunks_min <= chunks_target:
        if chunks_min >= 2:
            sc = _cdiv(chunks_min, 2)   # >= 2 "parallel" blocks for v7x megacore
            nb = 2
        else:
            sc, nb = 1, 1
    else:
        sc = chunks_target
        nb = _cdiv(chunks_min, sc)
    nc = nb * sc
    Mp = nc * _CHUNK
    pad = Mp - M

    ident = jnp.array([0, 0, 0, 0, 0, 0, 1, 1], jnp.float32)  # identity Sim3
    zeros7 = jnp.zeros((7,), jnp.float32)

    def pack(x, pad_row):
        # (M, C) -> (C, NC, 8, 128): component-major, frame axis dense on
        # sublanes x lanes.  Padding with identity / zero weights keeps all
        # padded lanes finite through the Log map.
        if pad:
            x = jnp.concatenate(
                [x, jnp.broadcast_to(pad_row, (pad, x.shape[1]))], axis=0)
        c = x.shape[1]
        return x.T.reshape(c, nc, _SUB, _LANE)

    prev_p = pack(Twc[:-1], ident)
    next_p = pack(Twc[1:], ident)
    prior_p = pack(Twc_prior_inv, ident)
    odom_p = pack(Todom_inv, ident)
    pw_p = pack(prior_weight, zeros7)
    ow_p = pack(odom_weight, zeros7)

    spec8 = pl.BlockSpec((8, sc, _SUB, _LANE), lambda i: (0, i, 0, 0))
    spec7 = pl.BlockSpec((7, sc, _SUB, _LANE), lambda i: (0, i, 0, 0))

    out_p = pl.pallas_call(
        _odom_residual_kernel,
        out_shape=jax.ShapeDtypeStruct((7, nc, _SUB, _LANE), jnp.float32),
        grid=(nb,),
        in_specs=[spec8, spec8, spec8, spec8, spec7, spec7],
        out_specs=spec7,
        compiler_params=pltpu.CompilerParams(
            dimension_semantics=("parallel",)),
        cost_estimate=pl.CostEstimate(
            flops=550 * Mp, transcendentals=34 * Mp, bytes_accessed=212 * Mp),
    )(prev_p, next_p, prior_p, odom_p, pw_p, ow_p)

    return out_p.reshape(7, Mp)[:, :M].T  # (M, 7), same as the PyTorch module


# ---------------------------------------------------------------------------
# Pure-JAX reference (lietorch-faithful: jnp.arctan + dense W solve).  Also
# reused for the loop-closure branch, which stays in plain JAX (edge gather).
# ---------------------------------------------------------------------------
def _recip_exact(x):
    return 1.0 / x


def ref_quat_mul(q1, q2):
    x1, y1, z1, w1 = q1[..., 0], q1[..., 1], q1[..., 2], q1[..., 3]
    x2, y2, z2, w2 = q2[..., 0], q2[..., 1], q2[..., 2], q2[..., 3]
    return jnp.stack([
        w1 * x2 + x1 * w2 + y1 * z2 - z1 * y2,
        w1 * y2 - x1 * z2 + y1 * w2 + z1 * x2,
        w1 * z2 + x1 * y2 - y1 * x2 + z1 * w2,
        w1 * w2 - x1 * x2 - y1 * y2 - z1 * z2], axis=-1)


def ref_quat_rotate(q, v):
    qv, qw = q[..., :3], q[..., 3:4]
    uv = jnp.cross(qv, v)
    return v + 2.0 * (qw * uv + jnp.cross(qv, uv))


def ref_sim3_inv(T):
    t, q, s = T[..., :3], T[..., 3:7], T[..., 7:8]
    qi = q * jnp.array([-1.0, -1.0, -1.0, 1.0], T.dtype)
    si = 1.0 / s
    return jnp.concatenate([-si * ref_quat_rotate(qi, t), qi, si], axis=-1)


def ref_sim3_mul(A, B):
    tA, qA, sA = A[..., :3], A[..., 3:7], A[..., 7:8]
    tB, qB, sB = B[..., :3], B[..., 3:7], B[..., 7:8]
    q = ref_quat_mul(qA, qB)
    t = sA * ref_quat_rotate(qA, tB) + tA
    return jnp.concatenate([t, q, sA * sB], axis=-1)


def _ref_hat(phi):
    px, py, pz = phi[..., 0], phi[..., 1], phi[..., 2]
    zero = jnp.zeros_like(px)
    return jnp.stack([
        jnp.stack([zero, -pz, py], axis=-1),
        jnp.stack([pz, zero, -px], axis=-1),
        jnp.stack([-py, px, zero], axis=-1)], axis=-2)


def ref_sim3_log(T):
    t, q, s = T[..., :3], T[..., 3:7], T[..., 7]
    sq_n = jnp.sum(q[..., :3] ** 2, axis=-1)
    k = _so3_log_factor(sq_n, q[..., 3], jnp.arctan, _recip_exact)
    phi = k[..., None] * q[..., :3]
    sigma = jnp.log(s)
    theta = jnp.sqrt(jnp.sum(phi * phi, axis=-1))
    A, B, C = _calc_w_coeffs(theta, sigma, _recip_exact)
    Phi = _ref_hat(phi)
    I3 = jnp.eye(3, dtype=T.dtype)
    W = (A[..., None, None] * Phi + B[..., None, None] * (Phi @ Phi)
         + C[..., None, None] * I3)
    tau = jnp.linalg.solve(W, t[..., None])[..., 0]
    return jnp.concatenate([tau, phi, sigma[..., None]], axis=-1)


def ref_odom_residual(Twc, Twc_prior_inv, Todom_inv,
                      prior_weight=None, odom_weight=None):
    delta = ref_sim3_mul(ref_sim3_inv(Twc[:-1]), Twc[1:])
    r_prior = ref_sim3_log(ref_sim3_mul(delta, Twc_prior_inv))
    if prior_weight is not None:
        r_prior = r_prior * prior_weight
    r_odom = ref_sim3_log(ref_sim3_mul(delta, Todom_inv))
    if odom_weight is not None:
        r_odom = r_odom * odom_weight
    return r_prior + r_odom


# ---------------------------------------------------------------------------
# Module-like wrapper mirroring the PyTorch class.
# ---------------------------------------------------------------------------
class OdomResidualPallas:
    def __init__(self, Twc):
        # Twc: (num_frame, 8) Sim3 data (nn.Parameter in the original module).
        self.Twc = jnp.asarray(Twc, jnp.float32)

    def forward(self, Twc_prior_inv, Todom_inv, prior_weight=None,
                odom_weight=None, lcs=None):
        residual = odom_residual_forward(self.Twc, Twc_prior_inv, Todom_inv,
                                         prior_weight, odom_weight)
        if lcs is not None:
            # TODO(synk): fold the loop-closure term into the Pallas kernel via
            # scalar-prefetched edge indices; for now it is plain-JAX glue.
            edges = lcs["edges"]
            T_lc = jnp.asarray(lcs["T_lc"], jnp.float32)
            delta_lc = ref_sim3_mul(ref_sim3_inv(self.Twc[edges[:, 0]]),
                                    self.Twc[edges[:, 1]])
            r_lc = ref_sim3_log(ref_sim3_mul(delta_lc, T_lc))
            residual = residual + r_lc
        return residual

    __call__ = forward


if __name__ == "__main__":
    key = jax.random.PRNGKey(0)

    def rand_sim3(k, n):
        kt, kq, ks = jax.random.split(k, 3)
        t = jax.random.normal(kt, (n, 3), jnp.float32)
        q = jax.random.normal(kq, (n, 4), jnp.float32)
        q = q / jnp.linalg.norm(q, axis=-1, keepdims=True)
        s = jnp.exp(0.2 * jax.random.normal(ks, (n, 1), jnp.float32))
        return jnp.concatenate([t, q, s], axis=-1)

    def run_case(case_key, num_frame):
        m = num_frame - 1
        k = jax.random.split(case_key, 5)
        Twc = rand_sim3(k[0], num_frame)
        Twc_prior_inv = rand_sim3(k[1], m)
        Todom_inv = rand_sim3(k[2], m)
        prior_weight = jax.random.uniform(k[3], (m, 7), jnp.float32)
        odom_weight = jax.random.uniform(k[4], (m, 7), jnp.float32)

        module = OdomResidualPallas(Twc)
        residual = module(Twc_prior_inv, Todom_inv, prior_weight, odom_weight,
                          lcs=None)
        residual = jax.block_until_ready(residual)

        ref = ref_odom_residual(Twc, Twc_prior_inv, Todom_inv,
                                prior_weight, odom_weight)
        assert residual.shape == (m, 7), residual.shape
        err = float(jnp.max(jnp.abs(residual - ref)))
        assert jnp.allclose(residual, ref, atol=2e-4, rtol=2e-4), err

    k_small, k_big = jax.random.split(key)
    run_case(k_small, num_frame=8)     # small: single-block grid path
    run_case(k_big, num_frame=2600)    # larger: 2-block "parallel" grid path

    print("KERNEL_OK")
</pallas_src>

<mosaic_0001>
module attributes {stable_mosaic.version = 11 : i64} {
  func.func @_odom_residual_kernel(%arg0: i32, %arg1: memref<8x1x8x128xf32, #tpu.memory_space<vmem>>, %arg2: memref<8x1x8x128xf32, #tpu.memory_space<vmem>>, %arg3: memref<8x1x8x128xf32, #tpu.memory_space<vmem>>, %arg4: memref<8x1x8x128xf32, #tpu.memory_space<vmem>>, %arg5: memref<7x1x8x128xf32, #tpu.memory_space<vmem>>, %arg6: memref<7x1x8x128xf32, #tpu.memory_space<vmem>>, %arg7: memref<7x1x8x128xf32, #tpu.memory_space<vmem>>) attributes {dimension_semantics = [#tpu.dimension_semantics<parallel>], iteration_bounds = array<i64: 1>, scalar_prefetch = 0 : i64, scratch_operands = 0 : i64, tpu.core_type = #tpu.core_type<tc>, window_params = [{transform_indices = @transform_0, window_bounds = array<i64: 8, 1, 8, 128>}, {transform_indices = @transform_1, window_bounds = array<i64: 8, 1, 8, 128>}, {transform_indices = @transform_2, window_bounds = array<i64: 8, 1, 8, 128>}, {transform_indices = @transform_3, window_bounds = array<i64: 8, 1, 8, 128>}, {transform_indices = @transform_4, window_bounds = array<i64: 7, 1, 8, 128>}, {transform_indices = @transform_5, window_bounds = array<i64: 7, 1, 8, 128>}, {transform_indices = @transform_6, window_bounds = array<i64: 7, 1, 8, 128>}]} {
    %c0_i32 = arith.constant 0 : i32
    %c0 = arith.constant 0 : index
    %0 = arith.index_cast %c0_i32 : i32 to index
    %c0_0 = arith.constant 0 : index
    %c0_1 = arith.constant 0 : index
    %1 = vector.load %arg1[%c0, %0, %c0_0, %c0_1] : memref<8x1x8x128xf32, #tpu.memory_space<vmem>>, vector<1x1x8x128xf32>
    %2 = vector.shape_cast %1 : vector<1x1x8x128xf32> to vector<8x128xf32>
    %c1 = arith.constant 1 : index
    %3 = arith.index_cast %c0_i32 : i32 to index
    %c0_2 = arith.constant 0 : index
    %c0_3 = arith.constant 0 : index
    %4 = vector.load %arg1[%c1, %3, %c0_2, %c0_3] : memref<8x1x8x128xf32, #tpu.memory_space<vmem>>, vector<1x1x8x128xf32>
    %5 = vector.shape_cast %4 : vector<1x1x8x128xf32> to vector<8x128xf32>
    %c2 = arith.constant 2 : index
    %6 = arith.index_cast %c0_i32 : i32 to index
    %c0_4 = arith.constant 0 : index
    %c0_5 = arith.constant 0 : index
    %7 = vector.load %arg1[%c2, %6, %c0_4, %c0_5] : memref<8x1x8x128xf32, #tpu.memory_space<vmem>>, vector<1x1x8x128xf32>
    %8 = vector.shape_cast %7 : vector<1x1x8x128xf32> to vector<8x128xf32>
    %c3 = arith.constant 3 : index
    %9 = arith.index_cast %c0_i32 : i32 to index
    %c0_6 = arith.constant 0 : index
    %c0_7 = arith.constant 0 : index
    %10 = vector.load %arg1[%c3, %9, %c0_6, %c0_7] : memref<8x1x8x128xf32, #tpu.memory_space<vmem>>, vector<1x1x8x128xf32>
    %11 = vector.shape_cast %10 : vector<1x1x8x128xf32> to vector<8x128xf32>
    %c4 = arith.constant 4 : index
    %12 = arith.index_cast %c0_i32 : i32 to index
    %c0_8 = arith.constant 0 : index
    %c0_9 = arith.constant 0 : index
    %13 = vector.load %arg1[%c4, %12, %c0_8, %c0_9] : memref<8x1x8x128xf32, #tpu.memory_space<vmem>>, vector<1x1x8x128xf32>
    %14 = vector.shape_cast %13 : vector<1x1x8x128xf32> to vector<8x128xf32>
    %c5 = arith.constant 5 : index
    %15 = arith.index_cast %c0_i32 : i32 to index
    %c0_10 = arith.constant 0 : index
    %c0_11 = arith.constant 0 : index
    %16 = vector.load %arg1[%c5, %15, %c0_10, %c0_11] : memref<8x1x8x128xf32, #tpu.memory_space<vmem>>, vector<1x1x8x128xf32>
    %17 = vector.shape_cast %16 : vector<1x1x8x128xf32> to vector<8x128xf32>
    %c6 = arith.constant 6 : index
    %18 = arith.index_cast %c0_i32 : i32 to index
    %c0_12 = arith.constant 0 : index
    %c0_13 = arith.constant 0 : index
    %19 = vector.load %arg1[%c6, %18, %c0_12, %c0_13] : memref<8x1x8x128xf32, #tpu.memory_space<vmem>>, vector<1x1x8x128xf32>
    %20 = vector.shape_cast %19 : vector<1x1x8x128xf32> to vector<8x128xf32>
    %c7 = arith.constant 7 : index
    %21 = arith.index_cast %c0_i32 : i32 to index
    %c0_14 = arith.constant 0 : index
    %c0_15 = arith.constant 0 : index
    %22 = vector.load %arg1[%c7, %21, %c0_14, %c0_15] : memref<8x1x8x128xf32, #tpu.memory_space<vmem>>, vector<1x1x8x128xf32>
    %23 = vector.shape_cast %22 : vector<1x1x8x128xf32> to vector<8x128xf32>
    %cst = arith.constant 0.000000e+00 : f32
    %24 = vector.broadcast %cst : f32 to vector<8x128xf32>
    %25 = arith.subf %24, %11 : vector<8x128xf32>
    %cst_16 = arith.constant 0.000000e+00 : f32
    %26 = vector.broadcast %cst_16 : f32 to vector<8x128xf32>
    %27 = arith.subf %26, %14 : vector<8x128xf32>
    %cst_17 = arith.constant 0.000000e+00 : f32
    %28 = vector.broadcast %cst_17 : f32 to vector<8x128xf32>
    %29 = arith.subf %28, %17 : vector<8x128xf32>
    %30 = math.absf %23 : vector<8x128xf32>
    %31 = tpu.reciprocal %30 {approx = true} : vector<8x128xf32> -> vector<8x128xf32>
    %32 = arith.mulf %30, %31 : vector<8x128xf32>
    %cst_18 = arith.constant 2.000000e+00 : f32
    %33 = vector.broadcast %cst_18 : f32 to vector<8x128xf32>
    %34 = arith.subf %33, %32 : vector<8x128xf32>
    %35 = arith.mulf %31, %34 : vector<8x128xf32>
    %cst_19 = arith.constant 0.000000e+00 : f32
    %36 = vector.broadcast %cst_19 : f32 to vector<8x128xf32>
    %37 = arith.cmpf olt, %23, %36 : vector<8x128xf32>
    %cst_20 = arith.constant 0.000000e+00 : f32
    %38 = vector.broadcast %cst_20 : f32 to vector<8x128xf32>
    %39 = arith.subf %38, %35 : vector<8x128xf32>
    %40 = arith.select %37, %39, %35 : vector<8x128xi1>, vector<8x128xf32>
    %41 = arith.mulf %27, %8 : vector<8x128xf32>
    %42 = arith.mulf %29, %5 : vector<8x128xf32>
    %43 = arith.subf %41, %42 : vector<8x128xf32>
    %44 = arith.mulf %29, %2 : vector<8x128xf32>
    %45 = arith.mulf %25, %8 : vector<8x128xf32>
    %46 = arith.subf %44, %45 : vector<8x128xf32>
    %47 = arith.mulf %25, %5 : vector<8x128xf32>
    %48 = arith.mulf %27, %2 : vector<8x128xf32>
    %49 = arith.subf %47, %48 : vector<8x128xf32>
    %50 = arith.mulf %27, %49 : vector<8x128xf32>
    %51 = arith.mulf %29, %46 : vector<8x128xf32>
    %52 = arith.subf %50, %51 : vector<8x128xf32>
    %53 = arith.mulf %29, %43 : vector<8x128xf32>
    %54 = arith.mulf %25, %49 : vector<8x128xf32>
    %55 = arith.subf %53, %54 : vector<8x128xf32>
    %56 = arith.mulf %25, %46 : vector<8x128xf32>
    %57 = arith.mulf %27, %43 : vector<8x128xf32>
    %58 = arith.subf %56, %57 : vector<8x128xf32>
    %59 = arith.mulf %20, %43 : vector<8x128xf32>
    %60 = arith.addf %59, %52 : vector<8x128xf32>
    %cst_21 = arith.constant 2.000000e+00 : f32
    %61 = vector.broadcast %cst_21 : f32 to vector<8x128xf32>
    %62 = arith.mulf %61, %60 : vector<8x128xf32>
    %63 = arith.addf %2, %62 : vector<8x128xf32>
    %64 = arith.mulf %20, %46 : vector<8x128xf32>
    %65 = arith.addf %64, %55 : vector<8x128xf32>
    %cst_22 = arith.constant 2.000000e+00 : f32
    %66 = vector.broadcast %cst_22 : f32 to vector<8x128xf32>
    %67 = arith.mulf %66, %65 : vector<8x128xf32>
    %68 = arith.addf %5, %67 : vector<8x128xf32>
    %69 = arith.mulf %20, %49 : vector<8x128xf32>
    %70 = arith.addf %69, %58 : vector<8x128xf32>
    %cst_23 = arith.constant 2.000000e+00 : f32
    %71 = vector.broadcast %cst_23 : f32 to vector<8x128xf32>
    %72 = arith.mulf %71, %70 : vector<8x128xf32>
    %73 = arith.addf %8, %72 : vector<8x128xf32>
    %cst_24 = arith.constant 0.000000e+00 : f32
    %74 = vector.broadcast %cst_24 : f32 to vector<8x128xf32>
    %75 = arith.subf %74, %40 : vector<8x128xf32>
    %76 = arith.mulf %75, %63 : vector<8x128xf32>
    %cst_25 = arith.constant 0.000000e+00 : f32
    %77 = vector.broadcast %cst_25 : f32 to vector<8x128xf32>
    %78 = arith.subf %77, %40 : vector<8x128xf32>
    %79 = arith.mulf %78, %68 : vector<8x128xf32>
    %cst_26 = arith.constant 0.000000e+00 : f32
    %80 = vector.broadcast %cst_26 : f32 to vector<8x128xf32>
    %81 = arith.subf %80, %40 : vector<8x128xf32>
    %82 = arith.mulf %81, %73 : vector<8x128xf32>
    %c0_27 = arith.constant 0 : index
    %83 = arith.index_cast %c0_i32 : i32 to index
    %c0_28 = arith.constant 0 : index
    %c0_29 = arith.constant 0 : index
    %84 = vector.load %arg2[%c0_27, %83, %c0_28, %c0_29] : memref<8x1x8x128xf32, #tpu.memory_space<vmem>>, vector<1x1x8x128xf32>
    %85 = vector.shape_cast %84 : vector<1x1x8x128xf32> to vector<8x128xf32>
    %c1_30 = arith.constant 1 : index
    %86 = arith.index_cast %c0_i32 : i32 to index
    %c0_31 = arith.constant 0 : index
    %c0_32 = arith.constant 0 : index
    %87 = vector.load %arg2[%c1_30, %86, %c0_31, %c0_32] : memref<8x1x8x128xf32, #tpu.memory_space<vmem>>, vector<1x1x8x128xf32>
    %88 = vector.shape_cast %87 : vector<1x1x8x128xf32> to vector<8x128xf32>
    %c2_33 = arith.constant 2 : index
    %89 = arith.index_cast %c0_i32 : i32 to index
    %c0_34 = arith.constant 0 : index
    %c0_35 = arith.constant 0 : index
    %90 = vector.load %arg2[%c2_33, %89, %c0_34, %c0_35] : memref<8x1x8x128xf32, #tpu.memory_space<vmem>>, vector<1x1x8x128xf32>
    %91 = vector.shape_cast %90 : vector<1x1x8x128xf32> to vector<8x128xf32>
    %c3_36 = arith.constant 3 : index
    %92 = arith.index_cast %c0_i32 : i32 to index
    %c0_37 = arith.constant 0 : index
    %c0_38 = arith.constant 0 : index
    %93 = vector.load %arg2[%c3_36, %92, %c0_37, %c0_38] : memref<8x1x8x128xf32, #tpu.memory_space<vmem>>, vector<1x1x8x128xf32>
    %94 = vector.shape_cast %93 : vector<1x1x8x128xf32> to vector<8x128xf32>
    %c4_39 = arith.constant 4 : index
    %95 = arith.index_cast %c0_i32 : i32 to index
    %c0_40 = arith.constant 0 : index
    %c0_41 = arith.constant 0 : index
    %96 = vector.load %arg2[%c4_39, %95, %c0_40, %c0_41] : memref<8x1x8x128xf32, #tpu.memory_space<vmem>>, vector<1x1x8x128xf32>
    %97 = vector.shape_cast %96 : vector<1x1x8x128xf32> to vector<8x128xf32>
    %c5_42 = arith.constant 5 : index
    %98 = arith.index_cast %c0_i32 : i32 to index
    %c0_43 = arith.constant 0 : index
    %c0_44 = arith.constant 0 : index
    %99 = vector.load %arg2[%c5_42, %98, %c0_43, %c0_44] : memref<8x1x8x128xf32, #tpu.memory_space<vmem>>, vector<1x1x8x128xf32>
    %100 = vector.shape_cast %99 : vector<1x1x8x128xf32> to vector<8x128xf32>
    %c6_45 = arith.constant 6 : index
    %101 = arith.index_cast %c0_i32 : i32 to index
    %c0_46 = arith.constant 0 : index
    %c0_47 = arith.constant 0 : index
    %102 = vector.load %arg2[%c6_45, %101, %c0_46, %c0_47] : memref<8x1x8x128xf32, #tpu.memory_space<vmem>>, vector<1x1x8x128xf32>
    %103 = vector.shape_cast %102 : vector<1x1x8x128xf32> to vector<8x128xf32>
    %c7_48 = arith.constant 7 : index
    %104 = arith.index_cast %c0_i32 : i32 to index
    %c0_49 = arith.constant 0 : index
    %c0_50 = arith.constant 0 : index
    %105 = vector.load %arg2[%c7_48, %104, %c0_49, %c0_50] : memref<8x1x8x128xf32, #tpu.memory_space<vmem>>, vector<1x1x8x128xf32>
    %106 = vector.shape_cast %105 : vector<1x1x8x128xf32> to vector<8x128xf32>
    %107 = arith.mulf %20, %94 : vector<8x128xf32>
    %108 = arith.mulf %25, %103 : vector<8x128xf32>
    %109 = arith.addf %107, %108 : vector<8x128xf32>
    %110 = arith.mulf %27, %100 : vector<8x128xf32>
    %111 = arith.addf %109, %110 : vector<8x128xf32>
    %112 = arith.mulf %29, %97 : vector<8x128xf32>
    %113 = arith.subf %111, %112 : vector<8x128xf32>
    %114 = arith.mulf %20, %97 : vector<8x128xf32>
    %115 = arith.mulf %25, %100 : vector<8x128xf32>
    %116 = arith.subf %114, %115 : vector<8x128xf32>
    %117 = arith.mulf %27, %103 : vector<8x128xf32>
    %118 = arith.addf %116, %117 : vector<8x128xf32>
    %119 = arith.mulf %29, %94 : vector<8x128xf32>
    %120 = arith.addf %118, %119 : vector<8x128xf32>
    %121 = arith.mulf %20, %100 : vector<8x128xf32>
    %122 = arith.mulf %25, %97 : vector<8x128xf32>
    %123 = arith.addf %121, %122 : vector<8x128xf32>
    %124 = arith.mulf %27, %94 : vector<8x128xf32>
    %125 = arith.subf %123, %124 : vector<8x128xf32>
    %126 = arith.mulf %29, %103 : vector<8x128xf32>
    %127 = arith.addf %125, %126 : vector<8x128xf32>
    %128 = arith.mulf %20, %103 : vector<8x128xf32>
    %129 = arith.mulf %25, %94 : vector<8x128xf32>
    %130 = arith.subf %128, %129 : vector<8x128xf32>
    %131 = arith.mulf %27, %97 : vector<8x128xf32>
    %132 = arith.subf %130, %131 : vector<8x128xf32>
    %133 = arith.mulf %29, %100 : vector<8x128xf32>
    %134 = arith.subf %132, %133 : vector<8x128xf32>
    %135 = arith.mulf %27, %91 : vector<8x128xf32>
    %136 = arith.mulf %29, %88 : vector<8x128xf32>
    %137 = arith.subf %135, %136 : vector<8x128xf32>
    %138 = arith.mulf %29, %85 : vector<8x128xf32>
    %139 = arith.mulf %25, %91 : vector<8x128xf32>
    %140 = arith.subf %138, %139 : vector<8x128xf32>
    %141 = arith.mulf %25, %88 : vector<8x128xf32>
    %142 = arith.mulf %27, %85 : vector<8x128xf32>
    %143 = arith.subf %141, %142 : vector<8x128xf32>
    %144 = arith.mulf %27, %143 : vector<8x128xf32>
    %145 = arith.mulf %29, %140 : vector<8x128xf32>
    %146 = arith.subf %144, %145 : vector<8x128xf32>
    %147 = arith.mulf %29, %137 : vector<8x128xf32>
    %148 = arith.mulf %25, %143 : vector<8x128xf32>
    %149 = arith.subf %147, %148 : vector<8x128xf32>
    %150 = arith.mulf %25, %140 : vector<8x128xf32>
    %151 = arith.mulf %27, %137 : vector<8x128xf32>
    %152 = arith.subf %150, %151 : vector<8x128xf32>
    %153 = arith.mulf %20, %137 : vector<8x128xf32>
    %154 = arith.addf %153, %146 : vector<8x128xf32>
    %cst_51 = arith.constant 2.000000e+00 : f32
    %155 = vector.broadcast %cst_51 : f32 to vector<8x128xf32>
    %156 = arith.mulf %155, %154 : vector<8x128xf32>
    %157 = arith.addf %85, %156 : vector<8x128xf32>
    %158 = arith.mulf %20, %140 : vector<8x128xf32>
    %159 = arith.addf %158, %149 : vector<8x128xf32>
    %cst_52 = arith.constant 2.000000e+00 : f32
    %160 = vector.broadcast %cst_52 : f32 to vector<8x128xf32>
    %161 = arith.mulf %160, %159 : vector<8x128xf32>
    %162 = arith.addf %88, %161 : vector<8x128xf32>
    %163 = arith.mulf %20, %143 : vector<8x128xf32>
    %164 = arith.addf %163, %152 : vector<8x128xf32>
    %cst_53 = arith.constant 2.000000e+00 : f32
    %165 = vector.broadcast %cst_53 : f32 to vector<8x128xf32>
    %166 = arith.mulf %165, %164 : vector<8x128xf32>
    %167 = arith.addf %91, %166 : vector<8x128xf32>
    %168 = arith.mulf %40, %157 : vector<8x128xf32>
    %169 = arith.addf %168, %76 : vector<8x128xf32>
    %170 = arith.mulf %40, %162 : vector<8x128xf32>
    %171 = arith.addf %170, %79 : vector<8x128xf32>
    %172 = arith.mulf %40, %167 : vector<8x128xf32>
    %173 = arith.addf %172, %82 : vector<8x128xf32>
    %174 = arith.mulf %40, %106 : vector<8x128xf32>
    %c0_54 = arith.constant 0 : index
    %175 = arith.index_cast %c0_i32 : i32 to index
    %c0_55 = arith.constant 0 : index
    %c0_56 = arith.constant 0 : index
    %176 = vector.load %arg3[%c0_54, %175, %c0_55, %c0_56] : memref<8x1x8x128xf32, #tpu.memory_space<vmem>>, vector<1x1x8x128xf32>
    %177 = vector.shape_cast %176 : vector<1x1x8x128xf32> to vector<8x128xf32>
    %c1_57 = arith.constant 1 : index
    %178 = arith.index_cast %c0_i32 : i32 to index
    %c0_58 = arith.constant 0 : index
    %c0_59 = arith.constant 0 : index
    %179 = vector.load %arg3[%c1_57, %178, %c0_58, %c0_59] : memref<8x1x8x128xf32, #tpu.memory_space<vmem>>, vector<1x1x8x128xf32>
    %180 = vector.shape_cast %179 : vector<1x1x8x128xf32> to vector<8x128xf32>
    %c2_60 = arith.constant 2 : index
    %181 = arith.index_cast %c0_i32 : i32 to index
    %c0_61 = arith.constant 0 : index
    %c0_62 = arith.constant 0 : index
    %182 = vector.load %arg3[%c2_60, %181, %c0_61, %c0_62] : memref<8x1x8x128xf32, #tpu.memory_space<vmem>>, vector<1x1x8x128xf32>
    %183 = vector.shape_cast %182 : vector<1x1x8x128xf32> to vector<8x128xf32>
    %c3_63 = arith.constant 3 : index
    %184 = arith.index_cast %c0_i32 : i32 to index
    %c0_64 = arith.constant 0 : index
    %c0_65 = arith.constant 0 : index
    %185 = vector.load %arg3[%c3_63, %184, %c0_64, %c0_65] : memref<8x1x8x128xf32, #tpu.memory_space<vmem>>, vector<1x1x8x128xf32>
    %186 = vector.shape_cast %185 : vector<1x1x8x128xf32> to vector<8x128xf32>
    %c4_66 = arith.constant 4 : index
    %187 = arith.index_cast %c0_i32 : i32 to index
    %c0_67 = arith.constant 0 : index
    %c0_68 = arith.constant 0 : index
    %188 = vector.load %arg3[%c4_66, %187, %c0_67, %c0_68] : memref<8x1x8x128xf32, #tpu.memory_space<vmem>>, vector<1x1x8x128xf32>
    %189 = vector.shape_cast %188 : vector<1x1x8x128xf32> to vector<8x128xf32>
    %c5_69 = arith.constant 5 : index
    %190 = arith.index_cast %c0_i32 : i32 to index
    %c0_70 = arith.constant 0 : index
    %c0_71 = arith.constant 0 : index
    %191 = vector.load %arg3[%c5_69, %190, %c0_70, %c0_71] : memref<8x1x8x128xf32, #tpu.memory_space<vmem>>, vector<1x1x8x128xf32>
    %192 = vector.shape_cast %191 : vector<1x1x8x128xf32> to vector<8x128xf32>
    %c6_72 = arith.constant 6 : index
    %193 = arith.index_cast %c0_i32 : i32 to index
    %c0_73 = arith.constant 0 : index
    %c0_74 = arith.constant 0 : index
    %194 = vector.load %arg3[%c6_72, %193, %c0_73, %c0_74] : memref<8x1x8x128xf32, #tpu.memory_space<vmem>>, vector<1x1x8x128xf32>
    %195 = vector.shape_cast %194 : vector<1x1x8x128xf32> to vector<8x128xf32>
    %c7_75 = arith.constant 7 : index
    %196 = arith.index_cast %c0_i32 : i32 to index
    %c0_76 = arith.constant 0 : index
    %c0_77 = arith.constant 0 : index
    %197 = vector.load %arg3[%c7_75, %196, %c0_76, %c0_77] : memref<8x1x8x128xf32, #tpu.memory_space<vmem>>, vector<1x1x8x128xf32>
    %198 = vector.shape_cast %197 : vector<1x1x8x128xf32> to vector<8x128xf32>
    %199 = arith.mulf %134, %186 : vector<8x128xf32>
    %200 = arith.mulf %113, %195 : vector<8x128xf32>
    %201 = arith.addf %199, %200 : vector<8x128xf32>
    %202 = arith.mulf %120, %192 : vector<8x128xf32>
    %203 = arith.addf %201, %202 : vector<8x128xf32>
    %204 = arith.mulf %127, %189 : vector<8x128xf32>
    %205 = arith.subf %203, %204 : vector<8x128xf32>
    %206 = arith.mulf %134, %189 : vector<8x128xf32>
    %207 = arith.mulf %113, %192 : vector<8x128xf32>
    %208 = arith.subf %206, %207 : vector<8x128xf32>
    %209 = arith.mulf %120, %195 : vector<8x128xf32>
    %210 = arith.addf %208, %209 : vector<8x128xf32>
    %211 = arith.mulf %127, %186 : vector<8x128xf32>
    %212 = arith.addf %210, %211 : vector<8x128xf32>
    %213 = arith.mulf %134, %192 : vector<8x128xf32>
    %214 = arith.mulf %113, %189 : vector<8x128xf32>
    %215 = arith.addf %213, %214 : vector<8x128xf32>
    %216 = arith.mulf %120, %186 : vector<8x128xf32>
    %217 = arith.subf %215, %216 : vector<8x128xf32>
    %218 = arith.mulf %127, %195 : vector<8x128xf32>
    %219 = arith.addf %217, %218 : vector<8x128xf32>
    %220 = arith.mulf %134, %195 : vector<8x128xf32>
    %221 = arith.mulf %113, %186 : vector<8x128xf32>
    %222 = arith.subf %220, %221 : vector<8x128xf32>
    %223 = arith.mulf %120, %189 : vector<8x128xf32>
    %224 = arith.subf %222, %223 : vector<8x128xf32>
    %225 = arith.mulf %127, %192 : vector<8x128xf32>
    %226 = arith.subf %224, %225 : vector<8x128xf32>
    %227 = arith.mulf %120, %183 : vector<8x128xf32>
    %228 = arith.mulf %127, %180 : vector<8x128xf32>
    %229 = arith.subf %227, %228 : vector<8x128xf32>
    %230 = arith.mulf %127, %177 : vector<8x128xf32>
    %231 = arith.mulf %113, %183 : vector<8x128xf32>
    %232 = arith.subf %230, %231 : vector<8x128xf32>
    %233 = arith.mulf %113, %180 : vector<8x128xf32>
    %234 = arith.mulf %120, %177 : vector<8x128xf32>
    %235 = arith.subf %233, %234 : vector<8x128xf32>
    %236 = arith.mulf %120, %235 : vector<8x128xf32>
    %237 = arith.mulf %127, %232 : vector<8x128xf32>
    %238 = arith.subf %236, %237 : vector<8x128xf32>
    %239 = arith.mulf %127, %229 : vector<8x128xf32>
    %240 = arith.mulf %113, %235 : vector<8x128xf32>
    %241 = arith.subf %239, %240 : vector<8x128xf32>
    %242 = arith.mulf %113, %232 : vector<8x128xf32>
    %243 = arith.mulf %120, %229 : vector<8x128xf32>
    %244 = arith.subf %242, %243 : vector<8x128xf32>
    %245 = arith.mulf %134, %229 : vector<8x128xf32>
    %246 = arith.addf %245, %238 : vector<8x128xf32>
    %cst_78 = arith.constant 2.000000e+00 : f32
    %247 = vector.broadcast %cst_78 : f32 to vector<8x128xf32>
    %248 = arith.mulf %247, %246 : vector<8x128xf32>
    %249 = arith.addf %177, %248 : vector<8x128xf32>
    %250 = arith.mulf %134, %232 : vector<8x128xf32>
    %251 = arith.addf %250, %241 : vector<8x128xf32>
    %cst_79 = arith.constant 2.000000e+00 : f32
    %252 = vector.broadcast %cst_79 : f32 to vector<8x128xf32>
    %253 = arith.mulf %252, %251 : vector<8x128xf32>
    %254 = arith.addf %180, %253 : vector<8x128xf32>
    %255 = arith.mulf %134, %235 : vector<8x128xf32>
    %256 = arith.addf %255, %244 : vector<8x128xf32>
    %cst_80 = arith.constant 2.000000e+00 : f32
    %257 = vector.broadcast %cst_80 : f32 to vector<8x128xf32>
    %258 = arith.mulf %257, %256 : vector<8x128xf32>
    %259 = arith.addf %183, %258 : vector<8x128xf32>
    %260 = arith.mulf %174, %249 : vector<8x128xf32>
    %261 = arith.addf %260, %169 : vector<8x128xf32>
    %262 = arith.mulf %174, %254 : vector<8x128xf32>
    %263 = arith.addf %262, %171 : vector<8x128xf32>
    %264 = arith.mulf %174, %259 : vector<8x128xf32>
    %265 = arith.addf %264, %173 : vector<8x128xf32>
    %266 = arith.mulf %174, %198 : vector<8x128xf32>
    %267 = arith.mulf %205, %205 : vector<8x128xf32>
    %268 = arith.mulf %212, %212 : vector<8x128xf32>
    %269 = arith.addf %267, %268 : vector<8x128xf32>
    %270 = arith.mulf %219, %219 : vector<8x128xf32>
    %271 = arith.addf %269, %270 : vector<8x128xf32>
    %272 = math.sqrt %271 : vector<8x128xf32>
    %cst_81 = arith.constant 9.99999996E-13 : f32
    %273 = vector.broadcast %cst_81 : f32 to vector<8x128xf32>
    %274 = arith.cmpf olt, %271, %273 : vector<8x128xf32>
    %275 = math.absf %226 : vector<8x128xf32>
    %cst_82 = arith.constant 9.99999997E-7 : f32
    %276 = vector.broadcast %cst_82 : f32 to vector<8x128xf32>
    %277 = arith.cmpf olt, %275, %276 : vector<8x128xf32>
    %cst_83 = arith.constant 1.000000e+00 : f32
    %278 = vector.broadcast %cst_83 : f32 to vector<8x128xf32>
    %279 = arith.select %274, %226, %278 : vector<8x128xi1>, vector<8x128xf32>
    %280 = math.absf %279 : vector<8x128xf32>
    %281 = tpu.reciprocal %280 {approx = true} : vector<8x128xf32> -> vector<8x128xf32>
    %282 = arith.mulf %280, %281 : vector<8x128xf32>
    %cst_84 = arith.constant 2.000000e+00 : f32
    %283 = vector.broadcast %cst_84 : f32 to vector<8x128xf32>
    %284 = arith.subf %283, %282 : vector<8x128xf32>
    %285 = arith.mulf %281, %284 : vector<8x128xf32>
    %cst_85 = arith.constant 0.000000e+00 : f32
    %286 = vector.broadcast %cst_85 : f32 to vector<8x128xf32>
    %287 = arith.cmpf olt, %279, %286 : vector<8x128xf32>
    %cst_86 = arith.constant 0.000000e+00 : f32
    %288 = vector.broadcast %cst_86 : f32 to vector<8x128xf32>
    %289 = arith.subf %288, %285 : vector<8x128xf32>
    %290 = arith.select %287, %289, %285 : vector<8x128xi1>, vector<8x128xf32>
    %cst_87 = arith.constant 2.000000e+00 : f32
    %291 = vector.broadcast %cst_87 : f32 to vector<8x128xf32>
    %292 = arith.mulf %291, %290 : vector<8x128xf32>
    %cst_88 = arith.constant 0.666666686 : f32
    %293 = vector.broadcast %cst_88 : f32 to vector<8x128xf32>
    %294 = arith.mulf %293, %271 : vector<8x128xf32>
    %295 = arith.mulf %290, %290 : vector<8x128xf32>
    %296 = arith.mulf %295, %290 : vector<8x128xf32>
    %297 = arith.mulf %294, %296 : vector<8x128xf32>
    %298 = arith.subf %292, %297 : vector<8x128xf32>
    %cst_89 = arith.constant 1.000000e+00 : f32
    %299 = vector.broadcast %cst_89 : f32 to vector<8x128xf32>
    %300 = arith.select %274, %299, %272 : vector<8x128xi1>, vector<8x128xf32>
    %301 = math.absf %300 : vector<8x128xf32>
    %302 = tpu.reciprocal %301 {approx = true} : vector<8x128xf32> -> vector<8x128xf32>
    %303 = arith.mulf %301, %302 : vector<8x128xf32>
    %cst_90 = arith.constant 2.000000e+00 : f32
    %304 = vector.broadcast %cst_90 : f32 to vector<8x128xf32>
    %305 = arith.subf %304, %303 : vector<8x128xf32>
    %306 = arith.mulf %302, %305 : vector<8x128xf32>
    %cst_91 = arith.constant 0.000000e+00 : f32
    %307 = vector.broadcast %cst_91 : f32 to vector<8x128xf32>
    %308 = arith.cmpf olt, %300, %307 : vector<8x128xf32>
    %cst_92 = arith.constant 0.000000e+00 : f32
    %309 = vector.broadcast %cst_92 : f32 to vector<8x128xf32>
    %310 = arith.subf %309, %306 : vector<8x128xf32>
    %311 = arith.select %308, %310, %306 : vector<8x128xi1>, vector<8x128xf32>
    %cst_93 = arith.constant 0.000000e+00 : f32
    %312 = vector.broadcast %cst_93 : f32 to vector<8x128xf32>
    %313 = arith.cmpf ogt, %226, %312 : vector<8x128xf32>
    %cst_94 = arith.constant 3.14159274 : f32
    %cst_95 = arith.constant -3.14159274 : f32
    %314 = vector.broadcast %cst_94 : f32 to vector<8x128xf32>
    %315 = vector.broadcast %cst_95 : f32 to vector<8x128xf32>
    %316 = arith.select %313, %314, %315 : vector<8x128xi1>, vector<8x128xf32>
    %317 = arith.mulf %316, %311 : vector<8x128xf32>
    %cst_96 = arith.constant 1.000000e+00 : f32
    %318 = vector.broadcast %cst_96 : f32 to vector<8x128xf32>
    %319 = arith.select %277, %318, %226 : vector<8x128xi1>, vector<8x128xf32>
    %320 = math.absf %319 : vector<8x128xf32>
    %321 = tpu.reciprocal %320 {approx = true} : vector<8x128xf32> -> vector<8x128xf32>
    %322 = arith.mulf %320, %321 : vector<8x128xf32>
    %cst_97 = arith.constant 2.000000e+00 : f32
    %323 = vector.broadcast %cst_97 : f32 to vector<8x128xf32>
    %324 = arith.subf %323, %322 : vector<8x128xf32>
    %325 = arith.mulf %321, %324 : vector<8x128xf32>
    %cst_98 = arith.constant 0.000000e+00 : f32
    %326 = vector.broadcast %cst_98 : f32 to vector<8x128xf32>
    %327 = arith.cmpf olt, %319, %326 : vector<8x128xf32>
    %cst_99 = arith.constant 0.000000e+00 : f32
    %328 = vector.broadcast %cst_99 : f32 to vector<8x128xf32>
    %329 = arith.subf %328, %325 : vector<8x128xf32>
    %330 = arith.select %327, %329, %325 : vector<8x128xi1>, vector<8x128xf32>
    %331 = arith.mulf %272, %330 : vector<8x128xf32>
    %332 = math.absf %331 : vector<8x128xf32>
    %cst_100 = arith.constant 2.41421366 : f32
    %333 = vector.broadcast %cst_100 : f32 to vector<8x128xf32>
    %334 = arith.cmpf ogt, %332, %333 : vector<8x128xf32>
    %cst_101 = arith.constant 0.414213568 : f32
    %335 = vector.broadcast %cst_101 : f32 to vector<8x128xf32>
    %336 = arith.cmpf ogt, %332, %335 : vector<8x128xf32>
    %cst_102 = arith.constant 1.000000e+00 : f32
    %337 = vector.broadcast %cst_102 : f32 to vector<8x128xf32>
    %338 = arith.select %334, %332, %337 : vector<8x128xi1>, vector<8x128xf32>
    %339 = math.absf %338 : vector<8x128xf32>
    %340 = tpu.reciprocal %339 {approx = true} : vector<8x128xf32> -> vector<8x128xf32>
    %341 = arith.mulf %339, %340 : vector<8x128xf32>
    %cst_103 = arith.constant 2.000000e+00 : f32
    %342 = vector.broadcast %cst_103 : f32 to vector<8x128xf32>
    %343 = arith.subf %342, %341 : vector<8x128xf32>
    %344 = arith.mulf %340, %343 : vector<8x128xf32>
    %cst_104 = arith.constant 0.000000e+00 : f32
    %345 = vector.broadcast %cst_104 : f32 to vector<8x128xf32>
    %346 = arith.cmpf olt, %338, %345 : vector<8x128xf32>
    %cst_105 = arith.constant 0.000000e+00 : f32
    %347 = vector.broadcast %cst_105 : f32 to vector<8x128xf32>
    %348 = arith.subf %347, %344 : vector<8x128xf32>
    %349 = arith.select %346, %348, %344 : vector<8x128xi1>, vector<8x128xf32>
    %cst_106 = arith.constant 0.000000e+00 : f32
    %350 = vector.broadcast %cst_106 : f32 to vector<8x128xf32>
    %351 = arith.subf %350, %349 : vector<8x128xf32>
    %cst_107 = arith.constant 1.000000e+00 : f32
    %352 = vector.broadcast %cst_107 : f32 to vector<8x128xf32>
    %353 = arith.subf %332, %352 : vector<8x128xf32>
    %cst_108 = arith.constant 1.000000e+00 : f32
    %354 = vector.broadcast %cst_108 : f32 to vector<8x128xf32>
    %355 = arith.addf %332, %354 : vector<8x128xf32>
    %356 = math.absf %355 : vector<8x128xf32>
    %357 = tpu.reciprocal %356 {approx = true} : vector<8x128xf32> -> vector<8x128xf32>
    %358 = arith.mulf %356, %357 : vector<8x128xf32>
    %cst_109 = arith.constant 2.000000e+00 : f32
    %359 = vector.broadcast %cst_109 : f32 to vector<8x128xf32>
    %360 = arith.subf %359, %358 : vector<8x128xf32>
    %361 = arith.mulf %357, %360 : vector<8x128xf32>
    %cst_110 = arith.constant 0.000000e+00 : f32
    %362 = vector.broadcast %cst_110 : f32 to vector<8x128xf32>
    %363 = arith.cmpf olt, %355, %362 : vector<8x128xf32>
    %cst_111 = arith.constant 0.000000e+00 : f32
    %364 = vector.broadcast %cst_111 : f32 to vector<8x128xf32>
    %365 = arith.subf %364, %361 : vector<8x128xf32>
    %366 = arith.select %363, %365, %361 : vector<8x128xi1>, vector<8x128xf32>
    %367 = arith.mulf %353, %366 : vector<8x128xf32>
    %368 = arith.select %336, %367, %332 : vector<8x128xi1>, vector<8x128xf32>
    %369 = arith.select %334, %351, %368 : vector<8x128xi1>, vector<8x128xf32>
    %cst_112 = arith.constant 0.785398185 : f32
    %cst_113 = arith.constant 0.000000e+00 : f32
    %370 = vector.broadcast %cst_112 : f32 to vector<8x128xf32>
    %371 = vector.broadcast %cst_113 : f32 to vector<8x128xf32>
    %372 = arith.select %336, %370, %371 : vector<8x128xi1>, vector<8x128xf32>
    %cst_114 = arith.constant 1.57079637 : f32
    %373 = vector.broadcast %cst_114 : f32 to vector<8x128xf32>
    %374 = arith.select %334, %373, %372 : vector<8x128xi1>, vector<8x128xf32>
    %375 = arith.mulf %369, %369 : vector<8x128xf32>
    %cst_115 = arith.constant 0.0805374458 : f32
    %376 = vector.broadcast %cst_115 : f32 to vector<8x128xf32>
    %377 = arith.mulf %376, %375 : vector<8x128xf32>
    %cst_116 = arith.constant 0.138776854 : f32
    %378 = vector.broadcast %cst_116 : f32 to vector<8x128xf32>
    %379 = arith.subf %377, %378 : vector<8x128xf32>
    %380 = arith.mulf %379, %375 : vector<8x128xf32>
    %cst_117 = arith.constant 0.199777111 : f32
    %381 = vector.broadcast %cst_117 : f32 to vector<8x128xf32>
    %382 = arith.addf %380, %381 : vector<8x128xf32>
    %383 = arith.mulf %382, %375 : vector<8x128xf32>
    %cst_118 = arith.constant 0.333329499 : f32
    %384 = vector.broadcast %cst_118 : f32 to vector<8x128xf32>
    %385 = arith.subf %383, %384 : vector<8x128xf32>
    %386 = arith.mulf %385, %375 : vector<8x128xf32>
    %387 = arith.mulf %386, %369 : vector<8x128xf32>
    %388 = arith.addf %374, %387 : vector<8x128xf32>
    %389 = arith.addf %388, %369 : vector<8x128xf32>
    %cst_119 = arith.constant 0.000000e+00 : f32
    %390 = vector.broadcast %cst_119 : f32 to vector<8x128xf32>
    %391 = arith.cmpf olt, %331, %390 : vector<8x128xf32>
    %cst_120 = arith.constant 0.000000e+00 : f32
    %392 = vector.broadcast %cst_120 : f32 to vector<8x128xf32>
    %393 = arith.subf %392, %389 : vector<8x128xf32>
    %394 = arith.select %391, %393, %389 : vector<8x128xi1>, vector<8x128xf32>
    %cst_121 = arith.constant 2.000000e+00 : f32
    %395 = vector.broadcast %cst_121 : f32 to vector<8x128xf32>
    %396 = arith.mulf %395, %394 : vector<8x128xf32>
    %397 = arith.mulf %396, %311 : vector<8x128xf32>
    %398 = arith.select %277, %317, %397 : vector<8x128xi1>, vector<8x128xf32>
    %399 = arith.select %274, %298, %398 : vector<8x128xi1>, vector<8x128xf32>
    %400 = arith.mulf %399, %205 : vector<8x128xf32>
    %401 = arith.mulf %399, %212 : vector<8x128xf32>
    %402 = arith.mulf %399, %219 : vector<8x128xf32>
    %403 = math.log %266 : vector<8x128xf32>
    %404 = arith.mulf %400, %400 : vector<8x128xf32>
    %405 = arith.mulf %401, %401 : vector<8x128xf32>
    %406 = arith.addf %404, %405 : vector<8x128xf32>
    %407 = arith.mulf %402, %402 : vector<8x128xf32>
    %408 = arith.addf %406, %407 : vector<8x128xf32>
    %409 = math.sqrt %408 : vector<8x128xf32>
    %410 = math.exp %403 : vector<8x128xf32>
    %411 = arith.mulf %409, %409 : vector<8x128xf32>
    %412 = arith.mulf %403, %403 : vector<8x128xf32>
    %413 = math.absf %403 : vector<8x128xf32>
    %cst_122 = arith.constant 9.99999997E-7 : f32
    %414 = vector.broadcast %cst_122 : f32 to vector<8x128xf32>
    %415 = arith.cmpf olt, %413, %414 : vector<8x128xf32>
    %cst_123 = arith.constant 9.99999997E-7 : f32
    %416 = vector.broadcast %cst_123 : f32 to vector<8x128xf32>
    %417 = arith.cmpf olt, %409, %416 : vector<8x128xf32>
    %418 = math.sin %409 : vector<8x128xf32>
    %419 = math.cos %409 : vector<8x128xf32>
    %cst_124 = arith.constant 1.000000e+00 : f32
    %420 = vector.broadcast %cst_124 : f32 to vector<8x128xf32>
    %421 = arith.select %417, %420, %409 : vector<8x128xi1>, vector<8x128xf32>
    %cst_125 = arith.constant 1.000000e+00 : f32
    %422 = vector.broadcast %cst_125 : f32 to vector<8x128xf32>
    %423 = arith.select %417, %422, %411 : vector<8x128xi1>, vector<8x128xf32>
    %cst_126 = arith.constant 1.000000e+00 : f32
    %424 = vector.broadcast %cst_126 : f32 to vector<8x128xf32>
    %425 = arith.select %415, %424, %403 : vector<8x128xi1>, vector<8x128xf32>
    %cst_127 = arith.constant 1.000000e+00 : f32
    %426 = vector.broadcast %cst_127 : f32 to vector<8x128xf32>
    %427 = arith.select %415, %426, %412 : vector<8x128xi1>, vector<8x128xf32>
    %428 = math.absf %421 : vector<8x128xf32>
    %429 = tpu.reciprocal %428 {approx = true} : vector<8x128xf32> -> vector<8x128xf32>
    %430 = arith.mulf %428, %429 : vector<8x128xf32>
    %cst_128 = arith.constant 2.000000e+00 : f32
    %431 = vector.broadcast %cst_128 : f32 to vector<8x128xf32>
    %432 = arith.subf %431, %430 : vector<8x128xf32>
    %433 = arith.mulf %429, %432 : vector<8x128xf32>
    %cst_129 = arith.constant 0.000000e+00 : f32
    %434 = vector.broadcast %cst_129 : f32 to vector<8x128xf32>
    %435 = arith.cmpf olt, %421, %434 : vector<8x128xf32>
    %cst_130 = arith.constant 0.000000e+00 : f32
    %436 = vector.broadcast %cst_130 : f32 to vector<8x128xf32>
    %437 = arith.subf %436, %433 : vector<8x128xf32>
    %438 = arith.select %435, %437, %433 : vector<8x128xi1>, vector<8x128xf32>
    %439 = math.absf %423 : vector<8x128xf32>
    %440 = tpu.reciprocal %439 {approx = true} : vector<8x128xf32> -> vector<8x128xf32>
    %441 = arith.mulf %439, %440 : vector<8x128xf32>
    %cst_131 = arith.constant 2.000000e+00 : f32
    %442 = vector.broadcast %cst_131 : f32 to vector<8x128xf32>
    %443 = arith.subf %442, %441 : vector<8x128xf32>
    %444 = arith.mulf %440, %443 : vector<8x128xf32>
    %cst_132 = arith.constant 0.000000e+00 : f32
    %445 = vector.broadcast %cst_132 : f32 to vector<8x128xf32>
    %446 = arith.cmpf olt, %423, %445 : vector<8x128xf32>
    %cst_133 = arith.constant 0.000000e+00 : f32
    %447 = vector.broadcast %cst_133 : f32 to vector<8x128xf32>
    %448 = arith.subf %447, %444 : vector<8x128xf32>
    %449 = arith.select %446, %448, %444 : vector<8x128xi1>, vector<8x128xf32>
    %450 = math.absf %425 : vector<8x128xf32>
    %451 = tpu.reciprocal %450 {approx = true} : vector<8x128xf32> -> vector<8x128xf32>
    %452 = arith.mulf %450, %451 : vector<8x128xf32>
    %cst_134 = arith.constant 2.000000e+00 : f32
    %453 = vector.broadcast %cst_134 : f32 to vector<8x128xf32>
    %454 = arith.subf %453, %452 : vector<8x128xf32>
    %455 = arith.mulf %451, %454 : vector<8x128xf32>
    %cst_135 = arith.constant 0.000000e+00 : f32
    %456 = vector.broadcast %cst_135 : f32 to vector<8x128xf32>
    %457 = arith.cmpf olt, %425, %456 : vector<8x128xf32>
    %cst_136 = arith.constant 0.000000e+00 : f32
    %458 = vector.broadcast %cst_136 : f32 to vector<8x128xf32>
    %459 = arith.subf %458, %455 : vector<8x128xf32>
    %460 = arith.select %457, %459, %455 : vector<8x128xi1>, vector<8x128xf32>
    %461 = math.absf %427 : vector<8x128xf32>
    %462 = tpu.reciprocal %461 {approx = true} : vector<8x128xf32> -> vector<8x128xf32>
    %463 = arith.mulf %461, %462 : vector<8x128xf32>
    %cst_137 = arith.constant 2.000000e+00 : f32
    %464 = vector.broadcast %cst_137 : f32 to vector<8x128xf32>
    %465 = arith.subf %464, %463 : vector<8x128xf32>
    %466 = arith.mulf %462, %465 : vector<8x128xf32>
    %cst_138 = arith.constant 0.000000e+00 : f32
    %467 = vector.broadcast %cst_138 : f32 to vector<8x128xf32>
    %468 = arith.cmpf olt, %427, %467 : vector<8x128xf32>
    %cst_139 = arith.constant 0.000000e+00 : f32
    %469 = vector.broadcast %cst_139 : f32 to vector<8x128xf32>
    %470 = arith.subf %469, %466 : vector<8x128xf32>
    %471 = arith.select %468, %470, %466 : vector<8x128xi1>, vector<8x128xf32>
    %cst_140 = arith.constant 1.000000e+00 : f32
    %472 = vector.broadcast %cst_140 : f32 to vector<8x128xf32>
    %473 = arith.subf %410, %472 : vector<8x128xf32>
    %474 = arith.mulf %473, %460 : vector<8x128xf32>
    %cst_141 = arith.constant 1.000000e+00 : f32
    %475 = vector.broadcast %cst_141 : f32 to vector<8x128xf32>
    %476 = arith.select %415, %475, %474 : vector<8x128xi1>, vector<8x128xf32>
    %cst_142 = arith.constant 1.000000e+00 : f32
    %477 = vector.broadcast %cst_142 : f32 to vector<8x128xf32>
    %478 = arith.subf %477, %419 : vector<8x128xf32>
    %479 = arith.mulf %478, %449 : vector<8x128xf32>
    %cst_143 = arith.constant 5.000000e-01 : f32
    %480 = vector.broadcast %cst_143 : f32 to vector<8x128xf32>
    %481 = arith.select %417, %480, %479 : vector<8x128xi1>, vector<8x128xf32>
    %482 = arith.subf %409, %418 : vector<8x128xf32>
    %483 = arith.mulf %449, %438 : vector<8x128xf32>
    %484 = arith.mulf %482, %483 : vector<8x128xf32>
    %cst_144 = arith.constant 0.166666672 : f32
    %485 = vector.broadcast %cst_144 : f32 to vector<8x128xf32>
    %486 = arith.select %417, %485, %484 : vector<8x128xi1>, vector<8x128xf32>
    %cst_145 = arith.constant 1.000000e+00 : f32
    %487 = vector.broadcast %cst_145 : f32 to vector<8x128xf32>
    %488 = arith.subf %403, %487 : vector<8x128xf32>
    %489 = arith.mulf %488, %410 : vector<8x128xf32>
    %cst_146 = arith.constant 1.000000e+00 : f32
    %490 = vector.broadcast %cst_146 : f32 to vector<8x128xf32>
    %491 = arith.addf %489, %490 : vector<8x128xf32>
    %492 = arith.mulf %491, %471 : vector<8x128xf32>
    %cst_147 = arith.constant 5.000000e-01 : f32
    %493 = vector.broadcast %cst_147 : f32 to vector<8x128xf32>
    %494 = arith.mulf %493, %412 : vector<8x128xf32>
    %495 = arith.mulf %494, %410 : vector<8x128xf32>
    %496 = arith.addf %495, %410 : vector<8x128xf32>
    %cst_148 = arith.constant 1.000000e+00 : f32
    %497 = vector.broadcast %cst_148 : f32 to vector<8x128xf32>
    %498 = arith.subf %496, %497 : vector<8x128xf32>
    %499 = arith.mulf %403, %410 : vector<8x128xf32>
    %500 = arith.subf %498, %499 : vector<8x128xf32>
    %501 = arith.mulf %471, %460 : vector<8x128xf32>
    %502 = arith.mulf %500, %501 : vector<8x128xf32>
    %503 = arith.mulf %410, %418 : vector<8x128xf32>
    %504 = arith.mulf %410, %419 : vector<8x128xf32>
    %505 = arith.addf %411, %412 : vector<8x128xf32>
    %cst_149 = arith.constant 1.000000e+00 : f32
    %506 = vector.broadcast %cst_149 : f32 to vector<8x128xf32>
    %507 = arith.select %417, %506, %505 : vector<8x128xi1>, vector<8x128xf32>
    %508 = math.absf %507 : vector<8x128xf32>
    %509 = tpu.reciprocal %508 {approx = true} : vector<8x128xf32> -> vector<8x128xf32>
    %510 = arith.mulf %508, %509 : vector<8x128xf32>
    %cst_150 = arith.constant 2.000000e+00 : f32
    %511 = vector.broadcast %cst_150 : f32 to vector<8x128xf32>
    %512 = arith.subf %511, %510 : vector<8x128xf32>
    %513 = arith.mulf %509, %512 : vector<8x128xf32>
    %cst_151 = arith.constant 0.000000e+00 : f32
    %514 = vector.broadcast %cst_151 : f32 to vector<8x128xf32>
    %515 = arith.cmpf olt, %507, %514 : vector<8x128xf32>
    %cst_152 = arith.constant 0.000000e+00 : f32
    %516 = vector.broadcast %cst_152 : f32 to vector<8x128xf32>
    %517 = arith.subf %516, %513 : vector<8x128xf32>
    %518 = arith.select %515, %517, %513 : vector<8x128xi1>, vector<8x128xf32>
    %519 = arith.mulf %503, %403 : vector<8x128xf32>
    %cst_153 = arith.constant 1.000000e+00 : f32
    %520 = vector.broadcast %cst_153 : f32 to vector<8x128xf32>
    %521 = arith.subf %520, %504 : vector<8x128xf32>
    %522 = arith.mulf %521, %409 : vector<8x128xf32>
    %523 = arith.addf %519, %522 : vector<8x128xf32>
    %524 = arith.mulf %438, %518 : vector<8x128xf32>
    %525 = arith.mulf %523, %524 : vector<8x128xf32>
    %cst_154 = arith.constant 1.000000e+00 : f32
    %526 = vector.broadcast %cst_154 : f32 to vector<8x128xf32>
    %527 = arith.subf %504, %526 : vector<8x128xf32>
    %528 = arith.mulf %527, %403 : vector<8x128xf32>
    %529 = arith.mulf %503, %409 : vector<8x128xf32>
    %530 = arith.addf %528, %529 : vector<8x128xf32>
    %531 = arith.mulf %530, %518 : vector<8x128xf32>
    %532 = arith.subf %476, %531 : vector<8x128xf32>
    %533 = arith.mulf %532, %449 : vector<8x128xf32>
    %534 = arith.select %417, %492, %525 : vector<8x128xi1>, vector<8x128xf32>
    %535 = arith.select %415, %481, %534 : vector<8x128xi1>, vector<8x128xf32>
    %536 = arith.select %417, %502, %533 : vector<8x128xi1>, vector<8x128xf32>
    %537 = arith.select %415, %486, %536 : vector<8x128xi1>, vector<8x128xf32>
    %538 = arith.mulf %408, %537 : vector<8x128xf32>
    %539 = arith.subf %476, %538 : vector<8x128xf32>
    %540 = arith.mulf %539, %539 : vector<8x128xf32>
    %541 = arith.mulf %408, %535 : vector<8x128xf32>
    %542 = arith.mulf %541, %535 : vector<8x128xf32>
    %543 = arith.addf %540, %542 : vector<8x128xf32>
    %544 = math.absf %476 : vector<8x128xf32>
    %545 = tpu.reciprocal %544 {approx = true} : vector<8x128xf32> -> vector<8x128xf32>
    %546 = arith.mulf %544, %545 : vector<8x128xf32>
    %cst_155 = arith.constant 2.000000e+00 : f32
    %547 = vector.broadcast %cst_155 : f32 to vector<8x128xf32>
    %548 = arith.subf %547, %546 : vector<8x128xf32>
    %549 = arith.mulf %545, %548 : vector<8x128xf32>
    %cst_156 = arith.constant 0.000000e+00 : f32
    %550 = vector.broadcast %cst_156 : f32 to vector<8x128xf32>
    %551 = arith.cmpf olt, %476, %550 : vector<8x128xf32>
    %cst_157 = arith.constant 0.000000e+00 : f32
    %552 = vector.broadcast %cst_157 : f32 to vector<8x128xf32>
    %553 = arith.subf %552, %549 : vector<8x128xf32>
    %554 = arith.select %551, %553, %549 : vector<8x128xi1>, vector<8x128xf32>
    %555 = math.absf %543 : vector<8x128xf32>
    %556 = tpu.reciprocal %555 {approx = true} : vector<8x128xf32> -> vector<8x128xf32>
    %557 = arith.mulf %555, %556 : vector<8x128xf32>
    %cst_158 = arith.constant 2.000000e+00 : f32
    %558 = vector.broadcast %cst_158 : f32 to vector<8x128xf32>
    %559 = arith.subf %558, %557 : vector<8x128xf32>
    %560 = arith.mulf %556, %559 : vector<8x128xf32>
    %cst_159 = arith.constant 0.000000e+00 : f32
    %561 = vector.broadcast %cst_159 : f32 to vector<8x128xf32>
    %562 = arith.cmpf olt, %543, %561 : vector<8x128xf32>
    %cst_160 = arith.constant 0.000000e+00 : f32
    %563 = vector.broadcast %cst_160 : f32 to vector<8x128xf32>
    %564 = arith.subf %563, %560 : vector<8x128xf32>
    %565 = arith.select %562, %564, %560 : vector<8x128xi1>, vector<8x128xf32>
    %cst_161 = arith.constant 0.000000e+00 : f32
    %566 = vector.broadcast %cst_161 : f32 to vector<8x128xf32>
    %567 = arith.subf %566, %535 : vector<8x128xf32>
    %568 = arith.mulf %567, %565 : vector<8x128xf32>
    %569 = arith.mulf %535, %535 : vector<8x128xf32>
    %570 = arith.mulf %537, %476 : vector<8x128xf32>
    %571 = arith.subf %569, %570 : vector<8x128xf32>
    %572 = arith.mulf %408, %537 : vector<8x128xf32>
    %573 = arith.mulf %572, %537 : vector<8x128xf32>
    %574 = arith.addf %571, %573 : vector<8x128xf32>
    %575 = arith.mulf %554, %565 : vector<8x128xf32>
    %576 = arith.mulf %574, %575 : vector<8x128xf32>
    %577 = arith.mulf %401, %265 : vector<8x128xf32>
    %578 = arith.mulf %402, %263 : vector<8x128xf32>
    %579 = arith.subf %577, %578 : vector<8x128xf32>
    %580 = arith.mulf %402, %261 : vector<8x128xf32>
    %581 = arith.mulf %400, %265 : vector<8x128xf32>
    %582 = arith.subf %580, %581 : vector<8x128xf32>
    %583 = arith.mulf %400, %263 : vector<8x128xf32>
    %584 = arith.mulf %401, %261 : vector<8x128xf32>
    %585 = arith.subf %583, %584 : vector<8x128xf32>
    %586 = arith.mulf %401, %585 : vector<8x128xf32>
    %587 = arith.mulf %402, %582 : vector<8x128xf32>
    %588 = arith.subf %586, %587 : vector<8x128xf32>
    %589 = arith.mulf %402, %579 : vector<8x128xf32>
    %590 = arith.mulf %400, %585 : vector<8x128xf32>
    %591 = arith.subf %589, %590 : vector<8x128xf32>
    %592 = arith.mulf %400, %582 : vector<8x128xf32>
    %593 = arith.mulf %401, %579 : vector<8x128xf32>
    %594 = arith.subf %592, %593 : vector<8x128xf32>
    %595 = arith.mulf %554, %261 : vector<8x128xf32>
    %596 = arith.mulf %568, %579 : vector<8x128xf32>
    %597 = arith.addf %595, %596 : vector<8x128xf32>
    %598 = arith.mulf %576, %588 : vector<8x128xf32>
    %599 = arith.addf %597, %598 : vector<8x128xf32>
    %600 = arith.mulf %554, %263 : vector<8x128xf32>
    %601 = arith.mulf %568, %582 : vector<8x128xf32>
    %602 = arith.addf %600, %601 : vector<8x128xf32>
    %603 = arith.mulf %576, %591 : vector<8x128xf32>
    %604 = arith.addf %602, %603 : vector<8x128xf32>
    %605 = arith.mulf %554, %265 : vector<8x128xf32>
    %606 = arith.mulf %568, %585 : vector<8x128xf32>
    %607 = arith.addf %605, %606 : vector<8x128xf32>
    %608 = arith.mulf %576, %594 : vector<8x128xf32>
    %609 = arith.addf %607, %608 : vector<8x128xf32>
    %c0_162 = arith.constant 0 : index
    %610 = arith.index_cast %c0_i32 : i32 to index
    %c0_163 = arith.constant 0 : index
    %c0_164 = arith.constant 0 : index
    %611 = vector.load %arg4[%c0_162, %610, %c0_163, %c0_164] : memref<8x1x8x128xf32, #tpu.memory_space<vmem>>, vector<1x1x8x128xf32>
    %612 = vector.shape_cast %611 : vector<1x1x8x128xf32> to vector<8x128xf32>
    %c1_165 = arith.constant 1 : index
    %613 = arith.index_cast %c0_i32 : i32 to index
    %c0_166 = arith.constant 0 : index
    %c0_167 = arith.constant 0 : index
    %614 = vector.load %arg4[%c1_165, %613, %c0_166, %c0_167] : memref<8x1x8x128xf32, #tpu.memory_space<vmem>>, vector<1x1x8x128xf32>
    %615 = vector.shape_cast %614 : vector<1x1x8x128xf32> to vector<8x128xf32>
    %c2_168 = arith.constant 2 : index
    %616 = arith.index_cast %c0_i32 : i32 to index
    %c0_169 = arith.constant 0 : index
    %c0_170 = arith.constant 0 : index
    %617 = vector.load %arg4[%c2_168, %616, %c0_169, %c0_170] : memref<8x1x8x128xf32, #tpu.memory_space<vmem>>, vector<1x1x8x128xf32>
    %618 = vector.shape_cast %617 : vector<1x1x8x128xf32> to vector<8x128xf32>
    %c3_171 = arith.constant 3 : index
    %619 = arith.index_cast %c0_i32 : i32 to index
    %c0_172 = arith.constant 0 : index
    %c0_173 = arith.constant 0 : index
    %620 = vector.load %arg4[%c3_171, %619, %c0_172, %c0_173] : memref<8x1x8x128xf32, #tpu.memory_space<vmem>>, vector<1x1x8x128xf32>
    %621 = vector.shape_cast %620 : vector<1x1x8x128xf32> to vector<8x128xf32>
    %c4_174 = arith.constant 4 : index
    %622 = arith.index_cast %c0_i32 : i32 to index
    %c0_175 = arith.constant 0 : index
    %c0_176 = arith.constant 0 : index
    %623 = vector.load %arg4[%c4_174, %622, %c0_175, %c0_176] : memref<8x1x8x128xf32, #tpu.memory_space<vmem>>, vector<1x1x8x128xf32>
    %624 = vector.shape_cast %623 : vector<1x1x8x128xf32> to vector<8x128xf32>
    %c5_177 = arith.constant 5 : index
    %625 = arith.index_cast %c0_i32 : i32 to index
    %c0_178 = arith.constant 0 : index
    %c0_179 = arith.constant 0 : index
    %626 = vector.load %arg4[%c5_177, %625, %c0_178, %c0_179] : memref<8x1x8x128xf32, #tpu.memory_space<vmem>>, vector<1x1x8x128xf32>
    %627 = vector.shape_cast %626 : vector<1x1x8x128xf32> to vector<8x128xf32>
    %c6_180 = arith.constant 6 : index
    %628 = arith.index_cast %c0_i32 : i32 to index
    %c0_181 = arith.constant 0 : index
    %c0_182 = arith.constant 0 : index
    %629 = vector.load %arg4[%c6_180, %628, %c0_181, %c0_182] : memref<8x1x8x128xf32, #tpu.memory_space<vmem>>, vector<1x1x8x128xf32>
    %630 = vector.shape_cast %629 : vector<1x1x8x128xf32> to vector<8x128xf32>
    %c7_183 = arith.constant 7 : index
    %631 = arith.index_cast %c0_i32 : i32 to index
    %c0_184 = arith.constant 0 : index
    %c0_185 = arith.constant 0 : index
    %632 = vector.load %arg4[%c7_183, %631, %c0_184, %c0_185] : memref<8x1x8x128xf32, #tpu.memory_space<vmem>>, vector<1x1x8x128xf32>
    %633 = vector.shape_cast %632 : vector<1x1x8x128xf32> to vector<8x128xf32>
    %634 = arith.mulf %134, %621 : vector<8x128xf32>
    %635 = arith.mulf %113, %630 : vector<8x128xf32>
    %636 = arith.addf %634, %635 : vector<8x128xf32>
    %637 = arith.mulf %120, %627 : vector<8x128xf32>
    %638 = arith.addf %636, %637 : vector<8x128xf32>
    %639 = arith.mulf %127, %624 : vector<8x128xf32>
    %640 = arith.subf %638, %639 : vector<8x128xf32>
    %641 = arith.mulf %134, %624 : vector<8x128xf32>
    %642 = arith.mulf %113, %627 : vector<8x128xf32>
    %643 = arith.subf %641, %642 : vector<8x128xf32>
    %644 = arith.mulf %120, %630 : vector<8x128xf32>
    %645 = arith.addf %643, %644 : vector<8x128xf32>
    %646 = arith.mulf %127, %621 : vector<8x128xf32>
    %647 = arith.addf %645, %646 : vector<8x128xf32>
    %648 = arith.mulf %134, %627 : vector<8x128xf32>
    %649 = arith.mulf %113, %624 : vector<8x128xf32>
    %650 = arith.addf %648, %649 : vector<8x128xf32>
    %651 = arith.mulf %120, %621 : vector<8x128xf32>
    %652 = arith.subf %650, %651 : vector<8x128xf32>
    %653 = arith.mulf %127, %630 : vector<8x128xf32>
    %654 = arith.addf %652, %653 : vector<8x128xf32>
    %655 = arith.mulf %134, %630 : vector<8x128xf32>
    %656 = arith.mulf %113, %621 : vector<8x128xf32>
    %657 = arith.subf %655, %656 : vector<8x128xf32>
    %658 = arith.mulf %120, %624 : vector<8x128xf32>
    %659 = arith.subf %657, %658 : vector<8x128xf32>
    %660 = arith.mulf %127, %627 : vector<8x128xf32>
    %661 = arith.subf %659, %660 : vector<8x128xf32>
    %662 = arith.mulf %120, %618 : vector<8x128xf32>
    %663 = arith.mulf %127, %615 : vector<8x128xf32>
    %664 = arith.subf %662, %663 : vector<8x128xf32>
    %665 = arith.mulf %127, %612 : vector<8x128xf32>
    %666 = arith.mulf %113, %618 : vector<8x128xf32>
    %667 = arith.subf %665, %666 : vector<8x128xf32>
    %668 = arith.mulf %113, %615 : vector<8x128xf32>
    %669 = arith.mulf %120, %612 : vector<8x128xf32>
    %670 = arith.subf %668, %669 : vector<8x128xf32>
    %671 = arith.mulf %120, %670 : vector<8x128xf32>
    %672 = arith.mulf %127, %667 : vector<8x128xf32>
    %673 = arith.subf %671, %672 : vector<8x128xf32>
    %674 = arith.mulf %127, %664 : vector<8x128xf32>
    %675 = arith.mulf %113, %670 : vector<8x128xf32>
    %676 = arith.subf %674, %675 : vector<8x128xf32>
    %677 = arith.mulf %113, %667 : vector<8x128xf32>
    %678 = arith.mulf %120, %664 : vector<8x128xf32>
    %679 = arith.subf %677, %678 : vector<8x128xf32>
    %680 = arith.mulf %134, %664 : vector<8x128xf32>
    %681 = arith.addf %680, %673 : vector<8x128xf32>
    %cst_186 = arith.constant 2.000000e+00 : f32
    %682 = vector.broadcast %cst_186 : f32 to vector<8x128xf32>
    %683 = arith.mulf %682, %681 : vector<8x128xf32>
    %684 = arith.addf %612, %683 : vector<8x128xf32>
    %685 = arith.mulf %134, %667 : vector<8x128xf32>
    %686 = arith.addf %685, %676 : vector<8x128xf32>
    %cst_187 = arith.constant 2.000000e+00 : f32
    %687 = vector.broadcast %cst_187 : f32 to vector<8x128xf32>
    %688 = arith.mulf %687, %686 : vector<8x128xf32>
    %689 = arith.addf %615, %688 : vector<8x128xf32>
    %690 = arith.mulf %134, %670 : vector<8x128xf32>
    %691 = arith.addf %690, %679 : vector<8x128xf32>
    %cst_188 = arith.constant 2.000000e+00 : f32
    %692 = vector.broadcast %cst_188 : f32 to vector<8x128xf32>
    %693 = arith.mulf %692, %691 : vector<8x128xf32>
    %694 = arith.addf %618, %693 : vector<8x128xf32>
    %695 = arith.mulf %174, %684 : vector<8x128xf32>
    %696 = arith.addf %695, %169 : vector<8x128xf32>
    %697 = arith.mulf %174, %689 : vector<8x128xf32>
    %698 = arith.addf %697, %171 : vector<8x128xf32>
    %699 = arith.mulf %174, %694 : vector<8x128xf32>
    %700 = arith.addf %699, %173 : vector<8x128xf32>
    %701 = arith.mulf %174, %633 : vector<8x128xf32>
    %702 = arith.mulf %640, %640 : vector<8x128xf32>
    %703 = arith.mulf %647, %647 : vector<8x128xf32>
    %704 = arith.addf %702, %703 : vector<8x128xf32>
    %705 = arith.mulf %654, %654 : vector<8x128xf32>
    %706 = arith.addf %704, %705 : vector<8x128xf32>
    %707 = math.sqrt %706 : vector<8x128xf32>
    %cst_189 = arith.constant 9.99999996E-13 : f32
    %708 = vector.broadcast %cst_189 : f32 to vector<8x128xf32>
    %709 = arith.cmpf olt, %706, %708 : vector<8x128xf32>
    %710 = math.absf %661 : vector<8x128xf32>
    %cst_190 = arith.constant 9.99999997E-7 : f32
    %711 = vector.broadcast %cst_190 : f32 to vector<8x128xf32>
    %712 = arith.cmpf olt, %710, %711 : vector<8x128xf32>
    %cst_191 = arith.constant 1.000000e+00 : f32
    %713 = vector.broadcast %cst_191 : f32 to vector<8x128xf32>
    %714 = arith.select %709, %661, %713 : vector<8x128xi1>, vector<8x128xf32>
    %715 = math.absf %714 : vector<8x128xf32>
    %716 = tpu.reciprocal %715 {approx = true} : vector<8x128xf32> -> vector<8x128xf32>
    %717 = arith.mulf %715, %716 : vector<8x128xf32>
    %cst_192 = arith.constant 2.000000e+00 : f32
    %718 = vector.broadcast %cst_192 : f32 to vector<8x128xf32>
    %719 = arith.subf %718, %717 : vector<8x128xf32>
    %720 = arith.mulf %716, %719 : vector<8x128xf32>
    %cst_193 = arith.constant 0.000000e+00 : f32
    %721 = vector.broadcast %cst_193 : f32 to vector<8x128xf32>
    %722 = arith.cmpf olt, %714, %721 : vector<8x128xf32>
    %cst_194 = arith.constant 0.000000e+00 : f32
    %723 = vector.broadcast %cst_194 : f32 to vector<8x128xf32>
    %724 = arith.subf %723, %720 : vector<8x128xf32>
    %725 = arith.select %722, %724, %720 : vector<8x128xi1>, vector<8x128xf32>
    %cst_195 = arith.constant 2.000000e+00 : f32
    %726 = vector.broadcast %cst_195 : f32 to vector<8x128xf32>
    %727 = arith.mulf %726, %725 : vector<8x128xf32>
    %cst_196 = arith.constant 0.666666686 : f32
    %728 = vector.broadcast %cst_196 : f32 to vector<8x128xf32>
    %729 = arith.mulf %728, %706 : vector<8x128xf32>
    %730 = arith.mulf %725, %725 : vector<8x128xf32>
    %731 = arith.mulf %730, %725 : vector<8x128xf32>
    %732 = arith.mulf %729, %731 : vector<8x128xf32>
    %733 = arith.subf %727, %732 : vector<8x128xf32>
    %cst_197 = arith.constant 1.000000e+00 : f32
    %734 = vector.broadcast %cst_197 : f32 to vector<8x128xf32>
    %735 = arith.select %709, %734, %707 : vector<8x128xi1>, vector<8x128xf32>
    %736 = math.absf %735 : vector<8x128xf32>
    %737 = tpu.reciprocal %736 {approx = true} : vector<8x128xf32> -> vector<8x128xf32>
    %738 = arith.mulf %736, %737 : vector<8x128xf32>
    %cst_198 = arith.constant 2.000000e+00 : f32
    %739 = vector.broadcast %cst_198 : f32 to vector<8x128xf32>
    %740 = arith.subf %739, %738 : vector<8x128xf32>
    %741 = arith.mulf %737, %740 : vector<8x128xf32>
    %cst_199 = arith.constant 0.000000e+00 : f32
    %742 = vector.broadcast %cst_199 : f32 to vector<8x128xf32>
    %743 = arith.cmpf olt, %735, %742 : vector<8x128xf32>
    %cst_200 = arith.constant 0.000000e+00 : f32
    %744 = vector.broadcast %cst_200 : f32 to vector<8x128xf32>
    %745 = arith.subf %744, %741 : vector<8x128xf32>
    %746 = arith.select %743, %745, %741 : vector<8x128xi1>, vector<8x128xf32>
    %cst_201 = arith.constant 0.000000e+00 : f32
    %747 = vector.broadcast %cst_201 : f32 to vector<8x128xf32>
    %748 = arith.cmpf ogt, %661, %747 : vector<8x128xf32>
    %cst_202 = arith.constant 3.14159274 : f32
    %cst_203 = arith.constant -3.14159274 : f32
    %749 = vector.broadcast %cst_202 : f32 to vector<8x128xf32>
    %750 = vector.broadcast %cst_203 : f32 to vector<8x128xf32>
    %751 = arith.select %748, %749, %750 : vector<8x128xi1>, vector<8x128xf32>
    %752 = arith.mulf %751, %746 : vector<8x128xf32>
    %cst_204 = arith.constant 1.000000e+00 : f32
    %753 = vector.broadcast %cst_204 : f32 to vector<8x128xf32>
    %754 = arith.select %712, %753, %661 : vector<8x128xi1>, vector<8x128xf32>
    %755 = math.absf %754 : vector<8x128xf32>
    %756 = tpu.reciprocal %755 {approx = true} : vector<8x128xf32> -> vector<8x128xf32>
    %757 = arith.mulf %755, %756 : vector<8x128xf32>
    %cst_205 = arith.constant 2.000000e+00 : f32
    %758 = vector.broadcast %cst_205 : f32 to vector<8x128xf32>
    %759 = arith.subf %758, %757 : vector<8x128xf32>
    %760 = arith.mulf %756, %759 : vector<8x128xf32>
    %cst_206 = arith.constant 0.000000e+00 : f32
    %761 = vector.broadcast %cst_206 : f32 to vector<8x128xf32>
    %762 = arith.cmpf olt, %754, %761 : vector<8x128xf32>
    %cst_207 = arith.constant 0.000000e+00 : f32
    %763 = vector.broadcast %cst_207 : f32 to vector<8x128xf32>
    %764 = arith.subf %763, %760 : vector<8x128xf32>
    %765 = arith.select %762, %764, %760 : vector<8x128xi1>, vector<8x128xf32>
    %766 = arith.mulf %707, %765 : vector<8x128xf32>
    %767 = math.absf %766 : vector<8x128xf32>
    %cst_208 = arith.constant 2.41421366 : f32
    %768 = vector.broadcast %cst_208 : f32 to vector<8x128xf32>
    %769 = arith.cmpf ogt, %767, %768 : vector<8x128xf32>
    %cst_209 = arith.constant 0.414213568 : f32
    %770 = vector.broadcast %cst_209 : f32 to vector<8x128xf32>
    %771 = arith.cmpf ogt, %767, %770 : vector<8x128xf32>
    %cst_210 = arith.constant 1.000000e+00 : f32
    %772 = vector.broadcast %cst_210 : f32 to vector<8x128xf32>
    %773 = arith.select %769, %767, %772 : vector<8x128xi1>, vector<8x128xf32>
    %774 = math.absf %773 : vector<8x128xf32>
    %775 = tpu.reciprocal %774 {approx = true} : vector<8x128xf32> -> vector<8x128xf32>
    %776 = arith.mulf %774, %775 : vector<8x128xf32>
    %cst_211 = arith.constant 2.000000e+00 : f32
    %777 = vector.broadcast %cst_211 : f32 to vector<8x128xf32>
    %778 = arith.subf %777, %776 : vector<8x128xf32>
    %779 = arith.mulf %775, %778 : vector<8x128xf32>
    %cst_212 = arith.constant 0.000000e+00 : f32
    %780 = vector.broadcast %cst_212 : f32 to vector<8x128xf32>
    %781 = arith.cmpf olt, %773, %780 : vector<8x128xf32>
    %cst_213 = arith.constant 0.000000e+00 : f32
    %782 = vector.broadcast %cst_213 : f32 to vector<8x128xf32>
    %783 = arith.subf %782, %779 : vector<8x128xf32>
    %784 = arith.select %781, %783, %779 : vector<8x128xi1>, vector<8x128xf32>
    %cst_214 = arith.constant 0.000000e+00 : f32
    %785 = vector.broadcast %cst_214 : f32 to vector<8x128xf32>
    %786 = arith.subf %785, %784 : vector<8x128xf32>
    %cst_215 = arith.constant 1.000000e+00 : f32
    %787 = vector.broadcast %cst_215 : f32 to vector<8x128xf32>
    %788 = arith.subf %767, %787 : vector<8x128xf32>
    %cst_216 = arith.constant 1.000000e+00 : f32
    %789 = vector.broadcast %cst_216 : f32 to vector<8x128xf32>
    %790 = arith.addf %767, %789 : vector<8x128xf32>
    %791 = math.absf %790 : vector<8x128xf32>
    %792 = tpu.reciprocal %791 {approx = true} : vector<8x128xf32> -> vector<8x128xf32>
    %793 = arith.mulf %791, %792 : vector<8x128xf32>
    %cst_217 = arith.constant 2.000000e+00 : f32
    %794 = vector.broadcast %cst_217 : f32 to vector<8x128xf32>
    %795 = arith.subf %794, %793 : vector<8x128xf32>
    %796 = arith.mulf %792, %795 : vector<8x128xf32>
    %cst_218 = arith.constant 0.000000e+00 : f32
    %797 = vector.broadcast %cst_218 : f32 to vector<8x128xf32>
    %798 = arith.cmpf olt, %790, %797 : vector<8x128xf32>
    %cst_219 = arith.constant 0.000000e+00 : f32
    %799 = vector.broadcast %cst_219 : f32 to vector<8x128xf32>
    %800 = arith.subf %799, %796 : vector<8x128xf32>
    %801 = arith.select %798, %800, %796 : vector<8x128xi1>, vector<8x128xf32>
    %802 = arith.mulf %788, %801 : vector<8x128xf32>
    %803 = arith.select %771, %802, %767 : vector<8x128xi1>, vector<8x128xf32>
    %804 = arith.select %769, %786, %803 : vector<8x128xi1>, vector<8x128xf32>
    %cst_220 = arith.constant 0.785398185 : f32
    %cst_221 = arith.constant 0.000000e+00 : f32
    %805 = vector.broadcast %cst_220 : f32 to vector<8x128xf32>
    %806 = vector.broadcast %cst_221 : f32 to vector<8x128xf32>
    %807 = arith.select %771, %805, %806 : vector<8x128xi1>, vector<8x128xf32>
    %cst_222 = arith.constant 1.57079637 : f32
    %808 = vector.broadcast %cst_222 : f32 to vector<8x128xf32>
    %809 = arith.select %769, %808, %807 : vector<8x128xi1>, vector<8x128xf32>
    %810 = arith.mulf %804, %804 : vector<8x128xf32>
    %cst_223 = arith.constant 0.0805374458 : f32
    %811 = vector.broadcast %cst_223 : f32 to vector<8x128xf32>
    %812 = arith.mulf %811, %810 : vector<8x128xf32>
    %cst_224 = arith.constant 0.138776854 : f32
    %813 = vector.broadcast %cst_224 : f32 to vector<8x128xf32>
    %814 = arith.subf %812, %813 : vector<8x128xf32>
    %815 = arith.mulf %814, %810 : vector<8x128xf32>
    %cst_225 = arith.constant 0.199777111 : f32
    %816 = vector.broadcast %cst_225 : f32 to vector<8x128xf32>
    %817 = arith.addf %815, %816 : vector<8x128xf32>
    %818 = arith.mulf %817, %810 : vector<8x128xf32>
    %cst_226 = arith.constant 0.333329499 : f32
    %819 = vector.broadcast %cst_226 : f32 to vector<8x128xf32>
    %820 = arith.subf %818, %819 : vector<8x128xf32>
    %821 = arith.mulf %820, %810 : vector<8x128xf32>
    %822 = arith.mulf %821, %804 : vector<8x128xf32>
    %823 = arith.addf %809, %822 : vector<8x128xf32>
    %824 = arith.addf %823, %804 : vector<8x128xf32>
    %cst_227 = arith.constant 0.000000e+00 : f32
    %825 = vector.broadcast %cst_227 : f32 to vector<8x128xf32>
    %826 = arith.cmpf olt, %766, %825 : vector<8x128xf32>
    %cst_228 = arith.constant 0.000000e+00 : f32
    %827 = vector.broadcast %cst_228 : f32 to vector<8x128xf32>
    %828 = arith.subf %827, %824 : vector<8x128xf32>
    %829 = arith.select %826, %828, %824 : vector<8x128xi1>, vector<8x128xf32>
    %cst_229 = arith.constant 2.000000e+00 : f32
    %830 = vector.broadcast %cst_229 : f32 to vector<8x128xf32>
    %831 = arith.mulf %830, %829 : vector<8x128xf32>
    %832 = arith.mulf %831, %746 : vector<8x128xf32>
    %833 = arith.select %712, %752, %832 : vector<8x128xi1>, vector<8x128xf32>
    %834 = arith.select %709, %733, %833 : vector<8x128xi1>, vector<8x128xf32>
    %835 = arith.mulf %834, %640 : vector<8x128xf32>
    %836 = arith.mulf %834, %647 : vector<8x128xf32>
    %837 = arith.mulf %834, %654 : vector<8x128xf32>
    %838 = math.log %701 : vector<8x128xf32>
    %839 = arith.mulf %835, %835 : vector<8x128xf32>
    %840 = arith.mulf %836, %836 : vector<8x128xf32>
    %841 = arith.addf %839, %840 : vector<8x128xf32>
    %842 = arith.mulf %837, %837 : vector<8x128xf32>
    %843 = arith.addf %841, %842 : vector<8x128xf32>
    %844 = math.sqrt %843 : vector<8x128xf32>
    %845 = math.exp %838 : vector<8x128xf32>
    %846 = arith.mulf %844, %844 : vector<8x128xf32>
    %847 = arith.mulf %838, %838 : vector<8x128xf32>
    %848 = math.absf %838 : vector<8x128xf32>
    %cst_230 = arith.constant 9.99999997E-7 : f32
    %849 = vector.broadcast %cst_230 : f32 to vector<8x128xf32>
    %850 = arith.cmpf olt, %848, %849 : vector<8x128xf32>
    %cst_231 = arith.constant 9.99999997E-7 : f32
    %851 = vector.broadcast %cst_231 : f32 to vector<8x128xf32>
    %852 = arith.cmpf olt, %844, %851 : vector<8x128xf32>
    %853 = math.sin %844 : vector<8x128xf32>
    %854 = math.cos %844 : vector<8x128xf32>
    %cst_232 = arith.constant 1.000000e+00 : f32
    %855 = vector.broadcast %cst_232 : f32 to vector<8x128xf32>
    %856 = arith.select %852, %855, %844 : vector<8x128xi1>, vector<8x128xf32>
    %cst_233 = arith.constant 1.000000e+00 : f32
    %857 = vector.broadcast %cst_233 : f32 to vector<8x128xf32>
    %858 = arith.select %852, %857, %846 : vector<8x128xi1>, vector<8x128xf32>
    %cst_234 = arith.constant 1.000000e+00 : f32
    %859 = vector.broadcast %cst_234 : f32 to vector<8x128xf32>
    %860 = arith.select %850, %859, %838 : vector<8x128xi1>, vector<8x128xf32>
    %cst_235 = arith.constant 1.000000e+00 : f32
    %861 = vector.broadcast %cst_235 : f32 to vector<8x128xf32>
    %862 = arith.select %850, %861, %847 : vector<8x128xi1>, vector<8x128xf32>
    %863 = math.absf %856 : vector<8x128xf32>
    %864 = tpu.reciprocal %863 {approx = true} : vector<8x128xf32> -> vector<8x128xf32>
    %865 = arith.mulf %863, %864 : vector<8x128xf32>
    %cst_236 = arith.constant 2.000000e+00 : f32
    %866 = vector.broadcast %cst_236 : f32 to vector<8x128xf32>
    %867 = arith.subf %866, %865 : vector<8x128xf32>
    %868 = arith.mulf %864, %867 : vector<8x128xf32>
    %cst_237 = arith.constant 0.000000e+00 : f32
    %869 = vector.broadcast %cst_237 : f32 to vector<8x128xf32>
    %870 = arith.cmpf olt, %856, %869 : vector<8x128xf32>
    %cst_238 = arith.constant 0.000000e+00 : f32
    %871 = vector.broadcast %cst_238 : f32 to vector<8x128xf32>
    %872 = arith.subf %871, %868 : vector<8x128xf32>
    %873 = arith.select %870, %872, %868 : vector<8x128xi1>, vector<8x128xf32>
    %874 = math.absf %858 : vector<8x128xf32>
    %875 = tpu.reciprocal %874 {approx = true} : vector<8x128xf32> -> vector<8x128xf32>
    %876 = arith.mulf %874, %875 : vector<8x128xf32>
    %cst_239 = arith.constant 2.000000e+00 : f32
    %877 = vector.broadcast %cst_239 : f32 to vector<8x128xf32>
    %878 = arith.subf %877, %876 : vector<8x128xf32>
    %879 = arith.mulf %875, %878 : vector<8x128xf32>
    %cst_240 = arith.constant 0.000000e+00 : f32
    %880 = vector.broadcast %cst_240 : f32 to vector<8x128xf32>
    %881 = arith.cmpf olt, %858, %880 : vector<8x128xf32>
    %cst_241 = arith.constant 0.000000e+00 : f32
    %882 = vector.broadcast %cst_241 : f32 to vector<8x128xf32>
    %883 = arith.subf %882, %879 : vector<8x128xf32>
    %884 = arith.select %881, %883, %879 : vector<8x128xi1>, vector<8x128xf32>
    %885 = math.absf %860 : vector<8x128xf32>
    %886 = tpu.reciprocal %885 {approx = true} : vector<8x128xf32> -> vector<8x128xf32>
    %887 = arith.mulf %885, %886 : vector<8x128xf32>
    %cst_242 = arith.constant 2.000000e+00 : f32
    %888 = vector.broadcast %cst_242 : f32 to vector<8x128xf32>
    %889 = arith.subf %888, %887 : vector<8x128xf32>
    %890 = arith.mulf %886, %889 : vector<8x128xf32>
    %cst_243 = arith.constant 0.000000e+00 : f32
    %891 = vector.broadcast %cst_243 : f32 to vector<8x128xf32>
    %892 = arith.cmpf olt, %860, %891 : vector<8x128xf32>
    %cst_244 = arith.constant 0.000000e+00 : f32
    %893 = vector.broadcast %cst_244 : f32 to vector<8x128xf32>
    %894 = arith.subf %893, %890 : vector<8x128xf32>
    %895 = arith.select %892, %894, %890 : vector<8x128xi1>, vector<8x128xf32>
    %896 = math.absf %862 : vector<8x128xf32>
    %897 = tpu.reciprocal %896 {approx = true} : vector<8x128xf32> -> vector<8x128xf32>
    %898 = arith.mulf %896, %897 : vector<8x128xf32>
    %cst_245 = arith.constant 2.000000e+00 : f32
    %899 = vector.broadcast %cst_245 : f32 to vector<8x128xf32>
    %900 = arith.subf %899, %898 : vector<8x128xf32>
    %901 = arith.mulf %897, %900 : vector<8x128xf32>
    %cst_246 = arith.constant 0.000000e+00 : f32
    %902 = vector.broadcast %cst_246 : f32 to vector<8x128xf32>
    %903 = arith.cmpf olt, %862, %902 : vector<8x128xf32>
    %cst_247 = arith.constant 0.000000e+00 : f32
    %904 = vector.broadcast %cst_247 : f32 to vector<8x128xf32>
    %905 = arith.subf %904, %901 : vector<8x128xf32>
    %906 = arith.select %903, %905, %901 : vector<8x128xi1>, vector<8x128xf32>
    %cst_248 = arith.constant 1.000000e+00 : f32
    %907 = vector.broadcast %cst_248 : f32 to vector<8x128xf32>
    %908 = arith.subf %845, %907 : vector<8x128xf32>
    %909 = arith.mulf %908, %895 : vector<8x128xf32>
    %cst_249 = arith.constant 1.000000e+00 : f32
    %910 = vector.broadcast %cst_249 : f32 to vector<8x128xf32>
    %911 = arith.select %850, %910, %909 : vector<8x128xi1>, vector<8x128xf32>
    %cst_250 = arith.constant 1.000000e+00 : f32
    %912 = vector.broadcast %cst_250 : f32 to vector<8x128xf32>
    %913 = arith.subf %912, %854 : vector<8x128xf32>
    %914 = arith.mulf %913, %884 : vector<8x128xf32>
    %cst_251 = arith.constant 5.000000e-01 : f32
    %915 = vector.broadcast %cst_251 : f32 to vector<8x128xf32>
    %916 = arith.select %852, %915, %914 : vector<8x128xi1>, vector<8x128xf32>
    %917 = arith.subf %844, %853 : vector<8x128xf32>
    %918 = arith.mulf %884, %873 : vector<8x128xf32>
    %919 = arith.mulf %917, %918 : vector<8x128xf32>
    %cst_252 = arith.constant 0.166666672 : f32
    %920 = vector.broadcast %cst_252 : f32 to vector<8x128xf32>
    %921 = arith.select %852, %920, %919 : vector<8x128xi1>, vector<8x128xf32>
    %cst_253 = arith.constant 1.000000e+00 : f32
    %922 = vector.broadcast %cst_253 : f32 to vector<8x128xf32>
    %923 = arith.subf %838, %922 : vector<8x128xf32>
    %924 = arith.mulf %923, %845 : vector<8x128xf32>
    %cst_254 = arith.constant 1.000000e+00 : f32
    %925 = vector.broadcast %cst_254 : f32 to vector<8x128xf32>
    %926 = arith.addf %924, %925 : vector<8x128xf32>
    %927 = arith.mulf %926, %906 : vector<8x128xf32>
    %cst_255 = arith.constant 5.000000e-01 : f32
    %928 = vector.broadcast %cst_255 : f32 to vector<8x128xf32>
    %929 = arith.mulf %928, %847 : vector<8x128xf32>
    %930 = arith.mulf %929, %845 : vector<8x128xf32>
    %931 = arith.addf %930, %845 : vector<8x128xf32>
    %cst_256 = arith.constant 1.000000e+00 : f32
    %932 = vector.broadcast %cst_256 : f32 to vector<8x128xf32>
    %933 = arith.subf %931, %932 : vector<8x128xf32>
    %934 = arith.mulf %838, %845 : vector<8x128xf32>
    %935 = arith.subf %933, %934 : vector<8x128xf32>
    %936 = arith.mulf %906, %895 : vector<8x128xf32>
    %937 = arith.mulf %935, %936 : vector<8x128xf32>
    %938 = arith.mulf %845, %853 : vector<8x128xf32>
    %939 = arith.mulf %845, %854 : vector<8x128xf32>
    %940 = arith.addf %846, %847 : vector<8x128xf32>
    %cst_257 = arith.constant 1.000000e+00 : f32
    %941 = vector.broadcast %cst_257 : f32 to vector<8x128xf32>
    %942 = arith.select %852, %941, %940 : vector<8x128xi1>, vector<8x128xf32>
    %943 = math.absf %942 : vector<8x128xf32>
    %944 = tpu.reciprocal %943 {approx = true} : vector<8x128xf32> -> vector<8x128xf32>
    %945 = arith.mulf %943, %944 : vector<8x128xf32>
    %cst_258 = arith.constant 2.000000e+00 : f32
    %946 = vector.broadcast %cst_258 : f32 to vector<8x128xf32>
    %947 = arith.subf %946, %945 : vector<8x128xf32>
    %948 = arith.mulf %944, %947 : vector<8x128xf32>
    %cst_259 = arith.constant 0.000000e+00 : f32
    %949 = vector.broadcast %cst_259 : f32 to vector<8x128xf32>
    %950 = arith.cmpf olt, %942, %949 : vector<8x128xf32>
    %cst_260 = arith.constant 0.000000e+00 : f32
    %951 = vector.broadcast %cst_260 : f32 to vector<8x128xf32>
    %952 = arith.subf %951, %948 : vector<8x128xf32>
    %953 = arith.select %950, %952, %948 : vector<8x128xi1>, vector<8x128xf32>
    %954 = arith.mulf %938, %838 : vector<8x128xf32>
    %cst_261 = arith.constant 1.000000e+00 : f32
    %955 = vector.broadcast %cst_261 : f32 to vector<8x128xf32>
    %956 = arith.subf %955, %939 : vector<8x128xf32>
    %957 = arith.mulf %956, %844 : vector<8x128xf32>
    %958 = arith.addf %954, %957 : vector<8x128xf32>
    %959 = arith.mulf %873, %953 : vector<8x128xf32>
    %960 = arith.mulf %958, %959 : vector<8x128xf32>
    %cst_262 = arith.constant 1.000000e+00 : f32
    %961 = vector.broadcast %cst_262 : f32 to vector<8x128xf32>
    %962 = arith.subf %939, %961 : vector<8x128xf32>
    %963 = arith.mulf %962, %838 : vector<8x128xf32>
    %964 = arith.mulf %938, %844 : vector<8x128xf32>
    %965 = arith.addf %963, %964 : vector<8x128xf32>
    %966 = arith.mulf %965, %953 : vector<8x128xf32>
    %967 = arith.subf %911, %966 : vector<8x128xf32>
    %968 = arith.mulf %967, %884 : vector<8x128xf32>
    %969 = arith.select %852, %927, %960 : vector<8x128xi1>, vector<8x128xf32>
    %970 = arith.select %850, %916, %969 : vector<8x128xi1>, vector<8x128xf32>
    %971 = arith.select %852, %937, %968 : vector<8x128xi1>, vector<8x128xf32>
    %972 = arith.select %850, %921, %971 : vector<8x128xi1>, vector<8x128xf32>
    %973 = arith.mulf %843, %972 : vector<8x128xf32>
    %974 = arith.subf %911, %973 : vector<8x128xf32>
    %975 = arith.mulf %974, %974 : vector<8x128xf32>
    %976 = arith.mulf %843, %970 : vector<8x128xf32>
    %977 = arith.mulf %976, %970 : vector<8x128xf32>
    %978 = arith.addf %975, %977 : vector<8x128xf32>
    %979 = math.absf %911 : vector<8x128xf32>
    %980 = tpu.reciprocal %979 {approx = true} : vector<8x128xf32> -> vector<8x128xf32>
    %981 = arith.mulf %979, %980 : vector<8x128xf32>
    %cst_263 = arith.constant 2.000000e+00 : f32
    %982 = vector.broadcast %cst_263 : f32 to vector<8x128xf32>
    %983 = arith.subf %982, %981 : vector<8x128xf32>
    %984 = arith.mulf %980, %983 : vector<8x128xf32>
    %cst_264 = arith.constant 0.000000e+00 : f32
    %985 = vector.broadcast %cst_264 : f32 to vector<8x128xf32>
    %986 = arith.cmpf olt, %911, %985 : vector<8x128xf32>
    %cst_265 = arith.constant 0.000000e+00 : f32
    %987 = vector.broadcast %cst_265 : f32 to vector<8x128xf32>
    %988 = arith.subf %987, %984 : vector<8x128xf32>
    %989 = arith.select %986, %988, %984 : vector<8x128xi1>, vector<8x128xf32>
    %990 = math.absf %978 : vector<8x128xf32>
    %991 = tpu.reciprocal %990 {approx = true} : vector<8x128xf32> -> vector<8x128xf32>
    %992 = arith.mulf %990, %991 : vector<8x128xf32>
    %cst_266 = arith.constant 2.000000e+00 : f32
    %993 = vector.broadcast %cst_266 : f32 to vector<8x128xf32>
    %994 = arith.subf %993, %992 : vector<8x128xf32>
    %995 = arith.mulf %991, %994 : vector<8x128xf32>
    %cst_267 = arith.constant 0.000000e+00 : f32
    %996 = vector.broadcast %cst_267 : f32 to vector<8x128xf32>
    %997 = arith.cmpf olt, %978, %996 : vector<8x128xf32>
    %cst_268 = arith.constant 0.000000e+00 : f32
    %998 = vector.broadcast %cst_268 : f32 to vector<8x128xf32>
    %999 = arith.subf %998, %995 : vector<8x128xf32>
    %1000 = arith.select %997, %999, %995 : vector<8x128xi1>, vector<8x128xf32>
    %cst_269 = arith.constant 0.000000e+00 : f32
    %1001 = vector.broadcast %cst_269 : f32 to vector<8x128xf32>
    %1002 = arith.subf %1001, %970 : vector<8x128xf32>
    %1003 = arith.mulf %1002, %1000 : vector<8x128xf32>
    %1004 = arith.mulf %970, %970 : vector<8x128xf32>
    %1005 = arith.mulf %972, %911 : vector<8x128xf32>
    %1006 = arith.subf %1004, %1005 : vector<8x128xf32>
    %1007 = arith.mulf %843, %972 : vector<8x128xf32>
    %1008 = arith.mulf %1007, %972 : vector<8x128xf32>
    %1009 = arith.addf %1006, %1008 : vector<8x128xf32>
    %1010 = arith.mulf %989, %1000 : vector<8x128xf32>
    %1011 = arith.mulf %1009, %1010 : vector<8x128xf32>
    %1012 = arith.mulf %836, %700 : vector<8x128xf32>
    %1013 = arith.mulf %837, %698 : vector<8x128xf32>
    %1014 = arith.subf %1012, %1013 : vector<8x128xf32>
    %1015 = arith.mulf %837, %696 : vector<8x128xf32>
    %1016 = arith.mulf %835, %700 : vector<8x128xf32>
    %1017 = arith.subf %1015, %1016 : vector<8x128xf32>
    %1018 = arith.mulf %835, %698 : vector<8x128xf32>
    %1019 = arith.mulf %836, %696 : vector<8x128xf32>
    %1020 = arith.subf %1018, %1019 : vector<8x128xf32>
    %1021 = arith.mulf %836, %1020 : vector<8x128xf32>
    %1022 = arith.mulf %837, %1017 : vector<8x128xf32>
    %1023 = arith.subf %1021, %1022 : vector<8x128xf32>
    %1024 = arith.mulf %837, %1014 : vector<8x128xf32>
    %1025 = arith.mulf %835, %1020 : vector<8x128xf32>
    %1026 = arith.subf %1024, %1025 : vector<8x128xf32>
    %1027 = arith.mulf %835, %1017 : vector<8x128xf32>
    %1028 = arith.mulf %836, %1014 : vector<8x128xf32>
    %1029 = arith.subf %1027, %1028 : vector<8x128xf32>
    %1030 = arith.mulf %989, %696 : vector<8x128xf32>
    %1031 = arith.mulf %1003, %1014 : vector<8x128xf32>
    %1032 = arith.addf %1030, %1031 : vector<8x128xf32>
    %1033 = arith.mulf %1011, %1023 : vector<8x128xf32>
    %1034 = arith.addf %1032, %1033 : vector<8x128xf32>
    %1035 = arith.mulf %989, %698 : vector<8x128xf32>
    %1036 = arith.mulf %1003, %1017 : vector<8x128xf32>
    %1037 = arith.addf %1035, %1036 : vector<8x128xf32>
    %1038 = arith.mulf %1011, %1026 : vector<8x128xf32>
    %1039 = arith.addf %1037, %1038 : vector<8x128xf32>
    %1040 = arith.mulf %989, %700 : vector<8x128xf32>
    %1041 = arith.mulf %1003, %1020 : vector<8x128xf32>
    %1042 = arith.addf %1040, %1041 : vector<8x128xf32>
    %1043 = arith.mulf %1011, %1029 : vector<8x128xf32>
    %1044 = arith.addf %1042, %1043 : vector<8x128xf32>
    %c0_270 = arith.constant 0 : index
    %1045 = arith.index_cast %c0_i32 : i32 to index
    %c0_271 = arith.constant 0 : index
    %c0_272 = arith.constant 0 : index
    %1046 = vector.load %arg5[%c0_270, %1045, %c0_271, %c0_272] : memref<7x1x8x128xf32, #tpu.memory_space<vmem>>, vector<1x1x8x128xf32>
    %1047 = vector.shape_cast %1046 : vector<1x1x8x128xf32> to vector<8x128xf32>
    %1048 = arith.mulf %599, %1047 : vector<8x128xf32>
    %c0_273 = arith.constant 0 : index
    %1049 = arith.index_cast %c0_i32 : i32 to index
    %c0_274 = arith.constant 0 : index
    %c0_275 = arith.constant 0 : index
    %1050 = vector.load %arg6[%c0_273, %1049, %c0_274, %c0_275] : memref<7x1x8x128xf32, #tpu.memory_space<vmem>>, vector<1x1x8x128xf32>
    %1051 = vector.shape_cast %1050 : vector<1x1x8x128xf32> to vector<8x128xf32>
    %1052 = arith.mulf %1034, %1051 : vector<8x128xf32>
    %1053 = arith.addf %1048, %1052 : vector<8x128xf32>
    %c0_276 = arith.constant 0 : index
    %1054 = arith.index_cast %c0_i32 : i32 to index
    %c0_277 = arith.constant 0 : index
    %c0_278 = arith.constant 0 : index
    %1055 = vector.load %arg7[%c0_276, %1054, %c0_277, %c0_278] : memref<7x1x8x128xf32, #tpu.memory_space<vmem>>, vector<1x1x8x128xf32>
    %1056 = vector.shape_cast %1055 : vector<1x1x8x128xf32> to vector<8x128xf32>
    %1057 = vector.shape_cast %1053 : vector<8x128xf32> to vector<1x1x8x128xf32>
    tpu.vector_store %arg7[%c0_276, %1054, %c0_277, %c0_278], %1057 {strides = array<i32>} : memref<7x1x8x128xf32, #tpu.memory_space<vmem>>, vector<1x1x8x128xf32>,
    %c1_279 = arith.constant 1 : index
    %1058 = arith.index_cast %c0_i32 : i32 to index
    %c0_280 = arith.constant 0 : index
    %c0_281 = arith.constant 0 : index
    %1059 = vector.load %arg5[%c1_279, %1058, %c0_280, %c0_281] : memref<7x1x8x128xf32, #tpu.memory_space<vmem>>, vector<1x1x8x128xf32>
    %1060 = vector.shape_cast %1059 : vector<1x1x8x128xf32> to vector<8x128xf32>
    %1061 = arith.mulf %604, %1060 : vector<8x128xf32>
    %c1_282 = arith.constant 1 : index
    %1062 = arith.index_cast %c0_i32 : i32 to index
    %c0_283 = arith.constant 0 : index
    %c0_284 = arith.constant 0 : index
    %1063 = vector.load %arg6[%c1_282, %1062, %c0_283, %c0_284] : memref<7x1x8x128xf32, #tpu.memory_space<vmem>>, vector<1x1x8x128xf32>
    %1064 = vector.shape_cast %1063 : vector<1x1x8x128xf32> to vector<8x128xf32>
    %1065 = arith.mulf %1039, %1064 : vector<8x128xf32>
    %1066 = arith.addf %1061, %1065 : vector<8x128xf32>
    %c1_285 = arith.constant 1 : index
    %1067 = arith.index_cast %c0_i32 : i32 to index
    %c0_286 = arith.constant 0 : index
    %c0_287 = arith.constant 0 : index
    %1068 = vector.load %arg7[%c1_285, %1067, %c0_286, %c0_287] : memref<7x1x8x128xf32, #tpu.memory_space<vmem>>, vector<1x1x8x128xf32>
    %1069 = vector.shape_cast %1068 : vector<1x1x8x128xf32> to vector<8x128xf32>
    %1070 = vector.shape_cast %1066 : vector<8x128xf32> to vector<1x1x8x128xf32>
    tpu.vector_store %arg7[%c1_285, %1067, %c0_286, %c0_287], %1070 {strides = array<i32>} : memref<7x1x8x128xf32, #tpu.memory_space<vmem>>, vector<1x1x8x128xf32>,
    %c2_288 = arith.constant 2 : index
    %1071 = arith.index_cast %c0_i32 : i32 to index
    %c0_289 = arith.constant 0 : index
    %c0_290 = arith.constant 0 : index
    %1072 = vector.load %arg5[%c2_288, %1071, %c0_289, %c0_290] : memref<7x1x8x128xf32, #tpu.memory_space<vmem>>, vector<1x1x8x128xf32>
    %1073 = vector.shape_cast %1072 : vector<1x1x8x128xf32> to vector<8x128xf32>
    %1074 = arith.mulf %609, %1073 : vector<8x128xf32>
    %c2_291 = arith.constant 2 : index
    %1075 = arith.index_cast %c0_i32 : i32 to index
    %c0_292 = arith.constant 0 : index
    %c0_293 = arith.constant 0 : index
    %1076 = vector.load %arg6[%c2_291, %1075, %c0_292, %c0_293] : memref<7x1x8x128xf32, #tpu.memory_space<vmem>>, vector<1x1x8x128xf32>
    %1077 = vector.shape_cast %1076 : vector<1x1x8x128xf32> to vector<8x128xf32>
    %1078 = arith.mulf %1044, %1077 : vector<8x128xf32>
    %1079 = arith.addf %1074, %1078 : vector<8x128xf32>
    %c2_294 = arith.constant 2 : index
    %1080 = arith.index_cast %c0_i32 : i32 to index
    %c0_295 = arith.constant 0 : index
    %c0_296 = arith.constant 0 : index
    %1081 = vector.load %arg7[%c2_294, %1080, %c0_295, %c0_296] : memref<7x1x8x128xf32, #tpu.memory_space<vmem>>, vector<1x1x8x128xf32>
    %1082 = vector.shape_cast %1081 : vector<1x1x8x128xf32> to vector<8x128xf32>
    %1083 = vector.shape_cast %1079 : vector<8x128xf32> to vector<1x1x8x128xf32>
    tpu.vector_store %arg7[%c2_294, %1080, %c0_295, %c0_296], %1083 {strides = array<i32>} : memref<7x1x8x128xf32, #tpu.memory_space<vmem>>, vector<1x1x8x128xf32>,
    %c3_297 = arith.constant 3 : index
    %1084 = arith.index_cast %c0_i32 : i32 to index
    %c0_298 = arith.constant 0 : index
    %c0_299 = arith.constant 0 : index
    %1085 = vector.load %arg5[%c3_297, %1084, %c0_298, %c0_299] : memref<7x1x8x128xf32, #tpu.memory_space<vmem>>, vector<1x1x8x128xf32>
    %1086 = vector.shape_cast %1085 : vector<1x1x8x128xf32> to vector<8x128xf32>
    %1087 = arith.mulf %400, %1086 : vector<8x128xf32>
    %c3_300 = arith.constant 3 : index
    %1088 = arith.index_cast %c0_i32 : i32 to index
    %c0_301 = arith.constant 0 : index
    %c0_302 = arith.constant 0 : index
    %1089 = vector.load %arg6[%c3_300, %1088, %c0_301, %c0_302] : memref<7x1x8x128xf32, #tpu.memory_space<vmem>>, vector<1x1x8x128xf32>
    %1090 = vector.shape_cast %1089 : vector<1x1x8x128xf32> to vector<8x128xf32>
    %1091 = arith.mulf %835, %1090 : vector<8x128xf32>
    %1092 = arith.addf %1087, %1091 : vector<8x128xf32>
    %c3_303 = arith.constant 3 : index
    %1093 = arith.index_cast %c0_i32 : i32 to index
    %c0_304 = arith.constant 0 : index
    %c0_305 = arith.constant 0 : index
    %1094 = vector.load %arg7[%c3_303, %1093, %c0_304, %c0_305] : memref<7x1x8x128xf32, #tpu.memory_space<vmem>>, vector<1x1x8x128xf32>
    %1095 = vector.shape_cast %1094 : vector<1x1x8x128xf32> to vector<8x128xf32>
    %1096 = vector.shape_cast %1092 : vector<8x128xf32> to vector<1x1x8x128xf32>
    tpu.vector_store %arg7[%c3_303, %1093, %c0_304, %c0_305], %1096 {strides = array<i32>} : memref<7x1x8x128xf32, #tpu.memory_space<vmem>>, vector<1x1x8x128xf32>,
    %c4_306 = arith.constant 4 : index
    %1097 = arith.index_cast %c0_i32 : i32 to index
    %c0_307 = arith.constant 0 : index
    %c0_308 = arith.constant 0 : index
    %1098 = vector.load %arg5[%c4_306, %1097, %c0_307, %c0_308] : memref<7x1x8x128xf32, #tpu.memory_space<vmem>>, vector<1x1x8x128xf32>
    %1099 = vector.shape_cast %1098 : vector<1x1x8x128xf32> to vector<8x128xf32>
    %1100 = arith.mulf %401, %1099 : vector<8x128xf32>
    %c4_309 = arith.constant 4 : index
    %1101 = arith.index_cast %c0_i32 : i32 to index
    %c0_310 = arith.constant 0 : index
    %c0_311 = arith.constant 0 : index
    %1102 = vector.load %arg6[%c4_309, %1101, %c0_310, %c0_311] : memref<7x1x8x128xf32, #tpu.memory_space<vmem>>, vector<1x1x8x128xf32>
    %1103 = vector.shape_cast %1102 : vector<1x1x8x128xf32> to vector<8x128xf32>
    %1104 = arith.mulf %836, %1103 : vector<8x128xf32>
    %1105 = arith.addf %1100, %1104 : vector<8x128xf32>
    %c4_312 = arith.constant 4 : index
    %1106 = arith.index_cast %c0_i32 : i32 to index
    %c0_313 = arith.constant 0 : index
    %c0_314 = arith.constant 0 : index
    %1107 = vector.load %arg7[%c4_312, %1106, %c0_313, %c0_314] : memref<7x1x8x128xf32, #tpu.memory_space<vmem>>, vector<1x1x8x128xf32>
    %1108 = vector.shape_cast %1107 : vector<1x1x8x128xf32> to vector<8x128xf32>
    %1109 = vector.shape_cast %1105 : vector<8x128xf32> to vector<1x1x8x128xf32>
    tpu.vector_store %arg7[%c4_312, %1106, %c0_313, %c0_314], %1109 {strides = array<i32>} : memref<7x1x8x128xf32, #tpu.memory_space<vmem>>, vector<1x1x8x128xf32>,
    %c5_315 = arith.constant 5 : index
    %1110 = arith.index_cast %c0_i32 : i32 to index
    %c0_316 = arith.constant 0 : index
    %c0_317 = arith.constant 0 : index
    %1111 = vector.load %arg5[%c5_315, %1110, %c0_316, %c0_317] : memref<7x1x8x128xf32, #tpu.memory_space<vmem>>, vector<1x1x8x128xf32>
    %1112 = vector.shape_cast %1111 : vector<1x1x8x128xf32> to vector<8x128xf32>
    %1113 = arith.mulf %402, %1112 : vector<8x128xf32>
    %c5_318 = arith.constant 5 : index
    %1114 = arith.index_cast %c0_i32 : i32 to index
    %c0_319 = arith.constant 0 : index
    %c0_320 = arith.constant 0 : index
    %1115 = vector.load %arg6[%c5_318, %1114, %c0_319, %c0_320] : memref<7x1x8x128xf32, #tpu.memory_space<vmem>>, vector<1x1x8x128xf32>
    %1116 = vector.shape_cast %1115 : vector<1x1x8x128xf32> to vector<8x128xf32>
    %1117 = arith.mulf %837, %1116 : vector<8x128xf32>
    %1118 = arith.addf %1113, %1117 : vector<8x128xf32>
    %c5_321 = arith.constant 5 : index
    %1119 = arith.index_cast %c0_i32 : i32 to index
    %c0_322 = arith.constant 0 : index
    %c0_323 = arith.constant 0 : index
    %1120 = vector.load %arg7[%c5_321, %1119, %c0_322, %c0_323] : memref<7x1x8x128xf32, #tpu.memory_space<vmem>>, vector<1x1x8x128xf32>
    %1121 = vector.shape_cast %1120 : vector<1x1x8x128xf32> to vector<8x128xf32>
    %1122 = vector.shape_cast %1118 : vector<8x128xf32> to vector<1x1x8x128xf32>
    tpu.vector_store %arg7[%c5_321, %1119, %c0_322, %c0_323], %1122 {strides = array<i32>} : memref<7x1x8x128xf32, #tpu.memory_space<vmem>>, vector<1x1x8x128xf32>,
    %c6_324 = arith.constant 6 : index
    %1123 = arith.index_cast %c0_i32 : i32 to index
    %c0_325 = arith.constant 0 : index
    %c0_326 = arith.constant 0 : index
    %1124 = vector.load %arg5[%c6_324, %1123, %c0_325, %c0_326] : memref<7x1x8x128xf32, #tpu.memory_space<vmem>>, vector<1x1x8x128xf32>
    %1125 = vector.shape_cast %1124 : vector<1x1x8x128xf32> to vector<8x128xf32>
    %1126 = arith.mulf %403, %1125 : vector<8x128xf32>
    %c6_327 = arith.constant 6 : index
    %1127 = arith.index_cast %c0_i32 : i32 to index
    %c0_328 = arith.constant 0 : index
    %c0_329 = arith.constant 0 : index
    %1128 = vector.load %arg6[%c6_327, %1127, %c0_328, %c0_329] : memref<7x1x8x128xf32, #tpu.memory_space<vmem>>, vector<1x1x8x128xf32>
    %1129 = vector.shape_cast %1128 : vector<1x1x8x128xf32> to vector<8x128xf32>
    %1130 = arith.mulf %838, %1129 : vector<8x128xf32>
    %1131 = arith.addf %1126, %1130 : vector<8x128xf32>
    %c6_330 = arith.constant 6 : index
    %1132 = arith.index_cast %c0_i32 : i32 to index
    %c0_331 = arith.constant 0 : index
    %c0_332 = arith.constant 0 : index
    %1133 = vector.load %arg7[%c6_330, %1132, %c0_331, %c0_332] : memref<7x1x8x128xf32, #tpu.memory_space<vmem>>, vector<1x1x8x128xf32>
    %1134 = vector.shape_cast %1133 : vector<1x1x8x128xf32> to vector<8x128xf32>
    %1135 = vector.shape_cast %1131 : vector<8x128xf32> to vector<1x1x8x128xf32>
    tpu.vector_store %arg7[%c6_330, %1132, %c0_331, %c0_332], %1135 {strides = array<i32>} : memref<7x1x8x128xf32, #tpu.memory_space<vmem>>, vector<1x1x8x128xf32>,
    %c1_i32 = arith.constant 1 : i32
    return
  }
  func.func @transform_0(%arg0: i32) -> (i32, i32, i32, i32) {
    %c0_i32 = arith.constant 0 : i32
    %c0_i32_0 = arith.constant 0 : i32
    %c0_i32_1 = arith.constant 0 : i32
    %c0_i32_2 = arith.constant 0 : i32
    return %c0_i32, %arg0, %c0_i32_0, %c0_i32_1 : i32, i32, i32, i32
  }
  func.func @transform_1(%arg0: i32) -> (i32, i32, i32, i32) {
    %c0_i32 = arith.constant 0 : i32
    %c0_i32_0 = arith.constant 0 : i32
    %c0_i32_1 = arith.constant 0 : i32
    %c0_i32_2 = arith.constant 0 : i32
    return %c0_i32, %arg0, %c0_i32_0, %c0_i32_1 : i32, i32, i32, i32
  }
  func.func @transform_2(%arg0: i32) -> (i32, i32, i32, i32) {
    %c0_i32 = arith.constant 0 : i32
    %c0_i32_0 = arith.constant 0 : i32
    %c0_i32_1 = arith.constant 0 : i32
    %c0_i32_2 = arith.constant 0 : i32
    return %c0_i32, %arg0, %c0_i32_0, %c0_i32_1 : i32, i32, i32, i32
  }
  func.func @transform_3(%arg0: i32) -> (i32, i32, i32, i32) {
    %c0_i32 = arith.constant 0 : i32
    %c0_i32_0 = arith.constant 0 : i32
    %c0_i32_1 = arith.constant 0 : i32
    %c0_i32_2 = arith.constant 0 : i32
    return %c0_i32, %arg0, %c0_i32_0, %c0_i32_1 : i32, i32, i32, i32
  }
  func.func @transform_4(%arg0: i32) -> (i32, i32, i32, i32) {
    %c0_i32 = arith.constant 0 : i32
    %c0_i32_0 = arith.constant 0 : i32
    %c0_i32_1 = arith.constant 0 : i32
    %c0_i32_2 = arith.constant 0 : i32
    return %c0_i32, %arg0, %c0_i32_0, %c0_i32_1 : i32, i32, i32, i32
  }
  func.func @transform_5(%arg0: i32) -> (i32, i32, i32, i32) {
    %c0_i32 = arith.constant 0 : i32
    %c0_i32_0 = arith.constant 0 : i32
    %c0_i32_1 = arith.constant 0 : i32
    %c0_i32_2 = arith.constant 0 : i32
    return %c0_i32, %arg0, %c0_i32_0, %c0_i32_1 : i32, i32, i32, i32
  }
  func.func @transform_6(%arg0: i32) -> (i32, i32, i32, i32) {
    %c0_i32 = arith.constant 0 : i32
    %c0_i32_0 = arith.constant 0 : i32
    %c0_i32_1 = arith.constant 0 : i32
    %c0_i32_2 = arith.constant 0 : i32
    return %c0_i32, %arg0, %c0_i32_0, %c0_i32_1 : i32, i32, i32, i32
  }
}

</mosaic_0001>

<llo_original>
// kernel: odom_residual_forward.1
$region0: #{odom_residual_forward.1}
  #allocation0 [shape = 'u32[]', space=smem, size = 0x4, offset = 0x4, fixed_abs, tag = 'smem constant byte address 0x4 - core index']
  #allocation1 [shape = 'u32[72,128]{1,0:T(1,128)}', space=vmem, size = 0x9000, scoped, tag = 'internal scratch']
  %s0 = inlined_call_operand.vmem [shape: f32[8,1,8,128], index: 0, kind: input, shape index: {}]
  %s1 = inlined_call_operand.vmem [shape: f32[8,1,8,128], index: 1, kind: input, shape index: {}]
  %s2 = inlined_call_operand.vmem [shape: f32[8,1,8,128], index: 2, kind: input, shape index: {}]
  %s3 = inlined_call_operand.vmem [shape: f32[8,1,8,128], index: 3, kind: input, shape index: {}]
  %s4 = inlined_call_operand.vmem [shape: f32[7,1,8,128], index: 4, kind: input, shape index: {}]
  %s5 = inlined_call_operand.vmem [shape: f32[7,1,8,128], index: 5, kind: input, shape index: {}]
  %s6 = inlined_call_operand.vmem [shape: f32[7,1,8,128], index: 6, kind: output, shape index: {}]
  %s7 = sld [smem:[#allocation0]]
  $region34: #{odom_residual_forward.1} parent=0
    _
  %s9 = ssub.s32 1, %s7
  %s10 = scalar_select 0, %s9, %s7
  // Predicated region
  $region2: #{odom_residual_forward.1} parent=0 // pred_check
    _
  $region3: #{odom_residual_forward.1} parent=0 // pred_check_branch
    %12 = sbr.rel (0) target = $region5
  $region4: #{odom_residual_forward.1} parent=0 // pred_region
    _
  $region5: #{odom_residual_forward.1} parent=0 // pred_fallthru
    _
  // Predicated region
  $region6: #{odom_residual_forward.1} parent=0 // pred_check
    _
  $region7: #{odom_residual_forward.1} parent=0 // pred_check_branch
    %14 = sbr.rel (0) target = $region9
  $region8: #{odom_residual_forward.1} parent=0 // pred_region
    _
  $region9: #{odom_residual_forward.1} parent=0 // pred_fallthru
    _
  // Predicated region
  $region10: #{odom_residual_forward.1} parent=0 // pred_check
    _
  $region11: #{odom_residual_forward.1} parent=0 // pred_check_branch
    %16 = sbr.rel (0) target = $region13
  $region12: #{odom_residual_forward.1} parent=0 // pred_region
    _
  $region13: #{odom_residual_forward.1} parent=0 // pred_fallthru
    _
  // Predicated region
  $region14: #{odom_residual_forward.1} parent=0 // pred_check
    _
  $region15: #{odom_residual_forward.1} parent=0 // pred_check_branch
    %18 = sbr.rel (0) target = $region17
  $region16: #{odom_residual_forward.1} parent=0 // pred_region
    _
  $region17: #{odom_residual_forward.1} parent=0 // pred_fallthru
    _
  // Predicated region
  $region18: #{odom_residual_forward.1} parent=0 // pred_check
    _
  $region19: #{odom_residual_forward.1} parent=0 // pred_check_branch
    %20 = sbr.rel (0) target = $region21
  $region20: #{odom_residual_forward.1} parent=0 // pred_region
    _
  $region21: #{odom_residual_forward.1} parent=0 // pred_fallthru
    _
  // Predicated region
  $region22: #{odom_residual_forward.1} parent=0 // pred_check
    _
  $region23: #{odom_residual_forward.1} parent=0 // pred_check_branch
    %22 = sbr.rel (0) target = $region25
  $region24: #{odom_residual_forward.1} parent=0 // pred_region
    _
  $region25: #{odom_residual_forward.1} parent=0 // pred_fallthru
    _
  %v23 = vld [vmem:[%s0] sm:$0xff]
  %s24 = scalar_lea.vmem %s0, 8
  %v25 = vld [vmem:[%s24] sm:$0xff]
  %s26 = scalar_lea.vmem %s0, 16
  %v27 = vld [vmem:[%s26] sm:$0xff]
  %s28 = scalar_lea.vmem %s0, 24
  %v29 = vld [vmem:[%s28] sm:$0xff]
  %s30 = scalar_lea.vmem %s0, 32
  %v31 = vld [vmem:[%s30] sm:$0xff]
  %s32 = scalar_lea.vmem %s0, 40
  %v33 = vld [vmem:[%s32] sm:$0xff]
  %s34 = scalar_lea.vmem %s0, 48
  %v35 = vld [vmem:[%s34] sm:$0xff]
  %s36 = scalar_lea.vmem %s0, 56
  %v37 = vld [vmem:[%s36] sm:$0xff]
  %v38 = vsub.f32 0.0, %v29
  %v39 = vsub.f32 0.0, %v31
  %v40 = vsub.f32 0.0, %v33
  %v41 = vand.u32 2147483647, %v37
  %v42 = vrcp.pop %v41
  %v43 = vmul.f32 %v41, %v42
  %v44 = vsub.f32 2.0, %v43
  %v45 = vmul.f32 %v42, %v44
  %vm46 = vcmp.lt.f32.partialorder %v37, 0.0
  %v47 = vsub.f32 0.0, %v45
  %v48 = vsel %vm46, %v47, %v45
  %v49 = vmul.f32 %v39, %v27
  %v50 = vmul.f32 %v40, %v25
  %v51 = vsub.f32 %v49, %v50
  %v52 = vmul.f32 %v40, %v23
  %v53 = vmul.f32 %v38, %v27
  %v54 = vsub.f32 %v52, %v53
  %v55 = vmul.f32 %v38, %v25
  %v56 = vmul.f32 %v39, %v23
  %v57 = vsub.f32 %v55, %v56
  %v58 = vmul.f32 %v39, %v57
  %v59 = vmul.f32 %v40, %v54
  %v60 = vsub.f32 %v58, %v59
  %v61 = vmul.f32 %v40, %v51
  %v62 = vmul.f32 %v38, %v57
  %v63 = vsub.f32 %v61, %v62
  %v64 = vmul.f32 %v38, %v54
  %v65 = vmul.f32 %v39, %v51
  %v66 = vsub.f32 %v64, %v65
  %v67 = vmul.f32 %v35, %v51
  %v68 = vadd.f32 %v67, %v60
  %v69 = vmul.f32 %v68, 2.0
  %v70 = vadd.f32 %v23, %v69
  %v71 = vmul.f32 %v35, %v54
  %v72 = vadd.f32 %v71, %v63
  %v73 = vmul.f32 %v72, 2.0
  %v74 = vadd.f32 %v25, %v73
  %v75 = vmul.f32 %v35, %v57
  %v76 = vadd.f32 %v75, %v66
  %v77 = vmul.f32 %v76, 2.0
  %v78 = vadd.f32 %v27, %v77
  %v79 = vsub.f32 0.0, %v48
  %v80 = vmul.f32 %v79, %v70
  %v81 = vmul.f32 %v79, %v74
  %v82 = vmul.f32 %v79, %v78
  %v83 = vld [vmem:[%s1] sm:$0xff]
  %s84 = scalar_lea.vmem %s1, 8
  %v85 = vld [vmem:[%s84] sm:$0xff]
  %s86 = scalar_lea.vmem %s1, 16
  %v87 = vld [vmem:[%s86] sm:$0xff]
  %s88 = scalar_lea.vmem %s1, 24
  %v89 = vld [vmem:[%s88] sm:$0xff]
  %s90 = scalar_lea.vmem %s1, 32
  %v91 = vld [vmem:[%s90] sm:$0xff]
  %s92 = scalar_lea.vmem %s1, 40
  %v93 = vld [vmem:[%s92] sm:$0xff]
  %s94 = scalar_lea.vmem %s1, 48
  %v95 = vld [vmem:[%s94] sm:$0xff]
  %s96 = scalar_lea.vmem %s1, 56
  %v97 = vld [vmem:[%s96] sm:$0xff]
  %v98 = vmul.f32 %v35, %v89
  %v99 = vmul.f32 %v38, %v95
  %v100 = vadd.f32 %v98, %v99
  %v101 = vmul.f32 %v39, %v93
  %v102 = vadd.f32 %v100, %v101
  %v103 = vmul.f32 %v40, %v91
  %v104 = vsub.f32 %v102, %v103
  %v105 = vmul.f32 %v35, %v91
  %v106 = vmul.f32 %v38, %v93
  %v107 = vsub.f32 %v105, %v106
  %v108 = vmul.f32 %v39, %v95
  %v109 = vadd.f32 %v107, %v108
  %v110 = vmul.f32 %v40, %v89
  %v111 = vadd.f32 %v109, %v110
  %v112 = vmul.f32 %v35, %v93
  %v113 = vmul.f32 %v38, %v91
  %v114 = vadd.f32 %v112, %v113
  %v115 = vmul.f32 %v39, %v89
  %v116 = vsub.f32 %v114, %v115
  %v117 = vmul.f32 %v40, %v95
  %v118 = vadd.f32 %v116, %v117
  %v119 = vmul.f32 %v35, %v95
  %v120 = vmul.f32 %v38, %v89
  %v121 = vsub.f32 %v119, %v120
  %v122 = vmul.f32 %v39, %v91
  %v123 = vsub.f32 %v121, %v122
  %v124 = vmul.f32 %v40, %v93
  %v125 = vsub.f32 %v123, %v124
  %v126 = vmul.f32 %v39, %v87
  %v127 = vmul.f32 %v40, %v85
  %v128 = vsub.f32 %v126, %v127
  %v129 = vmul.f32 %v40, %v83
  %v130 = vmul.f32 %v38, %v87
  %v131 = vsub.f32 %v129, %v130
  %v132 = vmul.f32 %v38, %v85
  %v133 = vmul.f32 %v39, %v83
  %v134 = vsub.f32 %v132, %v133
  %v135 = vmul.f32 %v39, %v134
  %v136 = vmul.f32 %v40, %v131
  %v137 = vsub.f32 %v135, %v136
  %v138 = vmul.f32 %v40, %v128
  %v139 = vmul.f32 %v38, %v134
  %v140 = vsub.f32 %v138, %v139
  %v141 = vmul.f32 %v38, %v131
  %v142 = vmul.f32 %v39, %v128
  %v143 = vsub.f32 %v141, %v142
  %v144 = vmul.f32 %v35, %v128
  %v145 = vadd.f32 %v144, %v137
  %v146 = vmul.f32 %v145, 2.0
  %v147 = vadd.f32 %v83, %v146
  %v148 = vmul.f32 %v35, %v131
  %v149 = vadd.f32 %v148, %v140
  %v150 = vmul.f32 %v149, 2.0
  %v151 = vadd.f32 %v85, %v150
  %v152 = vmul.f32 %v35, %v134
  %v153 = vadd.f32 %v152, %v143
  %v154 = vmul.f32 %v153, 2.0
  %v155 = vadd.f32 %v87, %v154
  %v156 = vmul.f32 %v48, %v147
  %v157 = vadd.f32 %v156, %v80
  %v158 = vmul.f32 %v48, %v151
  %v159 = vadd.f32 %v158, %v81
  %v160 = vmul.f32 %v48, %v155
  %v161 = vadd.f32 %v160, %v82
  %v162 = vmul.f32 %v48, %v97
  %v163 = vld [vmem:[%s2] sm:$0xff]
  %s164 = scalar_lea.vmem %s2, 8
  %v165 = vld [vmem:[%s164] sm:$0xff]
  %s166 = scalar_lea.vmem %s2, 16
  %v167 = vld [vmem:[%s166] sm:$0xff]
  %s168 = scalar_lea.vmem %s2, 24
  %v169 = vld [vmem:[%s168] sm:$0xff]
  %s170 = scalar_lea.vmem %s2, 32
  %v171 = vld [vmem:[%s170] sm:$0xff]
  %s172 = scalar_lea.vmem %s2, 40
  %v173 = vld [vmem:[%s172] sm:$0xff]
  %s174 = scalar_lea.vmem %s2, 48
  %v175 = vld [vmem:[%s174] sm:$0xff]
  %s176 = scalar_lea.vmem %s2, 56
  %v177 = vld [vmem:[%s176] sm:$0xff]
  %v178 = vmul.f32 %v125, %v169
  %v179 = vmul.f32 %v104, %v175
  %v180 = vadd.f32 %v178, %v179
  %v181 = vmul.f32 %v111, %v173
  %v182 = vadd.f32 %v180, %v181
  %v183 = vmul.f32 %v118, %v171
  %v184 = vsub.f32 %v182, %v183
  %v185 = vmul.f32 %v125, %v171
  %v186 = vmul.f32 %v104, %v173
  %v187 = vsub.f32 %v185, %v186
  %v188 = vmul.f32 %v111, %v175
  %v189 = vadd.f32 %v187, %v188
  %v190 = vmul.f32 %v118, %v169
  %v191 = vadd.f32 %v189, %v190
  %v192 = vmul.f32 %v125, %v173
  %v193 = vmul.f32 %v104, %v171
  %v194 = vadd.f32 %v192, %v193
  %v195 = vmul.f32 %v111, %v169
  %v196 = vsub.f32 %v194, %v195
  %v197 = vmul.f32 %v118, %v175
  %v198 = vadd.f32 %v196, %v197
  %v199 = vmul.f32 %v125, %v175
  %v200 = vmul.f32 %v104, %v169
  %v201 = vsub.f32 %v199, %v200
  %v202 = vmul.f32 %v111, %v171
  %v203 = vsub.f32 %v201, %v202
  %v204 = vmul.f32 %v118, %v173
  %v205 = vsub.f32 %v203, %v204
  %v206 = vmul.f32 %v111, %v167
  %v207 = vmul.f32 %v118, %v165
  %v208 = vsub.f32 %v206, %v207
  %v209 = vmul.f32 %v118, %v163
  %v210 = vmul.f32 %v104, %v167
  %v211 = vsub.f32 %v209, %v210
  %v212 = vmul.f32 %v104, %v165
  %v213 = vmul.f32 %v111, %v163
  %v214 = vsub.f32 %v212, %v213
  %v215 = vmul.f32 %v111, %v214
  %v216 = vmul.f32 %v118, %v211
  %v217 = vsub.f32 %v215, %v216
  %v218 = vmul.f32 %v118, %v208
  %v219 = vmul.f32 %v104, %v214
  %v220 = vsub.f32 %v218, %v219
  %v221 = vmul.f32 %v104, %v211
  %v222 = vmul.f32 %v111, %v208
  %v223 = vsub.f32 %v221, %v222
  %v224 = vmul.f32 %v125, %v208
  %v225 = vadd.f32 %v224, %v217
  %v226 = vmul.f32 %v225, 2.0
  %v227 = vadd.f32 %v163, %v226
  %v228 = vmul.f32 %v125, %v211
  %v229 = vadd.f32 %v228, %v220
  %v230 = vmul.f32 %v229, 2.0
  %v231 = vadd.f32 %v165, %v230
  %v232 = vmul.f32 %v125, %v214
  %v233 = vadd.f32 %v232, %v223
  %v234 = vmul.f32 %v233, 2.0
  %v235 = vadd.f32 %v167, %v234
  %v236 = vmul.f32 %v162, %v227
  %v237 = vadd.f32 %v236, %v157
  %v238 = vmul.f32 %v162, %v231
  %v239 = vadd.f32 %v238, %v159
  %v240 = vmul.f32 %v162, %v235
  %v241 = vadd.f32 %v240, %v161
  %v242 = vmul.f32 %v162, %v177
  %v243 = vmul.f32 %v184, %v184
  %v244 = vmul.f32 %v191, %v191
  %v245 = vadd.f32 %v243, %v244
  %v246 = vmul.f32 %v198, %v198
  %v247 = vadd.f32 %v245, %v246
  %v248 = vrsqrt.pop %v247
  %v249 = vmul.f32 %v248, %v247
  %v250 = vmul.f32 %v249, %v248
  %v251 = vmul.f32 0.5, %v250
  %v252 = vsub.f32 1.5, %v251
  %v253 = vmul.f32 %v248, %v252
  %v254 = vmul.f32 %v247, %v253
  %vm255 = vcmp.eq.f32.partialorder %v247, inf
  %v256 = vsel %vm255, %v247, %v254
  %vm257 = vcmp.eq.f32.partialorder %v247, 0.0
  %v258 = vand.u32 %v247, 2147483648
  %v259 = vsel %vm257, %v258, %v256
  %vm260 = vcmp.lt.f32.partialorder %v247, 1e-12
  %v261 = vand.u32 2147483647, %v205
  %vm262 = vcmp.lt.f32.partialorder %v261, 1e-06
  %v263 = vsel %vm260, %v205, 1.0
  %v264 = vand.u32 2147483647, %v263
  %v265 = vrcp.pop %v264
  %v266 = vmul.f32 %v264, %v265
  %v267 = vsub.f32 2.0, %v266
  %v268 = vmul.f32 %v265, %v267
  %vm269 = vcmp.lt.f32.partialorder %v263, 0.0
  %v270 = vsub.f32 0.0, %v268
  %v271 = vsel %vm269, %v270, %v268
  %v272 = vmul.f32 %v271, 2.0
  %v273 = vmul.f32 %v247, 0.6666667
  %v274 = vmul.f32 %v271, %v271
  %v275 = vmul.f32 %v274, %v271
  %v276 = vmul.f32 %v273, %v275
  %v277 = vsub.f32 %v272, %v276
  %v278 = vsel %vm260, 1.0, %v259
  %v279 = vand.u32 2147483647, %v278
  %v280 = vrcp.pop %v279
  %v281 = vmul.f32 %v279, %v280
  %v282 = vsub.f32 2.0, %v281
  %v283 = vmul.f32 %v280, %v282
  %vm284 = vcmp.lt.f32.partialorder %v278, 0.0
  %v285 = vsub.f32 0.0, %v283
  %v286 = vsel %vm284, %v285, %v283
  %vm287 = vcmp.gt.f32.partialorder %v205, 0.0
  %v288 = vsel %vm287, 3.1415927, -3.1415927
  %v289 = vmul.f32 %v288, %v286
  %v290 = vsel %vm262, 1.0, %v205
  %v291 = vand.u32 2147483647, %v290
  %v292 = vrcp.pop %v291
  %v293 = vmul.f32 %v291, %v292
  %v294 = vsub.f32 2.0, %v293
  %v295 = vmul.f32 %v292, %v294
  %vm296 = vcmp.lt.f32.partialorder %v290, 0.0
  %v297 = vsub.f32 0.0, %v295
  %v298 = vsel %vm296, %v297, %v295
  %v299 = vmul.f32 %v259, %v298
  %v300 = vand.u32 2147483647, %v299
  %vm301 = vcmp.gt.f32.partialorder %v300, 2.4142137
  %vm302 = vcmp.gt.f32.partialorder %v300, 0.41421357
  %v303 = vsel %vm301, %v300, 1.0
  %v304 = vand.u32 2147483647, %v303
  %v305 = vrcp.pop %v304
  %v306 = vmul.f32 %v304, %v305
  %v307 = vsub.f32 2.0, %v306
  %v308 = vmul.f32 %v305, %v307
  %vm309 = vcmp.lt.f32.partialorder %v303, 0.0
  %v310 = vsub.f32 0.0, %v308
  %v311 = vsel %vm309, %v310, %v308
  %v312 = vsub.f32 0.0, %v311
  %v313 = vsub.f32 %v300, 1.0
  %v314 = vadd.f32 %v300, 1.0
  %v315 = vand.u32 2147483647, %v314
  %v316 = vrcp.pop %v315
  %v317 = vmul.f32 %v315, %v316
  %v318 = vsub.f32 2.0, %v317
  %v319 = vmul.f32 %v316, %v318
  %vm320 = vcmp.lt.f32.partialorder %v314, 0.0
  %v321 = vsub.f32 0.0, %v319
  %v322 = vsel %vm320, %v321, %v319
  %v323 = vmul.f32 %v313, %v322
  %v324 = vsel %vm302, %v323, %v300
  %v325 = vsel %vm301, %v312, %v324
  %v326 = vsel %vm302, 0.7853982, 0.0
  %v327 = vsel %vm301, 1.5707964, %v326
  %v328 = vmul.f32 %v325, %v325
  %v329 = vmul.f32 %v328, 0.080537446
  %v330 = vsub.f32 %v329, 0.13877685
  %v331 = vmul.f32 %v330, %v328
  %v332 = vadd.f32 %v331, 0.19977711
  %v333 = vmul.f32 %v332, %v328
  %v334 = vsub.f32 %v333, 0.3333295
  %v335 = vmul.f32 %v334, %v328
  %v336 = vmul.f32 %v335, %v325
  %v337 = vadd.f32 %v327, %v336
  %v338 = vadd.f32 %v337, %v325
  %vm339 = vcmp.lt.f32.partialorder %v299, 0.0
  %v340 = vsub.f32 0.0, %v338
  %v341 = vsel %vm339, %v340, %v338
  %v342 = vmul.f32 %v341, 2.0
  %v343 = vmul.f32 %v342, %v286
  %v344 = vsel %vm262, %v289, %v343
  %v345 = vsel %vm260, %v277, %v344
  %v346 = vmul.f32 %v345, %v184
  %v347 = vmul.f32 %v345, %v191
  %v348 = vmul.f32 %v345, %v198
  %v349 = vlog2.pop %v242
  %v350 = vmul.f32 %v349, 0.6931472
  %v351 = vmul.f32 %v346, %v346
  %v352 = vmul.f32 %v347, %v347
  %v353 = vadd.f32 %v351, %v352
  %v354 = vmul.f32 %v348, %v348
  %v355 = vadd.f32 %v353, %v354
  %v356 = vrsqrt.pop %v355
  %v357 = vmul.f32 %v356, %v355
  %v358 = vmul.f32 %v357, %v356
  %v359 = vmul.f32 0.5, %v358
  %v360 = vsub.f32 1.5, %v359
  %v361 = vmul.f32 %v356, %v360
  %v362 = vmul.f32 %v355, %v361
  %vm363 = vcmp.eq.f32.partialorder %v355, inf
  %v364 = vsel %vm363, %v355, %v362
  %vm365 = vcmp.eq.f32.partialorder %v355, 0.0
  %v366 = vand.u32 %v355, 2147483648
  %v367 = vsel %vm365, %v366, %v364
  %v368 = vmul.f32 %v350, 1.442695
  %v369 = vpow.pop %v368
  %v370 = vmul.f32 %v367, %v367
  %v371 = vmul.f32 %v350, %v350
  %v372 = vand.u32 2147483647, %v350
  %vm373 = vcmp.lt.f32.partialorder %v372, 1e-06
  %vm374 = vcmp.lt.f32.partialorder %v367, 1e-06
  %v375 = vand.u32 2147483647, %v367
  %vm376 = vcmp.le.f32.partialorder %v375, 0.7853982
  %vm377 = vcmp.lt.s32.totalorder %v367, 0
  %v378 = vand.u32 %v367, 2139095040
  %v379 = vshrl.u32 %v378, 23
  %v380 = vsub.s32 %v379, 127
  %v381 = vand.u32 2147483647, %v367
  %v382 = vand.u32 %v381, 8388607
  %v383 = vor.u32 %v382, 8388608
  %v384 = vsub.s32 0, %v383
  %v385 = vadd.s32 %v380, 1
  %vm386 = vcmp.gt.s32.totalorder %v385, 0
  %v387 = vsel %vm386, %v385, 0
  %v388 = vshrl.u32 %v387, 5
  %v389 = vand.u32 %v387, 31
  %v390 = vsub.s32 32, %v389
  %v391 = vshrl.u32 683565275, %v390
  %v392 = vshll.u32 683565275, %v389
  %v393 = vshrl.u32 2475754826, %v390
  %v394 = vor.u32 %v392, %v393
  %v395 = vshll.u32 2475754826, %v389
  %v396 = vshrl.u32 2131351028, %v390
  %v397 = vor.u32 %v395, %v396
  %v398 = vshll.u32 2131351028, %v389
  %v399 = vshrl.u32 2102212464, %v390
  %v400 = vor.u32 %v398, %v399
  %v401 = vshll.u32 2102212464, %v389
  %v402 = vshrl.u32 920167782, %v390
  %v403 = vor.u32 %v401, %v402
  %v404 = vshll.u32 920167782, %v389
  %v405 = vshrl.u32 1326507024, %v390
  %v406 = vor.u32 %v404, %v405
  %vm407 = vcmp.lt.s32.totalorder %v388, 1
  %vm408 = vcmp.lt.s32.totalorder %v388, 2
  %vm409 = vcmp.lt.s32.totalorder %v388, 3
  %vm410 = vcmp.lt.s32.totalorder %v388, 4
  %v411 = vsel %vm407, %v391, %v394
  %v412 = vsel %vm410, %v400, 2102212464
  %v413 = vsel %vm409, %v397, %v412
  %v414 = vsel %vm408, %v411, %v413
  %v415 = vsel %vm407, %v394, %v397
  %v416 = vsel %vm410, %v403, 920167782
  %v417 = vsel %vm409, %v400, %v416
  %v418 = vsel %vm408, %v415, %v417
  %v419 = vsel %vm407, %v397, %v400
  %v420 = vsel %vm410, %v406, 1326507024
  %v421 = vsel %vm409, %v403, %v420
  %v422 = vsel %vm408, %v419, %v421
  %v423 = vshll.u32 %v383, 8
  %v424 = vand.u32 %v423, 65535
  %v425 = vshrl.u32 %v423, 16
  %v426 = vand.u32 %v422, 65535
  %v427 = vshrl.u32 %v422, 16
  %v428 = vmul.u32 %v424, %v426
  %v429 = vmul.u32 %v424, %v427
  %v430 = vmul.u32 %v425, %v426
  %v431 = vmul.u32 %v425, %v427
  %v432 = vshll.u32 %v429, 16
  %v433 = vshrl.u32 %v429, 16
  %v434 = vshll.u32 %v430, 16
  %v435 = vshrl.u32 %v430, 16
  %vm436 = vc.u32 %v428, %v432
  %v437 = vsel %vm436, 1, 0
  %v438 = vadd.s32 %v428, %v432
  %v439 = vadd.s32 %v431, %v437
  %vm440 = vc.u32 %v438, %v434
  %v441 = vsel %vm440, 1, 0
  %v442 = vadd.s32 %v438, %v434
  %v443 = vadd.s32 %v439, %v441
  %v444 = vadd.s32 %v443, %v433
  %v445 = vadd.s32 %v444, %v435
  %v446 = vand.u32 %v423, 65535
  %v447 = vshrl.u32 %v423, 16
  %v448 = vand.u32 %v418, 65535
  %v449 = vshrl.u32 %v418, 16
  %v450 = vmul.u32 %v446, %v448
  %v451 = vmul.u32 %v446, %v449
  %v452 = vmul.u32 %v447, %v448
  %v453 = vmul.u32 %v447, %v449
  %v454 = vshll.u32 %v451, 16
  %v455 = vshrl.u32 %v451, 16
  %v456 = vshll.u32 %v452, 16
  %v457 = vshrl.u32 %v452, 16
  %vm458 = vc.u32 %v450, %v454
  %v459 = vsel %vm458, 1, 0
  %v460 = vadd.s32 %v450, %v454
  %v461 = vadd.s32 %v453, %v459
  %vm462 = vc.u32 %v460, %v456
  %v463 = vsel %vm462, 1, 0
  %v464 = vadd.s32 %v460, %v456
  %v465 = vadd.s32 %v461, %v463
  %v466 = vadd.s32 %v465, %v455
  %v467 = vadd.s32 %v466, %v457
  %v468 = vmul.u32 %v423, %v414
  %v469 = vadd.s32 %v445, %v464
  %vm470 = vc.u32 %v445, %v464
  %v471 = vadd.s32 %v467, 1
  %v472 = vsel %vm470, %v471, %v467
  %v473 = vadd.s32 %v468, %v472
  %v474 = vadd.s32 %v473, 536870912
  %v475 = vshrl.u32 %v474, 30
  %v476 = vshll.u32 %v475, 30
  %v477 = vsub.s32 %v473, %v476
  %vm478 = vcmp.lt.s32.totalorder %v477, 0
  %v479 = vsub.s32 0, %v477
  %v480 = vsel %vm478, %v479, %v477
  %v481 = vclz %v480
  %v482 = vsub.s32 %v481, 2
  %vm483 = vcmp.gt.s32.totalorder 0, %v482
  %v484 = vsel %vm483, 0, %v482
  %v485 = vsub.s32 32, %v484
  %v486 = vshll.u32 %v477, %v484
  %v487 = vshrl.u32 %v469, %v485
  %v488 = vor.u32 %v486, %v487
  %v489 = vsub.s32 4294967266, %v484
  %v490 = vadd.s32 %v489, 127
  %v491 = vshll.u32 %v490, 23
  %v492 = vor.u32 4788187, %v491
  %v493 = vand.u32 2147483647, %v492
  %v495 = vcvt.s32.f32 %v488
  %v496 = vmul.f32 %v495, %v493
  %v497 = vxor.u32 %v496, 2147483648
  %v498 = vsel %vm377, %v497, %v496
  %v499 = vsub.s32 4, %v475
  %v500 = vsel %vm377, %v499, %v475
  %v501 = vsel %vm376, %v367, %v498
  %v502 = vsel %vm376, 0, %v500
  %v503 = vmul.f32 %v501, %v501
  %v504 = vmul.f32 %v503, -0.001358992
  %v505 = vadd.f32 %v504, 0.041655596
  %v506 = vmul.f32 %v503, %v505
  %v507 = vadd.f32 %v506, -0.4999988
  %v508 = vmul.f32 %v503, %v507
  %v509 = vadd.f32 1.0, %v508
  %v510 = vmul.f32 %v501, %v501
  %v511 = vmul.f32 %v510, -0.00019511016
  %v512 = vadd.f32 %v511, 0.008332121
  %v513 = vmul.f32 %v510, %v512
  %v514 = vadd.f32 %v513, -0.16666654
  %v515 = vmul.f32 %v510, %v514
  %v516 = vadd.f32 %v515, 1.0
  %v517 = vmul.f32 %v516, %v501
  %vm518 = vweird.f32 %v367
  %v519 = vadd.s32 %v502, 3
  %v520 = vand.u32 %v519, 3
  %vm521 = vcmp.lt.s32.totalorder %v520, 2
  %vm522 = vcmp.eq.s32.totalorder %v520, 0
  %v523 = vxor.u32 %v517, 2147483648
  %v524 = vsel %vm522, %v509, %v523
  %vm525 = vcmp.eq.s32.totalorder %v520, 2
  %v526 = vxor.u32 %v509, 2147483648
  %v527 = vsel %vm525, %v526, %v517
  %v528 = vsel %vm521, %v524, %v527
  %v529 = vsel %vm518, nan, %v528
  %v530 = vand.u32 2147483647, %v367
  %vm531 = vcmp.le.f32.partialorder %v530, 0.7853982
  %vm532 = vcmp.lt.s32.totalorder %v367, 0
  %v533 = vand.u32 %v367, 2139095040
  %v534 = vshrl.u32 %v533, 23
  %v535 = vsub.s32 %v534, 127
  %v536 = vand.u32 2147483647, %v367
  %v537 = vand.u32 %v536, 8388607
  %v538 = vor.u32 %v537, 8388608
  %v539 = vsub.s32 0, %v538
  %v540 = vadd.s32 %v535, 1
  %vm541 = vcmp.gt.s32.totalorder %v540, 0
  %v542 = vsel %vm541, %v540, 0
  %v543 = vshrl.u32 %v542, 5
  %v544 = vand.u32 %v542, 31
  %v545 = vsub.s32 32, %v544
  %v546 = vshrl.u32 683565275, %v545
  %v547 = vshll.u32 683565275, %v544
  %v548 = vshrl.u32 2475754826, %v545
  %v549 = vor.u32 %v547, %v548
  %v550 = vshll.u32 2475754826, %v544
  %v551 = vshrl.u32 2131351028, %v545
  %v552 = vor.u32 %v550, %v551
  %v553 = vshll.u32 2131351028, %v544
  %v554 = vshrl.u32 2102212464, %v545
  %v555 = vor.u32 %v553, %v554
  %v556 = vshll.u32 2102212464, %v544
  %v557 = vshrl.u32 920167782, %v545
  %v558 = vor.u32 %v556, %v557
  %v559 = vshll.u32 920167782, %v544
  %v560 = vshrl.u32 1326507024, %v545
  %v561 = vor.u32 %v559, %v560
  %vm562 = vcmp.lt.s32.totalorder %v543, 1
  %vm563 = vcmp.lt.s32.totalorder %v543, 2
  %vm564 = vcmp.lt.s32.totalorder %v543, 3
  %vm565 = vcmp.lt.s32.totalorder %v543, 4
  %v566 = vsel %vm562, %v546, %v549
  %v567 = vsel %vm565, %v555, 2102212464
  %v568 = vsel %vm564, %v552, %v567
  %v569 = vsel %vm563, %v566, %v568
  %v570 = vsel %vm562, %v549, %v552
  %v571 = vsel %vm565, %v558, 920167782
  %v572 = vsel %vm564, %v555, %v571
  %v573 = vsel %vm563, %v570, %v572
  %v574 = vsel %vm562, %v552, %v555
  %v575 = vsel %vm565, %v561, 1326507024
  %v576 = vsel %vm564, %v558, %v575
  %v577 = vsel %vm563, %v574, %v576
  %v578 = vshll.u32 %v538, 8
  %v579 = vand.u32 %v578, 65535
  %v580 = vshrl.u32 %v578, 16
  %v581 = vand.u32 %v577, 65535
  %v582 = vshrl.u32 %v577, 16
  %v583 = vmul.u32 %v579, %v581
  %v584 = vmul.u32 %v579, %v582
  %v585 = vmul.u32 %v580, %v581
  %v586 = vmul.u32 %v580, %v582
  %v587 = vshll.u32 %v584, 16
  %v588 = vshrl.u32 %v584, 16
  %v589 = vshll.u32 %v585, 16
  %v590 = vshrl.u32 %v585, 16
  %vm591 = vc.u32 %v583, %v587
  %v592 = vsel %vm591, 1, 0
  %v593 = vadd.s32 %v583, %v587
  %v594 = vadd.s32 %v586, %v592
  %vm595 = vc.u32 %v593, %v589
  %v596 = vsel %vm595, 1, 0
  %v597 = vadd.s32 %v593, %v589
  %v598 = vadd.s32 %v594, %v596
  %v599 = vadd.s32 %v598, %v588
  %v600 = vadd.s32 %v599, %v590
  %v601 = vand.u32 %v578, 65535
  %v602 = vshrl.u32 %v578, 16
  %v603 = vand.u32 %v573, 65535
  %v604 = vshrl.u32 %v573, 16
  %v605 = vmul.u32 %v601, %v603
  %v606 = vmul.u32 %v601, %v604
  %v607 = vmul.u32 %v602, %v603
  %v608 = vmul.u32 %v602, %v604
  %v609 = vshll.u32 %v606, 16
  %v610 = vshrl.u32 %v606, 16
  %v611 = vshll.u32 %v607, 16
  %v612 = vshrl.u32 %v607, 16
  %vm613 = vc.u32 %v605, %v609
  %v614 = vsel %vm613, 1, 0
  %v615 = vadd.s32 %v605, %v609
  %v616 = vadd.s32 %v608, %v614
  %vm617 = vc.u32 %v615, %v611
  %v618 = vsel %vm617, 1, 0
  %v619 = vadd.s32 %v615, %v611
  %v620 = vadd.s32 %v616, %v618
  %v621 = vadd.s32 %v620, %v610
  %v622 = vadd.s32 %v621, %v612
  %v623 = vmul.u32 %v578, %v569
  %v624 = vadd.s32 %v600, %v619
  %vm625 = vc.u32 %v600, %v619
  %v626 = vadd.s32 %v622, 1
  %v627 = vsel %vm625, %v626, %v622
  %v628 = vadd.s32 %v623, %v627
  %v629 = vadd.s32 %v628, 536870912
  %v630 = vshrl.u32 %v629, 30
  %v631 = vshll.u32 %v630, 30
  %v632 = vsub.s32 %v628, %v631
  %vm633 = vcmp.lt.s32.totalorder %v632, 0
  %v634 = vsub.s32 0, %v632
  %v635 = vsel %vm633, %v634, %v632
  %v636 = vclz %v635
  %v637 = vsub.s32 %v636, 2
  %vm638 = vcmp.gt.s32.totalorder 0, %v637
  %v639 = vsel %vm638, 0, %v637
  %v640 = vsub.s32 32, %v639
  %v641 = vshll.u32 %v632, %v639
  %v642 = vshrl.u32 %v624, %v640
  %v643 = vor.u32 %v641, %v642
  %v644 = vsub.s32 4294967266, %v639
  %v645 = vadd.s32 %v644, 127
  %v646 = vshll.u32 %v645, 23
  %v647 = vor.u32 4788187, %v646
  %v648 = vand.u32 2147483647, %v647
  %v650 = vcvt.s32.f32 %v643
  %v651 = vmul.f32 %v650, %v648
  %v652 = vxor.u32 %v651, 2147483648
  %v653 = vsel %vm532, %v652, %v651
  %v654 = vsub.s32 4, %v630
  %v655 = vsel %vm532, %v654, %v630
  %v656 = vsel %vm531, %v367, %v653
  %v657 = vsel %vm531, 0, %v655
  %v658 = vmul.f32 %v656, %v656
  %v659 = vmul.f32 %v658, -0.001358992
  %v660 = vadd.f32 %v659, 0.041655596
  %v661 = vmul.f32 %v658, %v660
  %v662 = vadd.f32 %v661, -0.4999988
  %v663 = vmul.f32 %v658, %v662
  %v664 = vadd.f32 1.0, %v663
  %v665 = vmul.f32 %v656, %v656
  %v666 = vmul.f32 %v665, -0.00019511016
  %v667 = vadd.f32 %v666, 0.008332121
  %v668 = vmul.f32 %v665, %v667
  %v669 = vadd.f32 %v668, -0.16666654
  %v670 = vmul.f32 %v665, %v669
  %v671 = vadd.f32 %v670, 1.0
  %v672 = vmul.f32 %v671, %v656
  %vm673 = vweird.f32 %v367
  %v674 = vand.u32 %v657, 3
  %vm675 = vcmp.lt.s32.totalorder %v674, 2
  %vm676 = vcmp.eq.s32.totalorder %v674, 0
  %v677 = vxor.u32 %v672, 2147483648
  %v678 = vsel %vm676, %v664, %v677
  %vm679 = vcmp.eq.s32.totalorder %v674, 2
  %v680 = vxor.u32 %v664, 2147483648
  %v681 = vsel %vm679, %v680, %v672
  %v682 = vsel %vm675, %v678, %v681
  %v683 = vsel %vm673, nan, %v682
  %v684 = vsel %vm374, 1.0, %v367
  %v685 = vsel %vm374, 1.0, %v370
  %v686 = vsel %vm373, 1.0, %v350
  %v687 = vsel %vm373, 1.0, %v371
  %v688 = vand.u32 2147483647, %v684
  %v689 = vrcp.pop %v688
  %v690 = vmul.f32 %v688, %v689
  %v691 = vsub.f32 2.0, %v690
  %v692 = vmul.f32 %v689, %v691
  %vm693 = vcmp.lt.f32.partialorder %v684, 0.0
  %v694 = vsub.f32 0.0, %v692
  %v695 = vsel %vm693, %v694, %v692
  %v696 = vand.u32 2147483647, %v685
  %v697 = vrcp.pop %v696
  %v698 = vmul.f32 %v696, %v697
  %v699 = vsub.f32 2.0, %v698
  %v700 = vmul.f32 %v697, %v699
  %vm701 = vcmp.lt.f32.partialorder %v685, 0.0
  %v702 = vsub.f32 0.0, %v700
  %v703 = vsel %vm701, %v702, %v700
  %v704 = vand.u32 2147483647, %v686
  %v705 = vrcp.pop %v704
  %v706 = vmul.f32 %v704, %v705
  %v707 = vsub.f32 2.0, %v706
  %v708 = vmul.f32 %v705, %v707
  %vm709 = vcmp.lt.f32.partialorder %v686, 0.0
  %v710 = vsub.f32 0.0, %v708
  %v711 = vsel %vm709, %v710, %v708
  %v712 = vand.u32 2147483647, %v687
  %v713 = vrcp.pop %v712
  %v714 = vmul.f32 %v712, %v713
  %v715 = vsub.f32 2.0, %v714
  %v716 = vmul.f32 %v713, %v715
  %vm717 = vcmp.lt.f32.partialorder %v687, 0.0
  %v718 = vsub.f32 0.0, %v716
  %v719 = vsel %vm717, %v718, %v716
  %v720 = vsub.f32 %v369, 1.0
  %v721 = vmul.f32 %v720, %v711
  %v722 = vsel %vm373, 1.0, %v721
  %v723 = vsub.f32 1.0, %v683
  %v724 = vmul.f32 %v723, %v703
  %v725 = vsel %vm374, 0.5, %v724
  %v726 = vsub.f32 %v367, %v529
  %v727 = vmul.f32 %v703, %v695
  %v728 = vmul.f32 %v726, %v727
  %v729 = vsel %vm374, 0.16666667, %v728
  %v730 = vsub.f32 %v350, 1.0
  %v731 = vmul.f32 %v730, %v369
  %v732 = vadd.f32 %v731, 1.0
  %v733 = vmul.f32 %v732, %v719
  %v734 = vmul.f32 %v371, 0.5
  %v735 = vmul.f32 %v734, %v369
  %v736 = vadd.f32 %v735, %v369
  %v737 = vsub.f32 %v736, 1.0
  %v738 = vmul.f32 %v350, %v369
  %v739 = vsub.f32 %v737, %v738
  %v740 = vmul.f32 %v719, %v711
  %v741 = vmul.f32 %v739, %v740
  %v742 = vmul.f32 %v369, %v529
  %v743 = vmul.f32 %v369, %v683
  %v744 = vadd.f32 %v370, %v371
  %v745 = vsel %vm374, 1.0, %v744
  %v746 = vand.u32 2147483647, %v745
  %v747 = vrcp.pop %v746
  %v748 = vmul.f32 %v746, %v747
  %v749 = vsub.f32 2.0, %v748
  %v750 = vmul.f32 %v747, %v749
  %vm751 = vcmp.lt.f32.partialorder %v745, 0.0
  %v752 = vsub.f32 0.0, %v750
  %v753 = vsel %vm751, %v752, %v750
  %v754 = vmul.f32 %v742, %v350
  %v755 = vsub.f32 1.0, %v743
  %v756 = vmul.f32 %v755, %v367
  %v757 = vadd.f32 %v754, %v756
  %v758 = vmul.f32 %v695, %v753
  %v759 = vmul.f32 %v757, %v758
  %v760 = vsub.f32 %v743, 1.0
  %v761 = vmul.f32 %v760, %v350
  %v762 = vmul.f32 %v742, %v367
  %v763 = vadd.f32 %v761, %v762
  %v764 = vmul.f32 %v763, %v753
  %v765 = vsub.f32 %v722, %v764
  %v766 = vmul.f32 %v765, %v703
  %v767 = vsel %vm374, %v733, %v759
  %v768 = vsel %vm373, %v725, %v767
  %v769 = vsel %vm374, %v741, %v766
  %v770 = vsel %vm373, %v729, %v769
  %v771 = vmul.f32 %v355, %v770
  %v772 = vsub.f32 %v722, %v771
  %v773 = vmul.f32 %v772, %v772
  %v774 = vmul.f32 %v355, %v768
  %v775 = vmul.f32 %v774, %v768
  %v776 = vadd.f32 %v773, %v775
  %v777 = vand.u32 2147483647, %v722
  %v778 = vrcp.pop %v777
  %v779 = vmul.f32 %v777, %v778
  %v780 = vsub.f32 2.0, %v779
  %v781 = vmul.f32 %v778, %v780
  %vm782 = vcmp.lt.f32.partialorder %v722, 0.0
  %v783 = vsub.f32 0.0, %v781
  %v784 = vsel %vm782, %v783, %v781
  %v785 = vand.u32 2147483647, %v776
  %v786 = vrcp.pop %v785
  %v787 = vmul.f32 %v785, %v786
  %v788 = vsub.f32 2.0, %v787
  %v789 = vmul.f32 %v786, %v788
  %vm790 = vcmp.lt.f32.partialorder %v776, 0.0
  %v791 = vsub.f32 0.0, %v789
  %v792 = vsel %vm790, %v791, %v789
  %v793 = vsub.f32 0.0, %v768
  %v794 = vmul.f32 %v793, %v792
  %v795 = vmul.f32 %v768, %v768
  %v796 = vmul.f32 %v770, %v722
  %v797 = vsub.f32 %v795, %v796
  %v798 = vmul.f32 %v771, %v770
  %v799 = vadd.f32 %v797, %v798
  %v800 = vmul.f32 %v784, %v792
  %v801 = vmul.f32 %v799, %v800
  %v802 = vmul.f32 %v347, %v241
  %v803 = vmul.f32 %v348, %v239
  %v804 = vsub.f32 %v802, %v803
  %v805 = vmul.f32 %v348, %v237
  %v806 = vmul.f32 %v346, %v241
  %v807 = vsub.f32 %v805, %v806
  %v808 = vmul.f32 %v346, %v239
  %v809 = vmul.f32 %v347, %v237
  %v810 = vsub.f32 %v808, %v809
  %v811 = vmul.f32 %v347, %v810
  %v812 = vmul.f32 %v348, %v807
  %v813 = vsub.f32 %v811, %v812
  %v814 = vmul.f32 %v348, %v804
  %v815 = vmul.f32 %v346, %v810
  %v816 = vsub.f32 %v814, %v815
  %v817 = vmul.f32 %v346, %v807
  %v818 = vmul.f32 %v347, %v804
  %v819 = vsub.f32 %v817, %v818
  %v820 = vmul.f32 %v784, %v237
  %v821 = vmul.f32 %v794, %v804
  %v822 = vadd.f32 %v820, %v821
  %v823 = vmul.f32 %v801, %v813
  %v824 = vadd.f32 %v822, %v823
  %v825 = vmul.f32 %v784, %v239
  %v826 = vmul.f32 %v794, %v807
  %v827 = vadd.f32 %v825, %v826
  %v828 = vmul.f32 %v801, %v816
  %v829 = vadd.f32 %v827, %v828
  %v830 = vmul.f32 %v784, %v241
  %v831 = vmul.f32 %v794, %v810
  %v832 = vadd.f32 %v830, %v831
  %v833 = vmul.f32 %v801, %v819
  %v834 = vadd.f32 %v832, %v833
  %v835 = vld [vmem:[%s3] sm:$0xff]
  %s836 = scalar_lea.vmem %s3, 8
  %v837 = vld [vmem:[%s836] sm:$0xff]
  %s838 = scalar_lea.vmem %s3, 16
  %v839 = vld [vmem:[%s838] sm:$0xff]
  %s840 = scalar_lea.vmem %s3, 24
  %v841 = vld [vmem:[%s840] sm:$0xff]
  %s842 = scalar_lea.vmem %s3, 32
  %v843 = vld [vmem:[%s842] sm:$0xff]
  %s844 = scalar_lea.vmem %s3, 40
  %v845 = vld [vmem:[%s844] sm:$0xff]
  %s846 = scalar_lea.vmem %s3, 48
  %v847 = vld [vmem:[%s846] sm:$0xff]
  %s848 = scalar_lea.vmem %s3, 56
  %v849 = vld [vmem:[%s848] sm:$0xff]
  %v850 = vmul.f32 %v125, %v841
  %v851 = vmul.f32 %v104, %v847
  %v852 = vadd.f32 %v850, %v851
  %v853 = vmul.f32 %v111, %v845
  %v854 = vadd.f32 %v852, %v853
  %v855 = vmul.f32 %v118, %v843
  %v856 = vsub.f32 %v854, %v855
  %v857 = vmul.f32 %v125, %v843
  %v858 = vmul.f32 %v104, %v845
  %v859 = vsub.f32 %v857, %v858
  %v860 = vmul.f32 %v111, %v847
  %v861 = vadd.f32 %v859, %v860
  %v862 = vmul.f32 %v118, %v841
  %v863 = vadd.f32 %v861, %v862
  %v864 = vmul.f32 %v125, %v845
  %v865 = vmul.f32 %v104, %v843
  %v866 = vadd.f32 %v864, %v865
  %v867 = vmul.f32 %v111, %v841
  %v868 = vsub.f32 %v866, %v867
  %v869 = vmul.f32 %v118, %v847
  %v870 = vadd.f32 %v868, %v869
  %v871 = vmul.f32 %v125, %v847
  %v872 = vmul.f32 %v104, %v841
  %v873 = vsub.f32 %v871, %v872
  %v874 = vmul.f32 %v111, %v843
  %v875 = vsub.f32 %v873, %v874
  %v876 = vmul.f32 %v118, %v845
  %v877 = vsub.f32 %v875, %v876
  %v878 = vmul.f32 %v111, %v839
  %v879 = vmul.f32 %v118, %v837
  %v880 = vsub.f32 %v878, %v879
  %v881 = vmul.f32 %v118, %v835
  %v882 = vmul.f32 %v104, %v839
  %v883 = vsub.f32 %v881, %v882
  %v884 = vmul.f32 %v104, %v837
  %v885 = vmul.f32 %v111, %v835
  %v886 = vsub.f32 %v884, %v885
  %v887 = vmul.f32 %v111, %v886
  %v888 = vmul.f32 %v118, %v883
  %v889 = vsub.f32 %v887, %v888
  %v890 = vmul.f32 %v118, %v880
  %v891 = vmul.f32 %v104, %v886
  %v892 = vsub.f32 %v890, %v891
  %v893 = vmul.f32 %v104, %v883
  %v894 = vmul.f32 %v111, %v880
  %v895 = vsub.f32 %v893, %v894
  %v896 = vmul.f32 %v125, %v880
  %v897 = vadd.f32 %v896, %v889
  %v898 = vmul.f32 %v897, 2.0
  %v899 = vadd.f32 %v835, %v898
  %v900 = vmul.f32 %v125, %v883
  %v901 = vadd.f32 %v900, %v892
  %v902 = vmul.f32 %v901, 2.0
  %v903 = vadd.f32 %v837, %v902
  %v904 = vmul.f32 %v125, %v886
  %v905 = vadd.f32 %v904, %v895
  %v906 = vmul.f32 %v905, 2.0
  %v907 = vadd.f32 %v839, %v906
  %v908 = vmul.f32 %v162, %v899
  %v909 = vadd.f32 %v908, %v157
  %v910 = vmul.f32 %v162, %v903
  %v911 = vadd.f32 %v910, %v159
  %v912 = vmul.f32 %v162, %v907
  %v913 = vadd.f32 %v912, %v161
  %v914 = vmul.f32 %v162, %v849
  %v915 = vmul.f32 %v856, %v856
  %v916 = vmul.f32 %v863, %v863
  %v917 = vadd.f32 %v915, %v916
  %v918 = vmul.f32 %v870, %v870
  %v919 = vadd.f32 %v917, %v918
  %v920 = vrsqrt.pop %v919
  %v921 = vmul.f32 %v920, %v919
  %v922 = vmul.f32 %v921, %v920
  %v923 = vmul.f32 0.5, %v922
  %v924 = vsub.f32 1.5, %v923
  %v925 = vmul.f32 %v920, %v924
  %v926 = vmul.f32 %v919, %v925
  %vm927 = vcmp.eq.f32.partialorder %v919, inf
  %v928 = vsel %vm927, %v919, %v926
  %vm929 = vcmp.eq.f32.partialorder %v919, 0.0
  %v930 = vand.u32 %v919, 2147483648
  %v931 = vsel %vm929, %v930, %v928
  %vm932 = vcmp.lt.f32.partialorder %v919, 1e-12
  %v933 = vand.u32 2147483647, %v877
  %vm934 = vcmp.lt.f32.partialorder %v933, 1e-06
  %v935 = vsel %vm932, %v877, 1.0
  %v936 = vand.u32 2147483647, %v935
  %v937 = vrcp.pop %v936
  %v938 = vmul.f32 %v936, %v937
  %v939 = vsub.f32 2.0, %v938
  %v940 = vmul.f32 %v937, %v939
  %vm941 = vcmp.lt.f32.partialorder %v935, 0.0
  %v942 = vsub.f32 0.0, %v940
  %v943 = vsel %vm941, %v942, %v940
  %v944 = vmul.f32 %v943, 2.0
  %v945 = vmul.f32 %v919, 0.6666667
  %v946 = vmul.f32 %v943, %v943
  %v947 = vmul.f32 %v946, %v943
  %v948 = vmul.f32 %v945, %v947
  %v949 = vsub.f32 %v944, %v948
  %v950 = vsel %vm932, 1.0, %v931
  %v951 = vand.u32 2147483647, %v950
  %v952 = vrcp.pop %v951
  %v953 = vmul.f32 %v951, %v952
  %v954 = vsub.f32 2.0, %v953
  %v955 = vmul.f32 %v952, %v954
  %vm956 = vcmp.lt.f32.partialorder %v950, 0.0
  %v957 = vsub.f32 0.0, %v955
  %v958 = vsel %vm956, %v957, %v955
  %vm959 = vcmp.gt.f32.partialorder %v877, 0.0
  %v960 = vsel %vm959, 3.1415927, -3.1415927
  %v961 = vmul.f32 %v960, %v958
  %v962 = vsel %vm934, 1.0, %v877
  %v963 = vand.u32 2147483647, %v962
  %v964 = vrcp.pop %v963
  %v965 = vmul.f32 %v963, %v964
  %v966 = vsub.f32 2.0, %v965
  %v967 = vmul.f32 %v964, %v966
  %vm968 = vcmp.lt.f32.partialorder %v962, 0.0
  %v969 = vsub.f32 0.0, %v967
  %v970 = vsel %vm968, %v969, %v967
  %v971 = vmul.f32 %v931, %v970
  %v972 = vand.u32 2147483647, %v971
  %vm973 = vcmp.gt.f32.partialorder %v972, 2.4142137
  %vm974 = vcmp.gt.f32.partialorder %v972, 0.41421357
  %v975 = vsel %vm973, %v972, 1.0
  %v976 = vand.u32 2147483647, %v975
  %v977 = vrcp.pop %v976
  %v978 = vmul.f32 %v976, %v977
  %v979 = vsub.f32 2.0, %v978
  %v980 = vmul.f32 %v977, %v979
  %vm981 = vcmp.lt.f32.partialorder %v975, 0.0
  %v982 = vsub.f32 0.0, %v980
  %v983 = vsel %vm981, %v982, %v980
  %v984 = vsub.f32 0.0, %v983
  %v985 = vsub.f32 %v972, 1.0
  %v986 = vadd.f32 %v972, 1.0
  %v987 = vand.u32 2147483647, %v986
  %v988 = vrcp.pop %v987
  %v989 = vmul.f32 %v987, %v988
  %v990 = vsub.f32 2.0, %v989
  %v991 = vmul.f32 %v988, %v990
  %vm992 = vcmp.lt.f32.partialorder %v986, 0.0
  %v993 = vsub.f32 0.0, %v991
  %v994 = vsel %vm992, %v993, %v991
  %v995 = vmul.f32 %v985, %v994
  %v996 = vsel %vm974, %v995, %v972
  %v997 = vsel %vm973, %v984, %v996
  %v998 = vsel %vm974, 0.7853982, 0.0
  %v999 = vsel %vm973, 1.5707964, %v998
  %v1000 = vmul.f32 %v997, %v997
  %v1001 = vmul.f32 %v1000, 0.080537446
  %v1002 = vsub.f32 %v1001, 0.13877685
  %v1003 = vmul.f32 %v1002, %v1000
  %v1004 = vadd.f32 %v1003, 0.19977711
  %v1005 = vmul.f32 %v1004, %v1000
  %v1006 = vsub.f32 %v1005, 0.3333295
  %v1007 = vmul.f32 %v1006, %v1000
  %v1008 = vmul.f32 %v1007, %v997
  %v1009 = vadd.f32 %v999, %v1008
  %v1010 = vadd.f32 %v1009, %v997
  %vm1011 = vcmp.lt.f32.partialorder %v971, 0.0
  %v1012 = vsub.f32 0.0, %v1010
  %v1013 = vsel %vm1011, %v1012, %v1010
  %v1014 = vmul.f32 %v1013, 2.0
  %v1015 = vmul.f32 %v1014, %v958
  %v1016 = vsel %vm934, %v961, %v1015
  %v1017 = vsel %vm932, %v949, %v1016
  %v1018 = vmul.f32 %v1017, %v856
  %v1019 = vmul.f32 %v1017, %v863
  %v1020 = vmul.f32 %v1017, %v870
  %v1021 = vlog2.pop %v914
  %v1022 = vmul.f32 %v1021, 0.6931472
  %v1023 = vmul.f32 %v1018, %v1018
  %v1024 = vmul.f32 %v1019, %v1019
  %v1025 = vadd.f32 %v1023, %v1024
  %v1026 = vmul.f32 %v1020, %v1020
  %v1027 = vadd.f32 %v1025, %v1026
  %v1028 = vrsqrt.pop %v1027
  %v1029 = vmul.f32 %v1028, %v1027
  %v1030 = vmul.f32 %v1029, %v1028
  %v1031 = vmul.f32 0.5, %v1030
  %v1032 = vsub.f32 1.5, %v1031
  %v1033 = vmul.f32 %v1028, %v1032
  %v1034 = vmul.f32 %v1027, %v1033
  %vm1035 = vcmp.eq.f32.partialorder %v1027, inf
  %v1036 = vsel %vm1035, %v1027, %v1034
  %vm1037 = vcmp.eq.f32.partialorder %v1027, 0.0
  %v1038 = vand.u32 %v1027, 2147483648
  %v1039 = vsel %vm1037, %v1038, %v1036
  %v1040 = vmul.f32 %v1022, 1.442695
  %v1041 = vpow.pop %v1040
  %v1042 = vmul.f32 %v1039, %v1039
  %v1043 = vmul.f32 %v1022, %v1022
  %v1044 = vand.u32 2147483647, %v1022
  %vm1045 = vcmp.lt.f32.partialorder %v1044, 1e-06
  %vm1046 = vcmp.lt.f32.partialorder %v1039, 1e-06
  %v1047 = vand.u32 2147483647, %v1039
  %vm1048 = vcmp.le.f32.partialorder %v1047, 0.7853982
  %vm1049 = vcmp.lt.s32.totalorder %v1039, 0
  %v1050 = vand.u32 %v1039, 2139095040
  %v1051 = vshrl.u32 %v1050, 23
  %v1052 = vsub.s32 %v1051, 127
  %v1053 = vand.u32 2147483647, %v1039
  %v1054 = vand.u32 %v1053, 8388607
  %v1055 = vor.u32 %v1054, 8388608
  %v1056 = vsub.s32 0, %v1055
  %v1057 = vadd.s32 %v1052, 1
  %vm1058 = vcmp.gt.s32.totalorder %v1057, 0
  %v1059 = vsel %vm1058, %v1057, 0
  %v1060 = vshrl.u32 %v1059, 5
  %v1061 = vand.u32 %v1059, 31
  %v1062 = vsub.s32 32, %v1061
  %v1063 = vshrl.u32 683565275, %v1062
  %v1064 = vshll.u32 683565275, %v1061
  %v1065 = vshrl.u32 2475754826, %v1062
  %v1066 = vor.u32 %v1064, %v1065
  %v1067 = vshll.u32 2475754826, %v1061
  %v1068 = vshrl.u32 2131351028, %v1062
  %v1069 = vor.u32 %v1067, %v1068
  %v1070 = vshll.u32 2131351028, %v1061
  %v1071 = vshrl.u32 2102212464, %v1062
  %v1072 = vor.u32 %v1070, %v1071
  %v1073 = vshll.u32 2102212464, %v1061
  %v1074 = vshrl.u32 920167782, %v1062
  %v1075 = vor.u32 %v1073, %v1074
  %v1076 = vshll.u32 920167782, %v1061
  %v1077 = vshrl.u32 1326507024, %v1062
  %v1078 = vor.u32 %v1076, %v1077
  %vm1079 = vcmp.lt.s32.totalorder %v1060, 1
  %vm1080 = vcmp.lt.s32.totalorder %v1060, 2
  %vm1081 = vcmp.lt.s32.totalorder %v1060, 3
  %vm1082 = vcmp.lt.s32.totalorder %v1060, 4
  %v1083 = vsel %vm1079, %v1063, %v1066
  %v1084 = vsel %vm1082, %v1072, 2102212464
  %v1085 = vsel %vm1081, %v1069, %v1084
  %v1086 = vsel %vm1080, %v1083, %v1085
  %v1087 = vsel %vm1079, %v1066, %v1069
  %v1088 = vsel %vm1082, %v1075, 920167782
  %v1089 = vsel %vm1081, %v1072, %v1088
  %v1090 = vsel %vm1080, %v1087, %v1089
  %v1091 = vsel %vm1079, %v1069, %v1072
  %v1092 = vsel %vm1082, %v1078, 1326507024
  %v1093 = vsel %vm1081, %v1075, %v1092
  %v1094 = vsel %vm1080, %v1091, %v1093
  %v1095 = vshll.u32 %v1055, 8
  %v1096 = vand.u32 %v1095, 65535
  %v1097 = vshrl.u32 %v1095, 16
  %v1098 = vand.u32 %v1094, 65535
  %v1099 = vshrl.u32 %v1094, 16
  %v1100 = vmul.u32 %v1096, %v1098
  %v1101 = vmul.u32 %v1096, %v1099
  %v1102 = vmul.u32 %v1097, %v1098
  %v1103 = vmul.u32 %v1097, %v1099
  %v1104 = vshll.u32 %v1101, 16
  %v1105 = vshrl.u32 %v1101, 16
  %v1106 = vshll.u32 %v1102, 16
  %v1107 = vshrl.u32 %v1102, 16
  %vm1108 = vc.u32 %v1100, %v1104
  %v1109 = vsel %vm1108, 1, 0
  %v1110 = vadd.s32 %v1100, %v1104
  %v1111 = vadd.s32 %v1103, %v1109
  %vm1112 = vc.u32 %v1110, %v1106
  %v1113 = vsel %vm1112, 1, 0
  %v1114 = vadd.s32 %v1110, %v1106
  %v1115 = vadd.s32 %v1111, %v1113
  %v1116 = vadd.s32 %v1115, %v1105
  %v1117 = vadd.s32 %v1116, %v1107
  %v1118 = vand.u32 %v1095, 65535
  %v1119 = vshrl.u32 %v1095, 16
  %v1120 = vand.u32 %v1090, 65535
  %v1121 = vshrl.u32 %v1090, 16
  %v1122 = vmul.u32 %v1118, %v1120
  %v1123 = vmul.u32 %v1118, %v1121
  %v1124 = vmul.u32 %v1119, %v1120
  %v1125 = vmul.u32 %v1119, %v1121
  %v1126 = vshll.u32 %v1123, 16
  %v1127 = vshrl.u32 %v1123, 16
  %v1128 = vshll.u32 %v1124, 16
  %v1129 = vshrl.u32 %v1124, 16
  %vm1130 = vc.u32 %v1122, %v1126
  %v1131 = vsel %vm1130, 1, 0
  %v1132 = vadd.s32 %v1122, %v1126
  %v1133 = vadd.s32 %v1125, %v1131
  %vm1134 = vc.u32 %v1132, %v1128
  %v1135 = vsel %vm1134, 1, 0
  %v1136 = vadd.s32 %v1132, %v1128
  %v1137 = vadd.s32 %v1133, %v1135
  %v1138 = vadd.s32 %v1137, %v1127
  %v1139 = vadd.s32 %v1138, %v1129
  %v1140 = vmul.u32 %v1095, %v1086
  %v1141 = vadd.s32 %v1117, %v1136
  %vm1142 = vc.u32 %v1117, %v1136
  %v1143 = vadd.s32 %v1139, 1
  %v1144 = vsel %vm1142, %v1143, %v1139
  %v1145 = vadd.s32 %v1140, %v1144
  %v1146 = vadd.s32 %v1145, 536870912
  %v1147 = vshrl.u32 %v1146, 30
  %v1148 = vshll.u32 %v1147, 30
  %v1149 = vsub.s32 %v1145, %v1148
  %vm1150 = vcmp.lt.s32.totalorder %v1149, 0
  %v1151 = vsub.s32 0, %v1149
  %v1152 = vsel %vm1150, %v1151, %v1149
  %v1153 = vclz %v1152
  %v1154 = vsub.s32 %v1153, 2
  %vm1155 = vcmp.gt.s32.totalorder 0, %v1154
  %v1156 = vsel %vm1155, 0, %v1154
  %v1157 = vsub.s32 32, %v1156
  %v1158 = vshll.u32 %v1149, %v1156
  %v1159 = vshrl.u32 %v1141, %v1157
  %v1160 = vor.u32 %v1158, %v1159
  %v1161 = vsub.s32 4294967266, %v1156
  %v1162 = vadd.s32 %v1161, 127
  %v1163 = vshll.u32 %v1162, 23
  %v1164 = vor.u32 4788187, %v1163
  %v1165 = vand.u32 2147483647, %v1164
  %v1167 = vcvt.s32.f32 %v1160
  %v1168 = vmul.f32 %v1167, %v1165
  %v1169 = vxor.u32 %v1168, 2147483648
  %v1170 = vsel %vm1049, %v1169, %v1168
  %v1171 = vsub.s32 4, %v1147
  %v1172 = vsel %vm1049, %v1171, %v1147
  %v1173 = vsel %vm1048, %v1039, %v1170
  %v1174 = vsel %vm1048, 0, %v1172
  %v1175 = vmul.f32 %v1173, %v1173
  %v1176 = vmul.f32 %v1175, -0.001358992
  %v1177 = vadd.f32 %v1176, 0.041655596
  %v1178 = vmul.f32 %v1175, %v1177
  %v1179 = vadd.f32 %v1178, -0.4999988
  %v1180 = vmul.f32 %v1175, %v1179
  %v1181 = vadd.f32 1.0, %v1180
  %v1182 = vmul.f32 %v1173, %v1173
  %v1183 = vmul.f32 %v1182, -0.00019511016
  %v1184 = vadd.f32 %v1183, 0.008332121
  %v1185 = vmul.f32 %v1182, %v1184
  %v1186 = vadd.f32 %v1185, -0.16666654
  %v1187 = vmul.f32 %v1182, %v1186
  %v1188 = vadd.f32 %v1187, 1.0
  %v1189 = vmul.f32 %v1188, %v1173
  %vm1190 = vweird.f32 %v1039
  %v1191 = vadd.s32 %v1174, 3
  %v1192 = vand.u32 %v1191, 3
  %vm1193 = vcmp.lt.s32.totalorder %v1192, 2
  %vm1194 = vcmp.eq.s32.totalorder %v1192, 0
  %v1195 = vxor.u32 %v1189, 2147483648
  %v1196 = vsel %vm1194, %v1181, %v1195
  %vm1197 = vcmp.eq.s32.totalorder %v1192, 2
  %v1198 = vxor.u32 %v1181, 2147483648
  %v1199 = vsel %vm1197, %v1198, %v1189
  %v1200 = vsel %vm1193, %v1196, %v1199
  %v1201 = vsel %vm1190, nan, %v1200
  %v1202 = vand.u32 2147483647, %v1039
  %vm1203 = vcmp.le.f32.partialorder %v1202, 0.7853982
  %vm1204 = vcmp.lt.s32.totalorder %v1039, 0
  %v1205 = vand.u32 %v1039, 2139095040
  %v1206 = vshrl.u32 %v1205, 23
  %v1207 = vsub.s32 %v1206, 127
  %v1208 = vand.u32 2147483647, %v1039
  %v1209 = vand.u32 %v1208, 8388607
  %v1210 = vor.u32 %v1209, 8388608
  %v1211 = vsub.s32 0, %v1210
  %v1212 = vadd.s32 %v1207, 1
  %vm1213 = vcmp.gt.s32.totalorder %v1212, 0
  %v1214 = vsel %vm1213, %v1212, 0
  %v1215 = vshrl.u32 %v1214, 5
  %v1216 = vand.u32 %v1214, 31
  %v1217 = vsub.s32 32, %v1216
  %v1218 = vshrl.u32 683565275, %v1217
  %v1219 = vshll.u32 683565275, %v1216
  %v1220 = vshrl.u32 2475754826, %v1217
  %v1221 = vor.u32 %v1219, %v1220
  %v1222 = vshll.u32 2475754826, %v1216
  %v1223 = vshrl.u32 2131351028, %v1217
  %v1224 = vor.u32 %v1222, %v1223
  %v1225 = vshll.u32 2131351028, %v1216
  %v1226 = vshrl.u32 2102212464, %v1217
  %v1227 = vor.u32 %v1225, %v1226
  %v1228 = vshll.u32 2102212464, %v1216
  %v1229 = vshrl.u32 920167782, %v1217
  %v1230 = vor.u32 %v1228, %v1229
  %v1231 = vshll.u32 920167782, %v1216
  %v1232 = vshrl.u32 1326507024, %v1217
  %v1233 = vor.u32 %v1231, %v1232
  %vm1234 = vcmp.lt.s32.totalorder %v1215, 1
  %vm1235 = vcmp.lt.s32.totalorder %v1215, 2
  %vm1236 = vcmp.lt.s32.totalorder %v1215, 3
  %vm1237 = vcmp.lt.s32.totalorder %v1215, 4
  %v1238 = vsel %vm1234, %v1218, %v1221
  %v1239 = vsel %vm1237, %v1227, 2102212464
  %v1240 = vsel %vm1236, %v1224, %v1239
  %v1241 = vsel %vm1235, %v1238, %v1240
  %v1242 = vsel %vm1234, %v1221, %v1224
  %v1243 = vsel %vm1237, %v1230, 920167782
  %v1244 = vsel %vm1236, %v1227, %v1243
  %v1245 = vsel %vm1235, %v1242, %v1244
  %v1246 = vsel %vm1234, %v1224, %v1227
  %v1247 = vsel %vm1237, %v1233, 1326507024
  %v1248 = vsel %vm1236, %v1230, %v1247
  %v1249 = vsel %vm1235, %v1246, %v1248
  %v1250 = vshll.u32 %v1210, 8
  %v1251 = vand.u32 %v1250, 65535
  %v1252 = vshrl.u32 %v1250, 16
  %v1253 = vand.u32 %v1249, 65535
  %v1254 = vshrl.u32 %v1249, 16
  %v1255 = vmul.u32 %v1251, %v1253
  %v1256 = vmul.u32 %v1251, %v1254
  %v1257 = vmul.u32 %v1252, %v1253
  %v1258 = vmul.u32 %v1252, %v1254
  %v1259 = vshll.u32 %v1256, 16
  %v1260 = vshrl.u32 %v1256, 16
  %v1261 = vshll.u32 %v1257, 16
  %v1262 = vshrl.u32 %v1257, 16
  %vm1263 = vc.u32 %v1255, %v1259
  %v1264 = vsel %vm1263, 1, 0
  %v1265 = vadd.s32 %v1255, %v1259
  %v1266 = vadd.s32 %v1258, %v1264
  %vm1267 = vc.u32 %v1265, %v1261
  %v1268 = vsel %vm1267, 1, 0
  %v1269 = vadd.s32 %v1265, %v1261
  %v1270 = vadd.s32 %v1266, %v1268
  %v1271 = vadd.s32 %v1270, %v1260
  %v1272 = vadd.s32 %v1271, %v1262
  %v1273 = vand.u32 %v1250, 65535
  %v1274 = vshrl.u32 %v1250, 16
  %v1275 = vand.u32 %v1245, 65535
  %v1276 = vshrl.u32 %v1245, 16
  %v1277 = vmul.u32 %v1273, %v1275
  %v1278 = vmul.u32 %v1273, %v1276
  %v1279 = vmul.u32 %v1274, %v1275
  %v1280 = vmul.u32 %v1274, %v1276
  %v1281 = vshll.u32 %v1278, 16
  %v1282 = vshrl.u32 %v1278, 16
  %v1283 = vshll.u32 %v1279, 16
  %v1284 = vshrl.u32 %v1279, 16
  %vm1285 = vc.u32 %v1277, %v1281
  %v1286 = vsel %vm1285, 1, 0
  %v1287 = vadd.s32 %v1277, %v1281
  %v1288 = vadd.s32 %v1280, %v1286
  %vm1289 = vc.u32 %v1287, %v1283
  %v1290 = vsel %vm1289, 1, 0
  %v1291 = vadd.s32 %v1287, %v1283
  %v1292 = vadd.s32 %v1288, %v1290
  %v1293 = vadd.s32 %v1292, %v1282
  %v1294 = vadd.s32 %v1293, %v1284
  %v1295 = vmul.u32 %v1250, %v1241
  %v1296 = vadd.s32 %v1272, %v1291
  %vm1297 = vc.u32 %v1272, %v1291
  %v1298 = vadd.s32 %v1294, 1
  %v1299 = vsel %vm1297, %v1298, %v1294
  %v1300 = vadd.s32 %v1295, %v1299
  %v1301 = vadd.s32 %v1300, 536870912
  %v1302 = vshrl.u32 %v1301, 30
  %v1303 = vshll.u32 %v1302, 30
  %v1304 = vsub.s32 %v1300, %v1303
  %vm1305 = vcmp.lt.s32.totalorder %v1304, 0
  %v1306 = vsub.s32 0, %v1304
  %v1307 = vsel %vm1305, %v1306, %v1304
  %v1308 = vclz %v1307
  %v1309 = vsub.s32 %v1308, 2
  %vm1310 = vcmp.gt.s32.totalorder 0, %v1309
  %v1311 = vsel %vm1310, 0, %v1309
  %v1312 = vsub.s32 32, %v1311
  %v1313 = vshll.u32 %v1304, %v1311
  %v1314 = vshrl.u32 %v1296, %v1312
  %v1315 = vor.u32 %v1313, %v1314
  %v1316 = vsub.s32 4294967266, %v1311
  %v1317 = vadd.s32 %v1316, 127
  %v1318 = vshll.u32 %v1317, 23
  %v1319 = vor.u32 4788187, %v1318
  %v1320 = vand.u32 2147483647, %v1319
  %v1322 = vcvt.s32.f32 %v1315
  %v1323 = vmul.f32 %v1322, %v1320
  %v1324 = vxor.u32 %v1323, 2147483648
  %v1325 = vsel %vm1204, %v1324, %v1323
  %v1326 = vsub.s32 4, %v1302
  %v1327 = vsel %vm1204, %v1326, %v1302
  %v1328 = vsel %vm1203, %v1039, %v1325
  %v1329 = vsel %vm1203, 0, %v1327
  %v1330 = vmul.f32 %v1328, %v1328
  %v1331 = vmul.f32 %v1330, -0.001358992
  %v1332 = vadd.f32 %v1331, 0.041655596
  %v1333 = vmul.f32 %v1330, %v1332
  %v1334 = vadd.f32 %v1333, -0.4999988
  %v1335 = vmul.f32 %v1330, %v1334
  %v1336 = vadd.f32 1.0, %v1335
  %v1337 = vmul.f32 %v1328, %v1328
  %v1338 = vmul.f32 %v1337, -0.00019511016
  %v1339 = vadd.f32 %v1338, 0.008332121
  %v1340 = vmul.f32 %v1337, %v1339
  %v1341 = vadd.f32 %v1340, -0.16666654
  %v1342 = vmul.f32 %v1337, %v1341
  %v1343 = vadd.f32 %v1342, 1.0
  %v1344 = vmul.f32 %v1343, %v1328
  %vm1345 = vweird.f32 %v1039
  %v1346 = vand.u32 %v1329, 3
  %vm1347 = vcmp.lt.s32.totalorder %v1346, 2
  %vm1348 = vcmp.eq.s32.totalorder %v1346, 0
  %v1349 = vxor.u32 %v1344, 2147483648
  %v1350 = vsel %vm1348, %v1336, %v1349
  %vm1351 = vcmp.eq.s32.totalorder %v1346, 2
  %v1352 = vxor.u32 %v1336, 2147483648
  %v1353 = vsel %vm1351, %v1352, %v1344
  %v1354 = vsel %vm1347, %v1350, %v1353
  %v1355 = vsel %vm1345, nan, %v1354
  %v1356 = vsel %vm1046, 1.0, %v1039
  %v1357 = vsel %vm1046, 1.0, %v1042
  %v1358 = vsel %vm1045, 1.0, %v1022
  %v1359 = vsel %vm1045, 1.0, %v1043
  %v1360 = vand.u32 2147483647, %v1356
  %v1361 = vrcp.pop %v1360
  %v1362 = vmul.f32 %v1360, %v1361
  %v1363 = vsub.f32 2.0, %v1362
  %v1364 = vmul.f32 %v1361, %v1363
  %vm1365 = vcmp.lt.f32.partialorder %v1356, 0.0
  %v1366 = vsub.f32 0.0, %v1364
  %v1367 = vsel %vm1365, %v1366, %v1364
  %v1368 = vand.u32 2147483647, %v1357
  %v1369 = vrcp.pop %v1368
  %v1370 = vmul.f32 %v1368, %v1369
  %v1371 = vsub.f32 2.0, %v1370
  %v1372 = vmul.f32 %v1369, %v1371
  %vm1373 = vcmp.lt.f32.partialorder %v1357, 0.0
  %v1374 = vsub.f32 0.0, %v1372
  %v1375 = vsel %vm1373, %v1374, %v1372
  %v1376 = vand.u32 2147483647, %v1358
  %v1377 = vrcp.pop %v1376
  %v1378 = vmul.f32 %v1376, %v1377
  %v1379 = vsub.f32 2.0, %v1378
  %v1380 = vmul.f32 %v1377, %v1379
  %vm1381 = vcmp.lt.f32.partialorder %v1358, 0.0
  %v1382 = vsub.f32 0.0, %v1380
  %v1383 = vsel %vm1381, %v1382, %v1380
  %v1384 = vand.u32 2147483647, %v1359
  %v1385 = vrcp.pop %v1384
  %v1386 = vmul.f32 %v1384, %v1385
  %v1387 = vsub.f32 2.0, %v1386
  %v1388 = vmul.f32 %v1385, %v1387
  %vm1389 = vcmp.lt.f32.partialorder %v1359, 0.0
  %v1390 = vsub.f32 0.0, %v1388
  %v1391 = vsel %vm1389, %v1390, %v1388
  %v1392 = vsub.f32 %v1041, 1.0
  %v1393 = vmul.f32 %v1392, %v1383
  %v1394 = vsel %vm1045, 1.0, %v1393
  %v1395 = vsub.f32 1.0, %v1355
  %v1396 = vmul.f32 %v1395, %v1375
  %v1397 = vsel %vm1046, 0.5, %v1396
  %v1398 = vsub.f32 %v1039, %v1201
  %v1399 = vmul.f32 %v1375, %v1367
  %v1400 = vmul.f32 %v1398, %v1399
  %v1401 = vsel %vm1046, 0.16666667, %v1400
  %v1402 = vsub.f32 %v1022, 1.0
  %v1403 = vmul.f32 %v1402, %v1041
  %v1404 = vadd.f32 %v1403, 1.0
  %v1405 = vmul.f32 %v1404, %v1391
  %v1406 = vmul.f32 %v1043, 0.5
  %v1407 = vmul.f32 %v1406, %v1041
  %v1408 = vadd.f32 %v1407, %v1041
  %v1409 = vsub.f32 %v1408, 1.0
  %v1410 = vmul.f32 %v1022, %v1041
  %v1411 = vsub.f32 %v1409, %v1410
  %v1412 = vmul.f32 %v1391, %v1383
  %v1413 = vmul.f32 %v1411, %v1412
  %v1414 = vmul.f32 %v1041, %v1201
  %v1415 = vmul.f32 %v1041, %v1355
  %v1416 = vadd.f32 %v1042, %v1043
  %v1417 = vsel %vm1046, 1.0, %v1416
  %v1418 = vand.u32 2147483647, %v1417
  %v1419 = vrcp.pop %v1418
  %v1420 = vmul.f32 %v1418, %v1419
  %v1421 = vsub.f32 2.0, %v1420
  %v1422 = vmul.f32 %v1419, %v1421
  %vm1423 = vcmp.lt.f32.partialorder %v1417, 0.0
  %v1424 = vsub.f32 0.0, %v1422
  %v1425 = vsel %vm1423, %v1424, %v1422
  %v1426 = vmul.f32 %v1414, %v1022
  %v1427 = vsub.f32 1.0, %v1415
  %v1428 = vmul.f32 %v1427, %v1039
  %v1429 = vadd.f32 %v1426, %v1428
  %v1430 = vmul.f32 %v1367, %v1425
  %v1431 = vmul.f32 %v1429, %v1430
  %v1432 = vsub.f32 %v1415, 1.0
  %v1433 = vmul.f32 %v1432, %v1022
  %v1434 = vmul.f32 %v1414, %v1039
  %v1435 = vadd.f32 %v1433, %v1434
  %v1436 = vmul.f32 %v1435, %v1425
  %v1437 = vsub.f32 %v1394, %v1436
  %v1438 = vmul.f32 %v1437, %v1375
  %v1439 = vsel %vm1046, %v1405, %v1431
  %v1440 = vsel %vm1045, %v1397, %v1439
  %v1441 = vsel %vm1046, %v1413, %v1438
  %v1442 = vsel %vm1045, %v1401, %v1441
  %v1443 = vmul.f32 %v1027, %v1442
  %v1444 = vsub.f32 %v1394, %v1443
  %v1445 = vmul.f32 %v1444, %v1444
  %v1446 = vmul.f32 %v1027, %v1440
  %v1447 = vmul.f32 %v1446, %v1440
  %v1448 = vadd.f32 %v1445, %v1447
  %v1449 = vand.u32 2147483647, %v1394
  %v1450 = vrcp.pop %v1449
  %v1451 = vmul.f32 %v1449, %v1450
  %v1452 = vsub.f32 2.0, %v1451
  %v1453 = vmul.f32 %v1450, %v1452
  %vm1454 = vcmp.lt.f32.partialorder %v1394, 0.0
  %v1455 = vsub.f32 0.0, %v1453
  %v1456 = vsel %vm1454, %v1455, %v1453
  %v1457 = vand.u32 2147483647, %v1448
  %v1458 = vrcp.pop %v1457
  %v1459 = vmul.f32 %v1457, %v1458
  %v1460 = vsub.f32 2.0, %v1459
  %v1461 = vmul.f32 %v1458, %v1460
  %vm1462 = vcmp.lt.f32.partialorder %v1448, 0.0
  %v1463 = vsub.f32 0.0, %v1461
  %v1464 = vsel %vm1462, %v1463, %v1461
  %v1465 = vsub.f32 0.0, %v1440
  %v1466 = vmul.f32 %v1465, %v1464
  %v1467 = vmul.f32 %v1440, %v1440
  %v1468 = vmul.f32 %v1442, %v1394
  %v1469 = vsub.f32 %v1467, %v1468
  %v1470 = vmul.f32 %v1443, %v1442
  %v1471 = vadd.f32 %v1469, %v1470
  %v1472 = vmul.f32 %v1456, %v1464
  %v1473 = vmul.f32 %v1471, %v1472
  %v1474 = vmul.f32 %v1019, %v913
  %v1475 = vmul.f32 %v1020, %v911
  %v1476 = vsub.f32 %v1474, %v1475
  %v1477 = vmul.f32 %v1020, %v909
  %v1478 = vmul.f32 %v1018, %v913
  %v1479 = vsub.f32 %v1477, %v1478
  %v1480 = vmul.f32 %v1018, %v911
  %v1481 = vmul.f32 %v1019, %v909
  %v1482 = vsub.f32 %v1480, %v1481
  %v1483 = vmul.f32 %v1019, %v1482
  %v1484 = vmul.f32 %v1020, %v1479
  %v1485 = vsub.f32 %v1483, %v1484
  %v1486 = vmul.f32 %v1020, %v1476
  %v1487 = vmul.f32 %v1018, %v1482
  %v1488 = vsub.f32 %v1486, %v1487
  %v1489 = vmul.f32 %v1018, %v1479
  %v1490 = vmul.f32 %v1019, %v1476
  %v1491 = vsub.f32 %v1489, %v1490
  %v1492 = vmul.f32 %v1456, %v909
  %v1493 = vmul.f32 %v1466, %v1476
  %v1494 = vadd.f32 %v1492, %v1493
  %v1495 = vmul.f32 %v1473, %v1485
  %v1496 = vadd.f32 %v1494, %v1495
  %v1497 = vmul.f32 %v1456, %v911
  %v1498 = vmul.f32 %v1466, %v1479
  %v1499 = vadd.f32 %v1497, %v1498
  %v1500 = vmul.f32 %v1473, %v1488
  %v1501 = vadd.f32 %v1499, %v1500
  %v1502 = vmul.f32 %v1456, %v913
  %v1503 = vmul.f32 %v1466, %v1482
  %v1504 = vadd.f32 %v1502, %v1503
  %v1505 = vmul.f32 %v1473, %v1491
  %v1506 = vadd.f32 %v1504, %v1505
  %v1507 = vld [vmem:[%s4] sm:$0xff]
  %v1508 = vmul.f32 %v824, %v1507
  %v1509 = vld [vmem:[%s5] sm:$0xff]
  %v1510 = vmul.f32 %v1496, %v1509
  %v1511 = vadd.f32 %v1508, %v1510
  %1512 = vst [vmem:[%s6] sm:$0xff] %v1511
  %s1513 = scalar_lea.vmem %s4, 8
  %v1514 = vld [vmem:[%s1513] sm:$0xff]
  %v1515 = vmul.f32 %v829, %v1514
  %s1516 = scalar_lea.vmem %s5, 8
  %v1517 = vld [vmem:[%s1516] sm:$0xff]
  %v1518 = vmul.f32 %v1501, %v1517
  %v1519 = vadd.f32 %v1515, %v1518
  %s1520 = scalar_lea.vmem %s6, 8
  %1521 = vst [vmem:[%s1520] sm:$0xff] %v1519
  %s1522 = scalar_lea.vmem %s4, 16
  %v1523 = vld [vmem:[%s1522] sm:$0xff]
  %v1524 = vmul.f32 %v834, %v1523
  %s1525 = scalar_lea.vmem %s5, 16
  %v1526 = vld [vmem:[%s1525] sm:$0xff]
  %v1527 = vmul.f32 %v1506, %v1526
  %v1528 = vadd.f32 %v1524, %v1527
  %s1529 = scalar_lea.vmem %s6, 16
  %1530 = vst [vmem:[%s1529] sm:$0xff] %v1528
  %s1531 = scalar_lea.vmem %s4, 24
  %v1532 = vld [vmem:[%s1531] sm:$0xff]
  %v1533 = vmul.f32 %v346, %v1532
  %s1534 = scalar_lea.vmem %s5, 24
  %v1535 = vld [vmem:[%s1534] sm:$0xff]
  %v1536 = vmul.f32 %v1018, %v1535
  %v1537 = vadd.f32 %v1533, %v1536
  %s1538 = scalar_lea.vmem %s6, 24
  %1539 = vst [vmem:[%s1538] sm:$0xff] %v1537
  %s1540 = scalar_lea.vmem %s4, 32
  %v1541 = vld [vmem:[%s1540] sm:$0xff]
  %v1542 = vmul.f32 %v347, %v1541
  %s1543 = scalar_lea.vmem %s5, 32
  %v1544 = vld [vmem:[%s1543] sm:$0xff]
  %v1545 = vmul.f32 %v1019, %v1544
  %v1546 = vadd.f32 %v1542, %v1545
  %s1547 = scalar_lea.vmem %s6, 32
  %1548 = vst [vmem:[%s1547] sm:$0xff] %v1546
  %s1549 = scalar_lea.vmem %s4, 40
  %v1550 = vld [vmem:[%s1549] sm:$0xff]
  %v1551 = vmul.f32 %v348, %v1550
  %s1552 = scalar_lea.vmem %s5, 40
  %v1553 = vld [vmem:[%s1552] sm:$0xff]
  %v1554 = vmul.f32 %v1020, %v1553
  %v1555 = vadd.f32 %v1551, %v1554
  %s1556 = scalar_lea.vmem %s6, 40
  %1557 = vst [vmem:[%s1556] sm:$0xff] %v1555
  %s1558 = scalar_lea.vmem %s4, 48
  %v1559 = vld [vmem:[%s1558] sm:$0xff]
  %v1560 = vmul.f32 %v350, %v1559
  %s1561 = scalar_lea.vmem %s5, 48
  %v1562 = vld [vmem:[%s1561] sm:$0xff]
  %v1563 = vmul.f32 %v1022, %v1562
  %v1564 = vadd.f32 %v1560, %v1563
  %s1565 = scalar_lea.vmem %s6, 48
  %1566 = vst [vmem:[%s1565] sm:$0xff] %v1564
  // Predicated region
  $region26: #{odom_residual_forward.1} parent=0 // pred_check
    _
  $region27: #{odom_residual_forward.1} parent=0 // pred_check_branch
    %1568 = sbr.rel (0) target = $region29
  $region28: #{odom_residual_forward.1} parent=0 // pred_region
    _
  $region29: #{odom_residual_forward.1} parent=0 // pred_fallthru
    _
  // Predicated region
  $region30: #{odom_residual_forward.1} parent=0 // pred_check
    _
  $region31: #{odom_residual_forward.1} parent=0 // pred_check_branch
    %1570 = sbr.rel (0) target = $region33
  $region32: #{odom_residual_forward.1} parent=0 // pred_region
    _
  $region33: #{odom_residual_forward.1} parent=0 // pred_fallthru
    _

</llo_original>
